<compile_context>
chip_gen: v5e
topology: v5e:2x2
jax: 0.10.0
libtpu: 0.0.40
codegen_flags: <defaults>
</compile_context>

<pallas_src>
import functools
import math

import jax
import jax.numpy as jnp
from jax import lax
from jax.experimental import pallas as pl
from jax.experimental.pallas import tpu as pltpu

IMAGE_DIMS = (3, 8, 8)                                  # (C, H, W)
N = IMAGE_DIMS[0] * IMAGE_DIMS[1] * IMAGE_DIMS[2]       # xdim = 192
D = 256                                                 # num classes
HH = 128                                                # stand-in UNet hidden width

# fused per-pixel row indices (sublanes of the (8, M) fused block)
ROW_XIN, ROW_PREV, ROW_TN, ROW_ONE, ROW_TGT = 0, 1, 2, 3, 4


def _mac_kernel(fused_ref, w1_ref, w2t_ref, b2_ref, out_ref, *, fast_path):
    """One batch-tile.  fused_ref: (8, M) f32 rows [xin|prev|tn|1|tgt|0|0|0],
    out_ref: (1, M) f32 masked per-pixel log-prob (ll * future_selection)."""
    fused = fused_ref[...]                                # (8, M) f32
    prev = fused[ROW_PREV:ROW_PREV + 1, :]                # (1, M)
    tgt_f = fused[ROW_TGT:ROW_TGT + 1, :]                 # (1, M), integer-valued

    # ---- stand-in UNet layer 1: hidden (HH, M), pixels on lanes ----
    if fast_path:
        # v6e/v7x: fold the rank-4 broadcast + bias into one K=8 MXU matmul.
        pre = jnp.dot(w1_ref[...].astype(jnp.bfloat16),
                      fused.astype(jnp.bfloat16),
                      preferred_element_type=jnp.float32)          # (HH, M) f32
    else:
        # v5e / older: keep the f32 VPU broadcast path (no bf16 VPU, slower MXU).
        w1 = w1_ref[...]                                           # (HH, 8) f32
        xin = fused[ROW_XIN:ROW_XIN + 1, :]
        tn = fused[ROW_TN:ROW_TN + 1, :]
        pre = (w1[:, 0:1] * xin + w1[:, 1:2] * prev
               + w1[:, 2:3] * tn + w1[:, 3:4])                     # (HH, M) f32
    h = jnp.maximum(pre, 0.0).astype(jnp.bfloat16)                 # bf16 for the MXU

    # ---- layer 2 logits^T: (D, M) = (D, HH) @ (HH, M), bf16 MXU, f32 acc ----
    logits = jnp.dot(w2t_ref[...], h, preferred_element_type=jnp.float32)
    logits = logits + b2_ref[...]                                  # (D,1) lane-bcast

    # ---- categorical log_prob at target class (softmax over sublanes) ----
    mx = jnp.max(logits, axis=0, keepdims=True)                    # (1, M)
    if fast_path:
        shifted = (logits - mx).astype(jnp.bfloat16)               # bf16 intermediates
    else:
        shifted = logits - mx                                      # f32 on v5e
    e = jnp.exp(shifted)                                           # EUP slot
    sum_e = jnp.sum(e, axis=0, keepdims=True, dtype=jnp.float32)   # (1, M) f32 acc

    tgt_i = tgt_f.astype(jnp.int32)                                # exact for <=255
    cls = lax.broadcasted_iota(jnp.int32, shifted.shape, 0)
    picked = jnp.where(cls == tgt_i, shifted, jnp.zeros_like(shifted))
    logit_t = jnp.sum(picked, axis=0, keepdims=True, dtype=jnp.float32)  # (1, M)

    # log p(tgt) = shifted[tgt] - log(sum exp(shifted));  mask to future pixels
    out_ref[...] = (logit_t - jnp.log(sum_e)) * (1.0 - prev)


def mac_pallas(xin, prev, tgt, tnorm, params, *, fast_gen, tile_b, vmem_limit):
    """Returns per-pixel log_prob * future_selection, shape (B, N)."""
    B = xin.shape[0]
    w1p, w2t, b2c = params
    B_pad = ((B + tile_b - 1) // tile_b) * tile_b
    num_tiles = B_pad // tile_b
    M = tile_b * N

    def pad_b(a):
        a = a.astype(jnp.float32)
        if B_pad != B:
            a = jnp.concatenate([a, jnp.zeros((B_pad - B, N), jnp.float32)], axis=0)
        return a

    # One fused operand: a single aligned (8, M) DMA per grid step.
    rows = jnp.stack([
        pad_b(xin),                                                  # x * previous
        pad_b(prev),                                                 # previous_selection
        pad_b(jnp.broadcast_to(tnorm[:, None], (B, N))),             # t / xdim
        pad_b(jnp.ones((B, N), jnp.float32)),                        # bias row
        pad_b(tgt.astype(jnp.float32)),                              # target class
        jnp.zeros((B_pad, N), jnp.float32),
        jnp.zeros((B_pad, N), jnp.float32),
        jnp.zeros((B_pad, N), jnp.float32),
    ], axis=0)                                                       # (8, B_pad, N)
    fused = rows.reshape(8, num_tiles, M).transpose(1, 0, 2)         # (num_tiles, 8, M)

    out = pl.pallas_call(
        functools.partial(_mac_kernel, fast_path=fast_gen),
        grid_spec=pltpu.PrefetchScalarGridSpec(
            num_scalar_prefetch=0,
            grid=(num_tiles,),
            in_specs=[
                pl.BlockSpec((None, 8, M), lambda i: (i, 0, 0)),   # fused rows
                pl.BlockSpec((HH, 8), lambda i: (0, 0)),           # [w1x|w1m|w1t|b1|0..]
                pl.BlockSpec((D, HH), lambda i: (0, 0)),           # w2^T (bf16)
                pl.BlockSpec((D, 1), lambda i: (0, 0)),            # b2 column
            ],
            out_specs=pl.BlockSpec((1, M), lambda i: (i, 0)),      # lane-dense ll row
        ),
        out_shape=jax.ShapeDtypeStruct((num_tiles, M), jnp.float32),
        compiler_params=pltpu.CompilerParams(
            dimension_semantics=("parallel",),     # shard batch tiles on v7x's 2 TCs
            vmem_limit_bytes=vmem_limit,
        ),
    )(fused, w1p, w2t, b2c)

    # Drop padded batch rows here; never reduce the raw kernel output directly.
    return out.reshape(B_pad, N)[:B]


def init_params(key):
    ks = jax.random.split(key, 4)
    w1x = jax.random.normal(ks[0], (HH,), jnp.float32) * 0.5
    w1m = jax.random.normal(ks[1], (HH,), jnp.float32) * 0.5
    w1t = jax.random.normal(ks[2], (HH,), jnp.float32) * 0.5
    b1 = jnp.zeros((HH,), jnp.float32)
    z = jnp.zeros((HH,), jnp.float32)
    w1p = jnp.stack([w1x, w1m, w1t, b1, z, z, z, z], axis=1)          # (HH, 8)
    w2 = jax.random.normal(ks[3], (HH, D), jnp.float32) / math.sqrt(HH)
    w2t = w2.T.astype(jnp.bfloat16)                                   # (D, HH) for MXU
    b2c = jnp.zeros((D, 1), jnp.float32)
    return (w1p, w2t, b2c)


def mac_forward(x_img, key, params, *, fast_gen, tile_b, vmem_limit):
    """Equivalent of MAC.forward with cfg.mask.strategy=='none',
    mixture=False, normalize_cardinality=False."""
    B = x_img.shape[0]
    xf = x_img.reshape(B, N).astype(jnp.float32)

    # sample_mask(strategy='none'): random permutation sigma, random t in [0, xdim)
    k1, k2 = jax.random.split(key)
    sigma = jnp.argsort(jax.random.uniform(k1, (B, N)), axis=-1)
    t = jax.random.randint(k2, (B,), 0, N, dtype=jnp.int32)
    prev = (sigma < t[:, None]).astype(jnp.float32)       # previous_selection
    xin = xf * prev                                        # zeroimg term == 0

    # TODO(synk): image_float_to_int undefined in source; assume round(255*x).
    tgt = jnp.clip(jnp.round(xf * 255.0), 0, 255).astype(jnp.int32)
    tnorm = t.astype(jnp.float32) / float(N)

    ll_pix = mac_pallas(xin, prev, tgt, tnorm, params,
                        fast_gen=fast_gen, tile_b=tile_b, vmem_limit=vmem_limit)
    ll_sum = ll_pix.sum(axis=-1)                           # sum(ll * future) per batch

    # strategy='none': sigma is a permutation, so sum(future) == N - t exactly
    # (t < N guarantees no divide-by-zero).
    fut_sum = (N - t).astype(jnp.float32)
    return jnp.mean(ll_sum / fut_sum)


if __name__ == "__main__":
    key = jax.random.PRNGKey(0)
    k_x, k_mask, k_param = jax.random.split(key, 3)

    B = 2
    # synthetic image with exact 8-bit values so float->int round-trips
    x_int = jax.random.randint(k_x, (B,) + IMAGE_DIMS, 0, 256, dtype=jnp.int32)
    x = x_int.astype(jnp.float32) / 255.0                  # (B, 3, 8, 8), NCHW

    params = init_params(k_param)

    # Generation-specific tuning (per review):
    #  - v6e/v7x: MXU prologue + bf16 softmax intermediates
    #  - v7x: cap vmem limit against the 64 MiB physical VMEM
    #  - v4/v5e/v6e (128 MiB VMEM): raise the scoped limit for TILE_B=32
    #  - unknown/older parts: fall back to the conservative small-tile config
    dk = jax.devices()[0].device_kind.lower()
    is_v7 = ("v7" in dk) or ("7x" in dk)
    fast_gen = is_v7 or ("v6" in dk)
    if is_v7:
        tile_b, vmem_limit = 32, 48 * 1024 * 1024
    elif any(s in dk for s in ("v4", "v5", "v6")):
        tile_b, vmem_limit = 32, 64 * 1024 * 1024
    else:
        tile_b, vmem_limit = 8, 32 * 1024 * 1024

    out = mac_forward(x, k_mask, params,
                      fast_gen=fast_gen, tile_b=tile_b, vmem_limit=vmem_limit)
    out = jax.block_until_ready(out)
    assert out.shape == () and bool(jnp.isfinite(out))
    print("KERNEL_OK")
</pallas_src>

<mosaic_0001>
module attributes {stable_mosaic.version = 11 : i64} {
  func.func @_mac_kernel(%arg0: i32, %arg1: memref<1x8x1536xf32, #tpu.memory_space<vmem>>, %arg2: memref<128x8xf32, #tpu.memory_space<vmem>>, %arg3: memref<256x128xbf16, #tpu.memory_space<vmem>>, %arg4: memref<256x1xf32, #tpu.memory_space<vmem>>, %arg5: memref<1x1536xf32, #tpu.memory_space<vmem>>) attributes {dimension_semantics = [#tpu.dimension_semantics<parallel>], iteration_bounds = array<i64: 1>, scalar_prefetch = 0 : i64, scratch_operands = 0 : i64, tpu.core_type = #tpu.core_type<tc>, window_params = [{transform_indices = @transform_0, window_bounds = array<i64: 1, 8, 1536>}, {pipeline_mode = #tpu.pipeline_mode<synchronous>, transform_indices = @transform_1, window_bounds = array<i64: 128, 8>}, {pipeline_mode = #tpu.pipeline_mode<synchronous>, transform_indices = @transform_2, window_bounds = array<i64: 256, 128>}, {pipeline_mode = #tpu.pipeline_mode<synchronous>, transform_indices = @transform_3, window_bounds = array<i64: 256, 1>}, {transform_indices = @transform_4, window_bounds = array<i64: 1, 1536>}]} {
    %c0 = arith.constant 0 : index
    %c0_0 = arith.constant 0 : index
    %c0_1 = arith.constant 0 : index
    %0 = vector.load %arg1[%c0, %c0_0, %c0_1] : memref<1x8x1536xf32, #tpu.memory_space<vmem>>, vector<1x8x1536xf32>
    %1 = vector.shape_cast %0 : vector<1x8x1536xf32> to vector<8x1536xf32>
    %2 = vector.extract_strided_slice %1 {offsets = [1, 0], sizes = [1, 1536], strides = [1, 1]} : vector<8x1536xf32> to vector<1x1536xf32>
    %3 = vector.extract_strided_slice %1 {offsets = [4, 0], sizes = [1, 1536], strides = [1, 1]} : vector<8x1536xf32> to vector<1x1536xf32>
    %c0_2 = arith.constant 0 : index
    %c0_3 = arith.constant 0 : index
    %4 = vector.load %arg2[%c0_2, %c0_3] : memref<128x8xf32, #tpu.memory_space<vmem>>, vector<128x8xf32>
    %5 = vector.extract_strided_slice %1 {offsets = [0, 0], sizes = [1, 1536], strides = [1, 1]} : vector<8x1536xf32> to vector<1x1536xf32>
    %6 = vector.extract_strided_slice %1 {offsets = [2, 0], sizes = [1, 1536], strides = [1, 1]} : vector<8x1536xf32> to vector<1x1536xf32>
    %7 = vector.extract_strided_slice %4 {offsets = [0, 0], sizes = [128, 1], strides = [1, 1]} : vector<128x8xf32> to vector<128x1xf32>
    %8 = vector.broadcast %7 : vector<128x1xf32> to vector<128x1536xf32>
    %9 = vector.broadcast %5 : vector<1x1536xf32> to vector<128x1536xf32>
    %10 = arith.mulf %8, %9 : vector<128x1536xf32>
    %11 = vector.extract_strided_slice %4 {offsets = [0, 1], sizes = [128, 1], strides = [1, 1]} : vector<128x8xf32> to vector<128x1xf32>
    %12 = vector.broadcast %11 : vector<128x1xf32> to vector<128x1536xf32>
    %13 = vector.broadcast %2 : vector<1x1536xf32> to vector<128x1536xf32>
    %14 = arith.mulf %12, %13 : vector<128x1536xf32>
    %15 = arith.addf %10, %14 : vector<128x1536xf32>
    %16 = vector.extract_strided_slice %4 {offsets = [0, 2], sizes = [128, 1], strides = [1, 1]} : vector<128x8xf32> to vector<128x1xf32>
    %17 = vector.broadcast %16 : vector<128x1xf32> to vector<128x1536xf32>
    %18 = vector.broadcast %6 : vector<1x1536xf32> to vector<128x1536xf32>
    %19 = arith.mulf %17, %18 : vector<128x1536xf32>
    %20 = arith.addf %15, %19 : vector<128x1536xf32>
    %21 = vector.extract_strided_slice %4 {offsets = [0, 3], sizes = [128, 1], strides = [1, 1]} : vector<128x8xf32> to vector<128x1xf32>
    %22 = vector.broadcast %21 : vector<128x1xf32> to vector<128x1536xf32>
    %23 = arith.addf %20, %22 : vector<128x1536xf32>
    %cst = arith.constant 0.000000e+00 : f32
    %24 = vector.broadcast %cst : f32 to vector<128x1536xf32>
    %25 = arith.maximumf %23, %24 : vector<128x1536xf32>
    %26 = arith.truncf %25 : vector<128x1536xf32> to vector<128x1536xbf16>
    %c0_4 = arith.constant 0 : index
    %c0_5 = arith.constant 0 : index
    %27 = vector.load %arg3[%c0_4, %c0_5] : memref<256x128xbf16, #tpu.memory_space<vmem>>, vector<256x128xbf16>
    %cst_6 = arith.constant dense<0.000000e+00> : vector<256x1536xf32>
    %28 = tpu.matmul %27, %26, %cst_6 {dimension_numbers = #tpu.dot_dimension_numbers<[1], [0], [0], [1], [0, 0, 1, 1], [], []>} : vector<256x128xbf16>, vector<128x1536xbf16>, vector<256x1536xf32> -> vector<256x1536xf32>
    %c0_7 = arith.constant 0 : index
    %c0_8 = arith.constant 0 : index
    %29 = vector.load %arg4[%c0_7, %c0_8] : memref<256x1xf32, #tpu.memory_space<vmem>>, vector<256x1xf32>
    %30 = vector.broadcast %29 : vector<256x1xf32> to vector<256x1536xf32>
    %31 = arith.addf %28, %30 : vector<256x1536xf32>
    %cst_9 = arith.constant dense<0xFF800000> : vector<1536xf32>
    %32 = vector.multi_reduction <maximumf>, %31, %cst_9 [0] : vector<256x1536xf32> to vector<1536xf32>
    %33 = vector.shape_cast %32 : vector<1536xf32> to vector<1x1536xf32>
    %34 = vector.broadcast %33 : vector<1x1536xf32> to vector<256x1536xf32>
    %35 = arith.subf %31, %34 : vector<256x1536xf32>
    %36 = math.exp %35 : vector<256x1536xf32>
    %cst_10 = arith.constant dense<0.000000e+00> : vector<1536xf32>
    %37 = vector.multi_reduction <add>, %36, %cst_10 [0] : vector<256x1536xf32> to vector<1536xf32>
    %38 = vector.shape_cast %37 : vector<1536xf32> to vector<1x1536xf32>
    %39 = arith.fptosi %3 : vector<1x1536xf32> to vector<1x1536xi32>
    %40 = tpu.iota {dimensions = array<i32: 0>} : vector<256x1536xi32>
    %41 = vector.broadcast %39 : vector<1x1536xi32> to vector<256x1536xi32>
    %42 = arith.cmpi eq, %40, %41 : vector<256x1536xi32>
    %cst_11 = arith.constant 0.000000e+00 : f32
    %43 = vector.broadcast %cst_11 : f32 to vector<256x1536xf32>
    %44 = arith.select %42, %35, %43 : vector<256x1536xi1>, vector<256x1536xf32>
    %cst_12 = arith.constant dense<0.000000e+00> : vector<1536xf32>
    %45 = vector.multi_reduction <add>, %44, %cst_12 [0] : vector<256x1536xf32> to vector<1536xf32>
    %46 = vector.shape_cast %45 : vector<1536xf32> to vector<1x1536xf32>
    %47 = math.log %38 : vector<1x1536xf32>
    %48 = arith.subf %46, %47 : vector<1x1536xf32>
    %cst_13 = arith.constant 1.000000e+00 : f32
    %49 = vector.broadcast %cst_13 : f32 to vector<1x1536xf32>
    %50 = arith.subf %49, %2 : vector<1x1536xf32>
    %51 = arith.mulf %48, %50 : vector<1x1536xf32>
    %c0_14 = arith.constant 0 : index
    %c0_15 = arith.constant 0 : index
    %52 = vector.load %arg5[%c0_14, %c0_15] : memref<1x1536xf32, #tpu.memory_space<vmem>>, vector<1x1536xf32>
    tpu.vector_store %arg5[%c0_14, %c0_15], %51 {strides = array<i32>} : memref<1x1536xf32, #tpu.memory_space<vmem>>, vector<1x1536xf32>,
    return
  }
  func.func @transform_0(%arg0: i32) -> (i32, i32, i32) {
    %c0_i32 = arith.constant 0 : i32
    %c0_i32_0 = arith.constant 0 : i32
    %c0_i32_1 = arith.constant 0 : i32
    return %arg0, %c0_i32, %c0_i32_0 : i32, i32, i32
  }
  func.func @transform_1(%arg0: i32) -> (i32, i32) {
    %c0_i32 = arith.constant 0 : i32
    %c0_i32_0 = arith.constant 0 : i32
    %c0_i32_1 = arith.constant 0 : i32
    return %c0_i32, %c0_i32_0 : i32, i32
  }
  func.func @transform_2(%arg0: i32) -> (i32, i32) {
    %c0_i32 = arith.constant 0 : i32
    %c0_i32_0 = arith.constant 0 : i32
    %c0_i32_1 = arith.constant 0 : i32
    return %c0_i32, %c0_i32_0 : i32, i32
  }
  func.func @transform_3(%arg0: i32) -> (i32, i32) {
    %c0_i32 = arith.constant 0 : i32
    %c0_i32_0 = arith.constant 0 : i32
    %c0_i32_1 = arith.constant 0 : i32
    return %c0_i32, %c0_i32_0 : i32, i32
  }
  func.func @transform_4(%arg0: i32) -> (i32, i32) {
    %c0_i32 = arith.constant 0 : i32
    %c0_i32_0 = arith.constant 0 : i32
    return %arg0, %c0_i32 : i32, i32
  }
}

</mosaic_0001>

<llo_original>
// kernel: tpu_custom_call.1
$region0: #{tpu_custom_call.1}
  #allocation0 [shape = 'u32[]', space=smem, size = 0x4, offset = 0x4, fixed_abs, tag = 'smem constant byte address 0x4 - core index']
  #allocation1 [shape = 'u32[72,128]{1,0:T(1,128)}', space=vmem, size = 0x9000, scoped, tag = 'internal scratch']
  %s0 = inlined_call_operand.vmem [shape: f32[1,8,1536], index: 0, kind: input, shape index: {}]
  %s1 = inlined_call_operand.vmem [shape: f32[128,8], index: 1, kind: input, shape index: {}]
  %s2 = inlined_call_operand.vmem [shape: bf16[256,128], index: 2, kind: input, shape index: {}]
  %s3 = inlined_call_operand.vmem [shape: f32[256,1], index: 3, kind: input, shape index: {}]
  %s4 = inlined_call_operand.hbm [shape: f32[1,1536], index: 4, kind: output, shape index: {}]
  %s5 = sld [smem:[#allocation0]]
  $region26: #{tpu_custom_call.1} parent=0
    _
  %s7 = ssub.s32 1, %s5
  %s8 = scalar_select 0, %s7, %s5
  $region1: #{tpu_custom_call.1} parent=0
    #allocation2 [shape = 'u8[6144]{0}', space=vmem, size = 0x1800, scoped, tag = 'output window, operand 0, single buffered']
    #allocation3 [shape = 's32[1]{0}', space=sflag, size = 0x4, scoped, tag = 'scoped memory for tpu_custom_call.1']
    %9 = vsyncpa [#allocation3], 0
    // Predicated region
    $region2: #{tpu_custom_call.1} parent=1 // pred_check
      _
    $region3: #{tpu_custom_call.1} parent=1 // pred_check_branch
      %11 = sbr.rel (0) target = $region5
    $region4: #{tpu_custom_call.1} parent=1 // pred_region
      _
    $region5: #{tpu_custom_call.1} parent=1 // pred_fallthru
      _
    // Predicated region
    $region6: #{tpu_custom_call.1} parent=1 // pred_check
      _
    $region7: #{tpu_custom_call.1} parent=1 // pred_check_branch
      %13 = sbr.rel (0) target = $region9
    $region8: #{tpu_custom_call.1} parent=1 // pred_region
      _
    $region9: #{tpu_custom_call.1} parent=1 // pred_fallthru
      _
    // Predicated region
    $region10: #{tpu_custom_call.1} parent=1 // pred_check
      _
    $region11: #{tpu_custom_call.1} parent=1 // pred_check_branch
      %15 = sbr.rel (0) target = $region13
    $region12: #{tpu_custom_call.1} parent=1 // pred_region
      _
    $region13: #{tpu_custom_call.1} parent=1 // pred_fallthru
      _
    // Predicated region
    $region14: #{tpu_custom_call.1} parent=1 // pred_check
      _
    $region15: #{tpu_custom_call.1} parent=1 // pred_check_branch
      %17 = sbr.rel (0) target = $region17
    $region16: #{tpu_custom_call.1} parent=1 // pred_region
      _
    $region17: #{tpu_custom_call.1} parent=1 // pred_fallthru
      _
    %v18 = vld [vmem:[%s0] sm:$0xff]
    %v19 = vld [vmem:[%s0 + $0x8] sm:$0xff]
    %v20 = vld [vmem:[%s0 + $0x10] sm:$0xff]
    %v21 = vld [vmem:[%s0 + $0x18] sm:$0xff]
    %v22 = vld [vmem:[%s0 + $0x20] sm:$0xff]
    %v23 = vld [vmem:[%s0 + $0x28] sm:$0xff]
    %v24 = vld [vmem:[%s0 + $0x30] sm:$0xff]
    %v25 = vld [vmem:[%s0 + $0x38] sm:$0xff]
    %v26 = vld [vmem:[%s0 + $0x40] sm:$0xff]
    %v27 = vld [vmem:[%s0 + $0x48] sm:$0xff]
    %v28 = vld [vmem:[%s0 + $0x50] sm:$0xff]
    %v29 = vld [vmem:[%s0 + $0x58] sm:$0xff]
    %v30 = vld [vmem:[%s1] sm:$0xff]
    %v31 = vld [vmem:[%s1 + $0x8] sm:$0xff]
    %v32 = vld [vmem:[%s1 + $0x10] sm:$0xff]
    %v33 = vld [vmem:[%s1 + $0x18] sm:$0xff]
    %v34 = vld [vmem:[%s1 + $0x20] sm:$0xff]
    %v35 = vld [vmem:[%s1 + $0x28] sm:$0xff]
    %v36 = vld [vmem:[%s1 + $0x30] sm:$0xff]
    %v37 = vld [vmem:[%s1 + $0x38] sm:$0xff]
    %v38 = vld [vmem:[%s1 + $0x40] sm:$0xff]
    %v39 = vld [vmem:[%s1 + $0x48] sm:$0xff]
    %v40 = vld [vmem:[%s1 + $0x50] sm:$0xff]
    %v41 = vld [vmem:[%s1 + $0x58] sm:$0xff]
    %v42 = vld [vmem:[%s1 + $0x60] sm:$0xff]
    %v43 = vld [vmem:[%s1 + $0x68] sm:$0xff]
    %v44 = vld [vmem:[%s1 + $0x70] sm:$0xff]
    %v45 = vld [vmem:[%s1 + $0x78] sm:$0xff]
    %47 = vset.pattern.permute.xlu0 0
    %48 = vperm.xlu0 %47, %v30
    %v49 = vpop.permute.xlu0 %48
    %52 = vset.pattern.permute.xlu0 0
    %53 = vperm.xlu0 %52, %v31
    %v54 = vpop.permute.xlu0 %53
    %57 = vset.pattern.permute.xlu0 0
    %58 = vperm.xlu0 %57, %v32
    %v59 = vpop.permute.xlu0 %58
    %62 = vset.pattern.permute.xlu0 0
    %63 = vperm.xlu0 %62, %v33
    %v64 = vpop.permute.xlu0 %63
    %67 = vset.pattern.permute.xlu0 0
    %68 = vperm.xlu0 %67, %v34
    %v69 = vpop.permute.xlu0 %68
    %72 = vset.pattern.permute.xlu0 0
    %73 = vperm.xlu0 %72, %v35
    %v74 = vpop.permute.xlu0 %73
    %77 = vset.pattern.permute.xlu0 0
    %78 = vperm.xlu0 %77, %v36
    %v79 = vpop.permute.xlu0 %78
    %82 = vset.pattern.permute.xlu0 0
    %83 = vperm.xlu0 %82, %v37
    %v84 = vpop.permute.xlu0 %83
    %87 = vset.pattern.permute.xlu0 0
    %88 = vperm.xlu0 %87, %v38
    %v89 = vpop.permute.xlu0 %88
    %92 = vset.pattern.permute.xlu0 0
    %93 = vperm.xlu0 %92, %v39
    %v94 = vpop.permute.xlu0 %93
    %97 = vset.pattern.permute.xlu0 0
    %98 = vperm.xlu0 %97, %v40
    %v99 = vpop.permute.xlu0 %98
    %102 = vset.pattern.permute.xlu0 0
    %103 = vperm.xlu0 %102, %v41
    %v104 = vpop.permute.xlu0 %103
    %107 = vset.pattern.permute.xlu0 0
    %108 = vperm.xlu0 %107, %v42
    %v109 = vpop.permute.xlu0 %108
    %112 = vset.pattern.permute.xlu0 0
    %113 = vperm.xlu0 %112, %v43
    %v114 = vpop.permute.xlu0 %113
    %117 = vset.pattern.permute.xlu0 0
    %118 = vperm.xlu0 %117, %v44
    %v119 = vpop.permute.xlu0 %118
    %122 = vset.pattern.permute.xlu0 0
    %123 = vperm.xlu0 %122, %v45
    %v124 = vpop.permute.xlu0 %123
    %v126 = vperm.slane %v18, 0
    %v127 = vperm.slane %v19, 0
    %v128 = vperm.slane %v20, 0
    %v129 = vperm.slane %v21, 0
    %v130 = vperm.slane %v22, 0
    %v131 = vperm.slane %v23, 0
    %v132 = vperm.slane %v24, 0
    %v133 = vperm.slane %v25, 0
    %v134 = vperm.slane %v26, 0
    %v135 = vperm.slane %v27, 0
    %v136 = vperm.slane %v28, 0
    %v137 = vperm.slane %v29, 0
    %v138 = vmul.f32 %v49, %v126
    %v139 = vmul.f32 %v49, %v127
    %v140 = vmul.f32 %v49, %v128
    %v141 = vmul.f32 %v49, %v129
    %v142 = vmul.f32 %v49, %v130
    %v143 = vmul.f32 %v49, %v131
    %v144 = vmul.f32 %v49, %v132
    %v145 = vmul.f32 %v49, %v133
    %v146 = vmul.f32 %v49, %v134
    %v147 = vmul.f32 %v49, %v135
    %v148 = vmul.f32 %v49, %v136
    %v149 = vmul.f32 %v49, %v137
    %v150 = vmul.f32 %v54, %v126
    %v151 = vmul.f32 %v54, %v127
    %v152 = vmul.f32 %v54, %v128
    %v153 = vmul.f32 %v54, %v129
    %v154 = vmul.f32 %v54, %v130
    %v155 = vmul.f32 %v54, %v131
    %v156 = vmul.f32 %v54, %v132
    %v157 = vmul.f32 %v54, %v133
    %v158 = vmul.f32 %v54, %v134
    %v159 = vmul.f32 %v54, %v135
    %v160 = vmul.f32 %v54, %v136
    %v161 = vmul.f32 %v54, %v137
    %v162 = vmul.f32 %v59, %v126
    %v163 = vmul.f32 %v59, %v127
    %v164 = vmul.f32 %v59, %v128
    %v165 = vmul.f32 %v59, %v129
    %v166 = vmul.f32 %v59, %v130
    %v167 = vmul.f32 %v59, %v131
    %v168 = vmul.f32 %v59, %v132
    %v169 = vmul.f32 %v59, %v133
    %v170 = vmul.f32 %v59, %v134
    %v171 = vmul.f32 %v59, %v135
    %v172 = vmul.f32 %v59, %v136
    %v173 = vmul.f32 %v59, %v137
    %v174 = vmul.f32 %v64, %v126
    %v175 = vmul.f32 %v64, %v127
    %v176 = vmul.f32 %v64, %v128
    %v177 = vmul.f32 %v64, %v129
    %v178 = vmul.f32 %v64, %v130
    %v179 = vmul.f32 %v64, %v131
    %v180 = vmul.f32 %v64, %v132
    %v181 = vmul.f32 %v64, %v133
    %v182 = vmul.f32 %v64, %v134
    %v183 = vmul.f32 %v64, %v135
    %v184 = vmul.f32 %v64, %v136
    %v185 = vmul.f32 %v64, %v137
    %v186 = vmul.f32 %v69, %v126
    %v187 = vmul.f32 %v69, %v127
    %v188 = vmul.f32 %v69, %v128
    %v189 = vmul.f32 %v69, %v129
    %v190 = vmul.f32 %v69, %v130
    %v191 = vmul.f32 %v69, %v131
    %v192 = vmul.f32 %v69, %v132
    %v193 = vmul.f32 %v69, %v133
    %v194 = vmul.f32 %v69, %v134
    %v195 = vmul.f32 %v69, %v135
    %v196 = vmul.f32 %v69, %v136
    %v197 = vmul.f32 %v69, %v137
    %v198 = vmul.f32 %v74, %v126
    %v199 = vmul.f32 %v74, %v127
    %v200 = vmul.f32 %v74, %v128
    %v201 = vmul.f32 %v74, %v129
    %v202 = vmul.f32 %v74, %v130
    %v203 = vmul.f32 %v74, %v131
    %v204 = vmul.f32 %v74, %v132
    %v205 = vmul.f32 %v74, %v133
    %v206 = vmul.f32 %v74, %v134
    %v207 = vmul.f32 %v74, %v135
    %v208 = vmul.f32 %v74, %v136
    %v209 = vmul.f32 %v74, %v137
    %v210 = vmul.f32 %v79, %v126
    %v211 = vmul.f32 %v79, %v127
    %v212 = vmul.f32 %v79, %v128
    %v213 = vmul.f32 %v79, %v129
    %v214 = vmul.f32 %v79, %v130
    %v215 = vmul.f32 %v79, %v131
    %v216 = vmul.f32 %v79, %v132
    %v217 = vmul.f32 %v79, %v133
    %v218 = vmul.f32 %v79, %v134
    %v219 = vmul.f32 %v79, %v135
    %v220 = vmul.f32 %v79, %v136
    %v221 = vmul.f32 %v79, %v137
    %v222 = vmul.f32 %v84, %v126
    %v223 = vmul.f32 %v84, %v127
    %v224 = vmul.f32 %v84, %v128
    %v225 = vmul.f32 %v84, %v129
    %v226 = vmul.f32 %v84, %v130
    %v227 = vmul.f32 %v84, %v131
    %v228 = vmul.f32 %v84, %v132
    %v229 = vmul.f32 %v84, %v133
    %v230 = vmul.f32 %v84, %v134
    %v231 = vmul.f32 %v84, %v135
    %v232 = vmul.f32 %v84, %v136
    %v233 = vmul.f32 %v84, %v137
    %v234 = vmul.f32 %v89, %v126
    %v235 = vmul.f32 %v89, %v127
    %v236 = vmul.f32 %v89, %v128
    %v237 = vmul.f32 %v89, %v129
    %v238 = vmul.f32 %v89, %v130
    %v239 = vmul.f32 %v89, %v131
    %v240 = vmul.f32 %v89, %v132
    %v241 = vmul.f32 %v89, %v133
    %v242 = vmul.f32 %v89, %v134
    %v243 = vmul.f32 %v89, %v135
    %v244 = vmul.f32 %v89, %v136
    %v245 = vmul.f32 %v89, %v137
    %v246 = vmul.f32 %v94, %v126
    %v247 = vmul.f32 %v94, %v127
    %v248 = vmul.f32 %v94, %v128
    %v249 = vmul.f32 %v94, %v129
    %v250 = vmul.f32 %v94, %v130
    %v251 = vmul.f32 %v94, %v131
    %v252 = vmul.f32 %v94, %v132
    %v253 = vmul.f32 %v94, %v133
    %v254 = vmul.f32 %v94, %v134
    %v255 = vmul.f32 %v94, %v135
    %v256 = vmul.f32 %v94, %v136
    %v257 = vmul.f32 %v94, %v137
    %v258 = vmul.f32 %v99, %v126
    %v259 = vmul.f32 %v99, %v127
    %v260 = vmul.f32 %v99, %v128
    %v261 = vmul.f32 %v99, %v129
    %v262 = vmul.f32 %v99, %v130
    %v263 = vmul.f32 %v99, %v131
    %v264 = vmul.f32 %v99, %v132
    %v265 = vmul.f32 %v99, %v133
    %v266 = vmul.f32 %v99, %v134
    %v267 = vmul.f32 %v99, %v135
    %v268 = vmul.f32 %v99, %v136
    %v269 = vmul.f32 %v99, %v137
    %v270 = vmul.f32 %v104, %v126
    %v271 = vmul.f32 %v104, %v127
    %v272 = vmul.f32 %v104, %v128
    %v273 = vmul.f32 %v104, %v129
    %v274 = vmul.f32 %v104, %v130
    %v275 = vmul.f32 %v104, %v131
    %v276 = vmul.f32 %v104, %v132
    %v277 = vmul.f32 %v104, %v133
    %v278 = vmul.f32 %v104, %v134
    %v279 = vmul.f32 %v104, %v135
    %v280 = vmul.f32 %v104, %v136
    %v281 = vmul.f32 %v104, %v137
    %v282 = vmul.f32 %v109, %v126
    %v283 = vmul.f32 %v109, %v127
    %v284 = vmul.f32 %v109, %v128
    %v285 = vmul.f32 %v109, %v129
    %v286 = vmul.f32 %v109, %v130
    %v287 = vmul.f32 %v109, %v131
    %v288 = vmul.f32 %v109, %v132
    %v289 = vmul.f32 %v109, %v133
    %v290 = vmul.f32 %v109, %v134
    %v291 = vmul.f32 %v109, %v135
    %v292 = vmul.f32 %v109, %v136
    %v293 = vmul.f32 %v109, %v137
    %v294 = vmul.f32 %v114, %v126
    %v295 = vmul.f32 %v114, %v127
    %v296 = vmul.f32 %v114, %v128
    %v297 = vmul.f32 %v114, %v129
    %v298 = vmul.f32 %v114, %v130
    %v299 = vmul.f32 %v114, %v131
    %v300 = vmul.f32 %v114, %v132
    %v301 = vmul.f32 %v114, %v133
    %v302 = vmul.f32 %v114, %v134
    %v303 = vmul.f32 %v114, %v135
    %v304 = vmul.f32 %v114, %v136
    %v305 = vmul.f32 %v114, %v137
    %v306 = vmul.f32 %v119, %v126
    %v307 = vmul.f32 %v119, %v127
    %v308 = vmul.f32 %v119, %v128
    %v309 = vmul.f32 %v119, %v129
    %v310 = vmul.f32 %v119, %v130
    %v311 = vmul.f32 %v119, %v131
    %v312 = vmul.f32 %v119, %v132
    %v313 = vmul.f32 %v119, %v133
    %v314 = vmul.f32 %v119, %v134
    %v315 = vmul.f32 %v119, %v135
    %v316 = vmul.f32 %v119, %v136
    %v317 = vmul.f32 %v119, %v137
    %v318 = vmul.f32 %v124, %v126
    %v319 = vmul.f32 %v124, %v127
    %v320 = vmul.f32 %v124, %v128
    %v321 = vmul.f32 %v124, %v129
    %v322 = vmul.f32 %v124, %v130
    %v323 = vmul.f32 %v124, %v131
    %v324 = vmul.f32 %v124, %v132
    %v325 = vmul.f32 %v124, %v133
    %v326 = vmul.f32 %v124, %v134
    %v327 = vmul.f32 %v124, %v135
    %v328 = vmul.f32 %v124, %v136
    %v329 = vmul.f32 %v124, %v137
    %330 = vset.pattern.permute.xlu0 1
    %331 = vperm.xlu0 %330, %v30
    %v332 = vpop.permute.xlu0 %331
    %334 = vset.pattern.permute.xlu0 1
    %335 = vperm.xlu0 %334, %v31
    %v336 = vpop.permute.xlu0 %335
    %338 = vset.pattern.permute.xlu0 1
    %339 = vperm.xlu0 %338, %v32
    %v340 = vpop.permute.xlu0 %339
    %342 = vset.pattern.permute.xlu0 1
    %343 = vperm.xlu0 %342, %v33
    %v344 = vpop.permute.xlu0 %343
    %346 = vset.pattern.permute.xlu0 1
    %347 = vperm.xlu0 %346, %v34
    %v348 = vpop.permute.xlu0 %347
    %350 = vset.pattern.permute.xlu0 1
    %351 = vperm.xlu0 %350, %v35
    %v352 = vpop.permute.xlu0 %351
    %354 = vset.pattern.permute.xlu0 1
    %355 = vperm.xlu0 %354, %v36
    %v356 = vpop.permute.xlu0 %355
    %358 = vset.pattern.permute.xlu0 1
    %359 = vperm.xlu0 %358, %v37
    %v360 = vpop.permute.xlu0 %359
    %362 = vset.pattern.permute.xlu0 1
    %363 = vperm.xlu0 %362, %v38
    %v364 = vpop.permute.xlu0 %363
    %366 = vset.pattern.permute.xlu0 1
    %367 = vperm.xlu0 %366, %v39
    %v368 = vpop.permute.xlu0 %367
    %370 = vset.pattern.permute.xlu0 1
    %371 = vperm.xlu0 %370, %v40
    %v372 = vpop.permute.xlu0 %371
    %374 = vset.pattern.permute.xlu0 1
    %375 = vperm.xlu0 %374, %v41
    %v376 = vpop.permute.xlu0 %375
    %378 = vset.pattern.permute.xlu0 1
    %379 = vperm.xlu0 %378, %v42
    %v380 = vpop.permute.xlu0 %379
    %382 = vset.pattern.permute.xlu0 1
    %383 = vperm.xlu0 %382, %v43
    %v384 = vpop.permute.xlu0 %383
    %386 = vset.pattern.permute.xlu0 1
    %387 = vperm.xlu0 %386, %v44
    %v388 = vpop.permute.xlu0 %387
    %390 = vset.pattern.permute.xlu0 1
    %391 = vperm.xlu0 %390, %v45
    %v392 = vpop.permute.xlu0 %391
    %v394 = vperm.slane %v18, 1
    %v395 = vperm.slane %v19, 1
    %v396 = vperm.slane %v20, 1
    %v397 = vperm.slane %v21, 1
    %v398 = vperm.slane %v22, 1
    %v399 = vperm.slane %v23, 1
    %v400 = vperm.slane %v24, 1
    %v401 = vperm.slane %v25, 1
    %v402 = vperm.slane %v26, 1
    %v403 = vperm.slane %v27, 1
    %v404 = vperm.slane %v28, 1
    %v405 = vperm.slane %v29, 1
    %v406 = vmul.f32 %v332, %v394
    %v407 = vmul.f32 %v332, %v395
    %v408 = vmul.f32 %v332, %v396
    %v409 = vmul.f32 %v332, %v397
    %v410 = vmul.f32 %v332, %v398
    %v411 = vmul.f32 %v332, %v399
    %v412 = vmul.f32 %v332, %v400
    %v413 = vmul.f32 %v332, %v401
    %v414 = vmul.f32 %v332, %v402
    %v415 = vmul.f32 %v332, %v403
    %v416 = vmul.f32 %v332, %v404
    %v417 = vmul.f32 %v332, %v405
    %v418 = vmul.f32 %v336, %v394
    %v419 = vmul.f32 %v336, %v395
    %v420 = vmul.f32 %v336, %v396
    %v421 = vmul.f32 %v336, %v397
    %v422 = vmul.f32 %v336, %v398
    %v423 = vmul.f32 %v336, %v399
    %v424 = vmul.f32 %v336, %v400
    %v425 = vmul.f32 %v336, %v401
    %v426 = vmul.f32 %v336, %v402
    %v427 = vmul.f32 %v336, %v403
    %v428 = vmul.f32 %v336, %v404
    %v429 = vmul.f32 %v336, %v405
    %v430 = vmul.f32 %v340, %v394
    %v431 = vmul.f32 %v340, %v395
    %v432 = vmul.f32 %v340, %v396
    %v433 = vmul.f32 %v340, %v397
    %v434 = vmul.f32 %v340, %v398
    %v435 = vmul.f32 %v340, %v399
    %v436 = vmul.f32 %v340, %v400
    %v437 = vmul.f32 %v340, %v401
    %v438 = vmul.f32 %v340, %v402
    %v439 = vmul.f32 %v340, %v403
    %v440 = vmul.f32 %v340, %v404
    %v441 = vmul.f32 %v340, %v405
    %v442 = vmul.f32 %v344, %v394
    %v443 = vmul.f32 %v344, %v395
    %v444 = vmul.f32 %v344, %v396
    %v445 = vmul.f32 %v344, %v397
    %v446 = vmul.f32 %v344, %v398
    %v447 = vmul.f32 %v344, %v399
    %v448 = vmul.f32 %v344, %v400
    %v449 = vmul.f32 %v344, %v401
    %v450 = vmul.f32 %v344, %v402
    %v451 = vmul.f32 %v344, %v403
    %v452 = vmul.f32 %v344, %v404
    %v453 = vmul.f32 %v344, %v405
    %v454 = vmul.f32 %v348, %v394
    %v455 = vmul.f32 %v348, %v395
    %v456 = vmul.f32 %v348, %v396
    %v457 = vmul.f32 %v348, %v397
    %v458 = vmul.f32 %v348, %v398
    %v459 = vmul.f32 %v348, %v399
    %v460 = vmul.f32 %v348, %v400
    %v461 = vmul.f32 %v348, %v401
    %v462 = vmul.f32 %v348, %v402
    %v463 = vmul.f32 %v348, %v403
    %v464 = vmul.f32 %v348, %v404
    %v465 = vmul.f32 %v348, %v405
    %v466 = vmul.f32 %v352, %v394
    %v467 = vmul.f32 %v352, %v395
    %v468 = vmul.f32 %v352, %v396
    %v469 = vmul.f32 %v352, %v397
    %v470 = vmul.f32 %v352, %v398
    %v471 = vmul.f32 %v352, %v399
    %v472 = vmul.f32 %v352, %v400
    %v473 = vmul.f32 %v352, %v401
    %v474 = vmul.f32 %v352, %v402
    %v475 = vmul.f32 %v352, %v403
    %v476 = vmul.f32 %v352, %v404
    %v477 = vmul.f32 %v352, %v405
    %v478 = vmul.f32 %v356, %v394
    %v479 = vmul.f32 %v356, %v395
    %v480 = vmul.f32 %v356, %v396
    %v481 = vmul.f32 %v356, %v397
    %v482 = vmul.f32 %v356, %v398
    %v483 = vmul.f32 %v356, %v399
    %v484 = vmul.f32 %v356, %v400
    %v485 = vmul.f32 %v356, %v401
    %v486 = vmul.f32 %v356, %v402
    %v487 = vmul.f32 %v356, %v403
    %v488 = vmul.f32 %v356, %v404
    %v489 = vmul.f32 %v356, %v405
    %v490 = vmul.f32 %v360, %v394
    %v491 = vmul.f32 %v360, %v395
    %v492 = vmul.f32 %v360, %v396
    %v493 = vmul.f32 %v360, %v397
    %v494 = vmul.f32 %v360, %v398
    %v495 = vmul.f32 %v360, %v399
    %v496 = vmul.f32 %v360, %v400
    %v497 = vmul.f32 %v360, %v401
    %v498 = vmul.f32 %v360, %v402
    %v499 = vmul.f32 %v360, %v403
    %v500 = vmul.f32 %v360, %v404
    %v501 = vmul.f32 %v360, %v405
    %v502 = vmul.f32 %v364, %v394
    %v503 = vmul.f32 %v364, %v395
    %v504 = vmul.f32 %v364, %v396
    %v505 = vmul.f32 %v364, %v397
    %v506 = vmul.f32 %v364, %v398
    %v507 = vmul.f32 %v364, %v399
    %v508 = vmul.f32 %v364, %v400
    %v509 = vmul.f32 %v364, %v401
    %v510 = vmul.f32 %v364, %v402
    %v511 = vmul.f32 %v364, %v403
    %v512 = vmul.f32 %v364, %v404
    %v513 = vmul.f32 %v364, %v405
    %v514 = vmul.f32 %v368, %v394
    %v515 = vmul.f32 %v368, %v395
    %v516 = vmul.f32 %v368, %v396
    %v517 = vmul.f32 %v368, %v397
    %v518 = vmul.f32 %v368, %v398
    %v519 = vmul.f32 %v368, %v399
    %v520 = vmul.f32 %v368, %v400
    %v521 = vmul.f32 %v368, %v401
    %v522 = vmul.f32 %v368, %v402
    %v523 = vmul.f32 %v368, %v403
    %v524 = vmul.f32 %v368, %v404
    %v525 = vmul.f32 %v368, %v405
    %v526 = vmul.f32 %v372, %v394
    %v527 = vmul.f32 %v372, %v395
    %v528 = vmul.f32 %v372, %v396
    %v529 = vmul.f32 %v372, %v397
    %v530 = vmul.f32 %v372, %v398
    %v531 = vmul.f32 %v372, %v399
    %v532 = vmul.f32 %v372, %v400
    %v533 = vmul.f32 %v372, %v401
    %v534 = vmul.f32 %v372, %v402
    %v535 = vmul.f32 %v372, %v403
    %v536 = vmul.f32 %v372, %v404
    %v537 = vmul.f32 %v372, %v405
    %v538 = vmul.f32 %v376, %v394
    %v539 = vmul.f32 %v376, %v395
    %v540 = vmul.f32 %v376, %v396
    %v541 = vmul.f32 %v376, %v397
    %v542 = vmul.f32 %v376, %v398
    %v543 = vmul.f32 %v376, %v399
    %v544 = vmul.f32 %v376, %v400
    %v545 = vmul.f32 %v376, %v401
    %v546 = vmul.f32 %v376, %v402
    %v547 = vmul.f32 %v376, %v403
    %v548 = vmul.f32 %v376, %v404
    %v549 = vmul.f32 %v376, %v405
    %v550 = vmul.f32 %v380, %v394
    %v551 = vmul.f32 %v380, %v395
    %v552 = vmul.f32 %v380, %v396
    %v553 = vmul.f32 %v380, %v397
    %v554 = vmul.f32 %v380, %v398
    %v555 = vmul.f32 %v380, %v399
    %v556 = vmul.f32 %v380, %v400
    %v557 = vmul.f32 %v380, %v401
    %v558 = vmul.f32 %v380, %v402
    %v559 = vmul.f32 %v380, %v403
    %v560 = vmul.f32 %v380, %v404
    %v561 = vmul.f32 %v380, %v405
    %v562 = vmul.f32 %v384, %v394
    %v563 = vmul.f32 %v384, %v395
    %v564 = vmul.f32 %v384, %v396
    %v565 = vmul.f32 %v384, %v397
    %v566 = vmul.f32 %v384, %v398
    %v567 = vmul.f32 %v384, %v399
    %v568 = vmul.f32 %v384, %v400
    %v569 = vmul.f32 %v384, %v401
    %v570 = vmul.f32 %v384, %v402
    %v571 = vmul.f32 %v384, %v403
    %v572 = vmul.f32 %v384, %v404
    %v573 = vmul.f32 %v384, %v405
    %v574 = vmul.f32 %v388, %v394
    %v575 = vmul.f32 %v388, %v395
    %v576 = vmul.f32 %v388, %v396
    %v577 = vmul.f32 %v388, %v397
    %v578 = vmul.f32 %v388, %v398
    %v579 = vmul.f32 %v388, %v399
    %v580 = vmul.f32 %v388, %v400
    %v581 = vmul.f32 %v388, %v401
    %v582 = vmul.f32 %v388, %v402
    %v583 = vmul.f32 %v388, %v403
    %v584 = vmul.f32 %v388, %v404
    %v585 = vmul.f32 %v388, %v405
    %v586 = vmul.f32 %v392, %v394
    %v587 = vmul.f32 %v392, %v395
    %v588 = vmul.f32 %v392, %v396
    %v589 = vmul.f32 %v392, %v397
    %v590 = vmul.f32 %v392, %v398
    %v591 = vmul.f32 %v392, %v399
    %v592 = vmul.f32 %v392, %v400
    %v593 = vmul.f32 %v392, %v401
    %v594 = vmul.f32 %v392, %v402
    %v595 = vmul.f32 %v392, %v403
    %v596 = vmul.f32 %v392, %v404
    %v597 = vmul.f32 %v392, %v405
    %v598 = vadd.f32 %v138, %v406
    %v599 = vadd.f32 %v139, %v407
    %v600 = vadd.f32 %v140, %v408
    %v601 = vadd.f32 %v141, %v409
    %v602 = vadd.f32 %v142, %v410
    %v603 = vadd.f32 %v143, %v411
    %v604 = vadd.f32 %v144, %v412
    %v605 = vadd.f32 %v145, %v413
    %v606 = vadd.f32 %v146, %v414
    %v607 = vadd.f32 %v147, %v415
    %v608 = vadd.f32 %v148, %v416
    %v609 = vadd.f32 %v149, %v417
    %v610 = vadd.f32 %v150, %v418
    %v611 = vadd.f32 %v151, %v419
    %v612 = vadd.f32 %v152, %v420
    %v613 = vadd.f32 %v153, %v421
    %v614 = vadd.f32 %v154, %v422
    %v615 = vadd.f32 %v155, %v423
    %v616 = vadd.f32 %v156, %v424
    %v617 = vadd.f32 %v157, %v425
    %v618 = vadd.f32 %v158, %v426
    %v619 = vadd.f32 %v159, %v427
    %v620 = vadd.f32 %v160, %v428
    %v621 = vadd.f32 %v161, %v429
    %v622 = vadd.f32 %v162, %v430
    %v623 = vadd.f32 %v163, %v431
    %v624 = vadd.f32 %v164, %v432
    %v625 = vadd.f32 %v165, %v433
    %v626 = vadd.f32 %v166, %v434
    %v627 = vadd.f32 %v167, %v435
    %v628 = vadd.f32 %v168, %v436
    %v629 = vadd.f32 %v169, %v437
    %v630 = vadd.f32 %v170, %v438
    %v631 = vadd.f32 %v171, %v439
    %v632 = vadd.f32 %v172, %v440
    %v633 = vadd.f32 %v173, %v441
    %v634 = vadd.f32 %v174, %v442
    %v635 = vadd.f32 %v175, %v443
    %v636 = vadd.f32 %v176, %v444
    %v637 = vadd.f32 %v177, %v445
    %v638 = vadd.f32 %v178, %v446
    %v639 = vadd.f32 %v179, %v447
    %v640 = vadd.f32 %v180, %v448
    %v641 = vadd.f32 %v181, %v449
    %v642 = vadd.f32 %v182, %v450
    %v643 = vadd.f32 %v183, %v451
    %v644 = vadd.f32 %v184, %v452
    %v645 = vadd.f32 %v185, %v453
    %v646 = vadd.f32 %v186, %v454
    %v647 = vadd.f32 %v187, %v455
    %v648 = vadd.f32 %v188, %v456
    %v649 = vadd.f32 %v189, %v457
    %v650 = vadd.f32 %v190, %v458
    %v651 = vadd.f32 %v191, %v459
    %v652 = vadd.f32 %v192, %v460
    %v653 = vadd.f32 %v193, %v461
    %v654 = vadd.f32 %v194, %v462
    %v655 = vadd.f32 %v195, %v463
    %v656 = vadd.f32 %v196, %v464
    %v657 = vadd.f32 %v197, %v465
    %v658 = vadd.f32 %v198, %v466
    %v659 = vadd.f32 %v199, %v467
    %v660 = vadd.f32 %v200, %v468
    %v661 = vadd.f32 %v201, %v469
    %v662 = vadd.f32 %v202, %v470
    %v663 = vadd.f32 %v203, %v471
    %v664 = vadd.f32 %v204, %v472
    %v665 = vadd.f32 %v205, %v473
    %v666 = vadd.f32 %v206, %v474
    %v667 = vadd.f32 %v207, %v475
    %v668 = vadd.f32 %v208, %v476
    %v669 = vadd.f32 %v209, %v477
    %v670 = vadd.f32 %v210, %v478
    %v671 = vadd.f32 %v211, %v479
    %v672 = vadd.f32 %v212, %v480
    %v673 = vadd.f32 %v213, %v481
    %v674 = vadd.f32 %v214, %v482
    %v675 = vadd.f32 %v215, %v483
    %v676 = vadd.f32 %v216, %v484
    %v677 = vadd.f32 %v217, %v485
    %v678 = vadd.f32 %v218, %v486
    %v679 = vadd.f32 %v219, %v487
    %v680 = vadd.f32 %v220, %v488
    %v681 = vadd.f32 %v221, %v489
    %v682 = vadd.f32 %v222, %v490
    %v683 = vadd.f32 %v223, %v491
    %v684 = vadd.f32 %v224, %v492
    %v685 = vadd.f32 %v225, %v493
    %v686 = vadd.f32 %v226, %v494
    %v687 = vadd.f32 %v227, %v495
    %v688 = vadd.f32 %v228, %v496
    %v689 = vadd.f32 %v229, %v497
    %v690 = vadd.f32 %v230, %v498
    %v691 = vadd.f32 %v231, %v499
    %v692 = vadd.f32 %v232, %v500
    %v693 = vadd.f32 %v233, %v501
    %v694 = vadd.f32 %v234, %v502
    %v695 = vadd.f32 %v235, %v503
    %v696 = vadd.f32 %v236, %v504
    %v697 = vadd.f32 %v237, %v505
    %v698 = vadd.f32 %v238, %v506
    %v699 = vadd.f32 %v239, %v507
    %v700 = vadd.f32 %v240, %v508
    %v701 = vadd.f32 %v241, %v509
    %v702 = vadd.f32 %v242, %v510
    %v703 = vadd.f32 %v243, %v511
    %v704 = vadd.f32 %v244, %v512
    %v705 = vadd.f32 %v245, %v513
    %v706 = vadd.f32 %v246, %v514
    %v707 = vadd.f32 %v247, %v515
    %v708 = vadd.f32 %v248, %v516
    %v709 = vadd.f32 %v249, %v517
    %v710 = vadd.f32 %v250, %v518
    %v711 = vadd.f32 %v251, %v519
    %v712 = vadd.f32 %v252, %v520
    %v713 = vadd.f32 %v253, %v521
    %v714 = vadd.f32 %v254, %v522
    %v715 = vadd.f32 %v255, %v523
    %v716 = vadd.f32 %v256, %v524
    %v717 = vadd.f32 %v257, %v525
    %v718 = vadd.f32 %v258, %v526
    %v719 = vadd.f32 %v259, %v527
    %v720 = vadd.f32 %v260, %v528
    %v721 = vadd.f32 %v261, %v529
    %v722 = vadd.f32 %v262, %v530
    %v723 = vadd.f32 %v263, %v531
    %v724 = vadd.f32 %v264, %v532
    %v725 = vadd.f32 %v265, %v533
    %v726 = vadd.f32 %v266, %v534
    %v727 = vadd.f32 %v267, %v535
    %v728 = vadd.f32 %v268, %v536
    %v729 = vadd.f32 %v269, %v537
    %v730 = vadd.f32 %v270, %v538
    %v731 = vadd.f32 %v271, %v539
    %v732 = vadd.f32 %v272, %v540
    %v733 = vadd.f32 %v273, %v541
    %v734 = vadd.f32 %v274, %v542
    %v735 = vadd.f32 %v275, %v543
    %v736 = vadd.f32 %v276, %v544
    %v737 = vadd.f32 %v277, %v545
    %v738 = vadd.f32 %v278, %v546
    %v739 = vadd.f32 %v279, %v547
    %v740 = vadd.f32 %v280, %v548
    %v741 = vadd.f32 %v281, %v549
    %v742 = vadd.f32 %v282, %v550
    %v743 = vadd.f32 %v283, %v551
    %v744 = vadd.f32 %v284, %v552
    %v745 = vadd.f32 %v285, %v553
    %v746 = vadd.f32 %v286, %v554
    %v747 = vadd.f32 %v287, %v555
    %v748 = vadd.f32 %v288, %v556
    %v749 = vadd.f32 %v289, %v557
    %v750 = vadd.f32 %v290, %v558
    %v751 = vadd.f32 %v291, %v559
    %v752 = vadd.f32 %v292, %v560
    %v753 = vadd.f32 %v293, %v561
    %v754 = vadd.f32 %v294, %v562
    %v755 = vadd.f32 %v295, %v563
    %v756 = vadd.f32 %v296, %v564
    %v757 = vadd.f32 %v297, %v565
    %v758 = vadd.f32 %v298, %v566
    %v759 = vadd.f32 %v299, %v567
    %v760 = vadd.f32 %v300, %v568
    %v761 = vadd.f32 %v301, %v569
    %v762 = vadd.f32 %v302, %v570
    %v763 = vadd.f32 %v303, %v571
    %v764 = vadd.f32 %v304, %v572
    %v765 = vadd.f32 %v305, %v573
    %v766 = vadd.f32 %v306, %v574
    %v767 = vadd.f32 %v307, %v575
    %v768 = vadd.f32 %v308, %v576
    %v769 = vadd.f32 %v309, %v577
    %v770 = vadd.f32 %v310, %v578
    %v771 = vadd.f32 %v311, %v579
    %v772 = vadd.f32 %v312, %v580
    %v773 = vadd.f32 %v313, %v581
    %v774 = vadd.f32 %v314, %v582
    %v775 = vadd.f32 %v315, %v583
    %v776 = vadd.f32 %v316, %v584
    %v777 = vadd.f32 %v317, %v585
    %v778 = vadd.f32 %v318, %v586
    %v779 = vadd.f32 %v319, %v587
    %v780 = vadd.f32 %v320, %v588
    %v781 = vadd.f32 %v321, %v589
    %v782 = vadd.f32 %v322, %v590
    %v783 = vadd.f32 %v323, %v591
    %v784 = vadd.f32 %v324, %v592
    %v785 = vadd.f32 %v325, %v593
    %v786 = vadd.f32 %v326, %v594
    %v787 = vadd.f32 %v327, %v595
    %v788 = vadd.f32 %v328, %v596
    %v789 = vadd.f32 %v329, %v597
    %790 = vset.pattern.permute.xlu0 2
    %791 = vperm.xlu0 %790, %v30
    %v792 = vpop.permute.xlu0 %791
    %794 = vset.pattern.permute.xlu0 2
    %795 = vperm.xlu0 %794, %v31
    %v796 = vpop.permute.xlu0 %795
    %798 = vset.pattern.permute.xlu0 2
    %799 = vperm.xlu0 %798, %v32
    %v800 = vpop.permute.xlu0 %799
    %802 = vset.pattern.permute.xlu0 2
    %803 = vperm.xlu0 %802, %v33
    %v804 = vpop.permute.xlu0 %803
    %806 = vset.pattern.permute.xlu0 2
    %807 = vperm.xlu0 %806, %v34
    %v808 = vpop.permute.xlu0 %807
    %810 = vset.pattern.permute.xlu0 2
    %811 = vperm.xlu0 %810, %v35
    %v812 = vpop.permute.xlu0 %811
    %814 = vset.pattern.permute.xlu0 2
    %815 = vperm.xlu0 %814, %v36
    %v816 = vpop.permute.xlu0 %815
    %818 = vset.pattern.permute.xlu0 2
    %819 = vperm.xlu0 %818, %v37
    %v820 = vpop.permute.xlu0 %819
    %822 = vset.pattern.permute.xlu0 2
    %823 = vperm.xlu0 %822, %v38
    %v824 = vpop.permute.xlu0 %823
    %826 = vset.pattern.permute.xlu0 2
    %827 = vperm.xlu0 %826, %v39
    %v828 = vpop.permute.xlu0 %827
    %830 = vset.pattern.permute.xlu0 2
    %831 = vperm.xlu0 %830, %v40
    %v832 = vpop.permute.xlu0 %831
    %834 = vset.pattern.permute.xlu0 2
    %835 = vperm.xlu0 %834, %v41
    %v836 = vpop.permute.xlu0 %835
    %838 = vset.pattern.permute.xlu0 2
    %839 = vperm.xlu0 %838, %v42
    %v840 = vpop.permute.xlu0 %839
    %842 = vset.pattern.permute.xlu0 2
    %843 = vperm.xlu0 %842, %v43
    %v844 = vpop.permute.xlu0 %843
    %846 = vset.pattern.permute.xlu0 2
    %847 = vperm.xlu0 %846, %v44
    %v848 = vpop.permute.xlu0 %847
    %850 = vset.pattern.permute.xlu0 2
    %851 = vperm.xlu0 %850, %v45
    %v852 = vpop.permute.xlu0 %851
    %v854 = vperm.slane %v18, 2
    %v855 = vperm.slane %v19, 2
    %v856 = vperm.slane %v20, 2
    %v857 = vperm.slane %v21, 2
    %v858 = vperm.slane %v22, 2
    %v859 = vperm.slane %v23, 2
    %v860 = vperm.slane %v24, 2
    %v861 = vperm.slane %v25, 2
    %v862 = vperm.slane %v26, 2
    %v863 = vperm.slane %v27, 2
    %v864 = vperm.slane %v28, 2
    %v865 = vperm.slane %v29, 2
    %v866 = vmul.f32 %v792, %v854
    %v867 = vmul.f32 %v792, %v855
    %v868 = vmul.f32 %v792, %v856
    %v869 = vmul.f32 %v792, %v857
    %v870 = vmul.f32 %v792, %v858
    %v871 = vmul.f32 %v792, %v859
    %v872 = vmul.f32 %v792, %v860
    %v873 = vmul.f32 %v792, %v861
    %v874 = vmul.f32 %v792, %v862
    %v875 = vmul.f32 %v792, %v863
    %v876 = vmul.f32 %v792, %v864
    %v877 = vmul.f32 %v792, %v865
    %v878 = vmul.f32 %v796, %v854
    %v879 = vmul.f32 %v796, %v855
    %v880 = vmul.f32 %v796, %v856
    %v881 = vmul.f32 %v796, %v857
    %v882 = vmul.f32 %v796, %v858
    %v883 = vmul.f32 %v796, %v859
    %v884 = vmul.f32 %v796, %v860
    %v885 = vmul.f32 %v796, %v861
    %v886 = vmul.f32 %v796, %v862
    %v887 = vmul.f32 %v796, %v863
    %v888 = vmul.f32 %v796, %v864
    %v889 = vmul.f32 %v796, %v865
    %v890 = vmul.f32 %v800, %v854
    %v891 = vmul.f32 %v800, %v855
    %v892 = vmul.f32 %v800, %v856
    %v893 = vmul.f32 %v800, %v857
    %v894 = vmul.f32 %v800, %v858
    %v895 = vmul.f32 %v800, %v859
    %v896 = vmul.f32 %v800, %v860
    %v897 = vmul.f32 %v800, %v861
    %v898 = vmul.f32 %v800, %v862
    %v899 = vmul.f32 %v800, %v863
    %v900 = vmul.f32 %v800, %v864
    %v901 = vmul.f32 %v800, %v865
    %v902 = vmul.f32 %v804, %v854
    %v903 = vmul.f32 %v804, %v855
    %v904 = vmul.f32 %v804, %v856
    %v905 = vmul.f32 %v804, %v857
    %v906 = vmul.f32 %v804, %v858
    %v907 = vmul.f32 %v804, %v859
    %v908 = vmul.f32 %v804, %v860
    %v909 = vmul.f32 %v804, %v861
    %v910 = vmul.f32 %v804, %v862
    %v911 = vmul.f32 %v804, %v863
    %v912 = vmul.f32 %v804, %v864
    %v913 = vmul.f32 %v804, %v865
    %v914 = vmul.f32 %v808, %v854
    %v915 = vmul.f32 %v808, %v855
    %v916 = vmul.f32 %v808, %v856
    %v917 = vmul.f32 %v808, %v857
    %v918 = vmul.f32 %v808, %v858
    %v919 = vmul.f32 %v808, %v859
    %v920 = vmul.f32 %v808, %v860
    %v921 = vmul.f32 %v808, %v861
    %v922 = vmul.f32 %v808, %v862
    %v923 = vmul.f32 %v808, %v863
    %v924 = vmul.f32 %v808, %v864
    %v925 = vmul.f32 %v808, %v865
    %v926 = vmul.f32 %v812, %v854
    %v927 = vmul.f32 %v812, %v855
    %v928 = vmul.f32 %v812, %v856
    %v929 = vmul.f32 %v812, %v857
    %v930 = vmul.f32 %v812, %v858
    %v931 = vmul.f32 %v812, %v859
    %v932 = vmul.f32 %v812, %v860
    %v933 = vmul.f32 %v812, %v861
    %v934 = vmul.f32 %v812, %v862
    %v935 = vmul.f32 %v812, %v863
    %v936 = vmul.f32 %v812, %v864
    %v937 = vmul.f32 %v812, %v865
    %v938 = vmul.f32 %v816, %v854
    %v939 = vmul.f32 %v816, %v855
    %v940 = vmul.f32 %v816, %v856
    %v941 = vmul.f32 %v816, %v857
    %v942 = vmul.f32 %v816, %v858
    %v943 = vmul.f32 %v816, %v859
    %v944 = vmul.f32 %v816, %v860
    %v945 = vmul.f32 %v816, %v861
    %v946 = vmul.f32 %v816, %v862
    %v947 = vmul.f32 %v816, %v863
    %v948 = vmul.f32 %v816, %v864
    %v949 = vmul.f32 %v816, %v865
    %v950 = vmul.f32 %v820, %v854
    %v951 = vmul.f32 %v820, %v855
    %v952 = vmul.f32 %v820, %v856
    %v953 = vmul.f32 %v820, %v857
    %v954 = vmul.f32 %v820, %v858
    %v955 = vmul.f32 %v820, %v859
    %v956 = vmul.f32 %v820, %v860
    %v957 = vmul.f32 %v820, %v861
    %v958 = vmul.f32 %v820, %v862
    %v959 = vmul.f32 %v820, %v863
    %v960 = vmul.f32 %v820, %v864
    %v961 = vmul.f32 %v820, %v865
    %v962 = vmul.f32 %v824, %v854
    %v963 = vmul.f32 %v824, %v855
    %v964 = vmul.f32 %v824, %v856
    %v965 = vmul.f32 %v824, %v857
    %v966 = vmul.f32 %v824, %v858
    %v967 = vmul.f32 %v824, %v859
    %v968 = vmul.f32 %v824, %v860
    %v969 = vmul.f32 %v824, %v861
    %v970 = vmul.f32 %v824, %v862
    %v971 = vmul.f32 %v824, %v863
    %v972 = vmul.f32 %v824, %v864
    %v973 = vmul.f32 %v824, %v865
    %v974 = vmul.f32 %v828, %v854
    %v975 = vmul.f32 %v828, %v855
    %v976 = vmul.f32 %v828, %v856
    %v977 = vmul.f32 %v828, %v857
    %v978 = vmul.f32 %v828, %v858
    %v979 = vmul.f32 %v828, %v859
    %v980 = vmul.f32 %v828, %v860
    %v981 = vmul.f32 %v828, %v861
    %v982 = vmul.f32 %v828, %v862
    %v983 = vmul.f32 %v828, %v863
    %v984 = vmul.f32 %v828, %v864
    %v985 = vmul.f32 %v828, %v865
    %v986 = vmul.f32 %v832, %v854
    %v987 = vmul.f32 %v832, %v855
    %v988 = vmul.f32 %v832, %v856
    %v989 = vmul.f32 %v832, %v857
    %v990 = vmul.f32 %v832, %v858
    %v991 = vmul.f32 %v832, %v859
    %v992 = vmul.f32 %v832, %v860
    %v993 = vmul.f32 %v832, %v861
    %v994 = vmul.f32 %v832, %v862
    %v995 = vmul.f32 %v832, %v863
    %v996 = vmul.f32 %v832, %v864
    %v997 = vmul.f32 %v832, %v865
    %v998 = vmul.f32 %v836, %v854
    %v999 = vmul.f32 %v836, %v855
    %v1000 = vmul.f32 %v836, %v856
    %v1001 = vmul.f32 %v836, %v857
    %v1002 = vmul.f32 %v836, %v858
    %v1003 = vmul.f32 %v836, %v859
    %v1004 = vmul.f32 %v836, %v860
    %v1005 = vmul.f32 %v836, %v861
    %v1006 = vmul.f32 %v836, %v862
    %v1007 = vmul.f32 %v836, %v863
    %v1008 = vmul.f32 %v836, %v864
    %v1009 = vmul.f32 %v836, %v865
    %v1010 = vmul.f32 %v840, %v854
    %v1011 = vmul.f32 %v840, %v855
    %v1012 = vmul.f32 %v840, %v856
    %v1013 = vmul.f32 %v840, %v857
    %v1014 = vmul.f32 %v840, %v858
    %v1015 = vmul.f32 %v840, %v859
    %v1016 = vmul.f32 %v840, %v860
    %v1017 = vmul.f32 %v840, %v861
    %v1018 = vmul.f32 %v840, %v862
    %v1019 = vmul.f32 %v840, %v863
    %v1020 = vmul.f32 %v840, %v864
    %v1021 = vmul.f32 %v840, %v865
    %v1022 = vmul.f32 %v844, %v854
    %v1023 = vmul.f32 %v844, %v855
    %v1024 = vmul.f32 %v844, %v856
    %v1025 = vmul.f32 %v844, %v857
    %v1026 = vmul.f32 %v844, %v858
    %v1027 = vmul.f32 %v844, %v859
    %v1028 = vmul.f32 %v844, %v860
    %v1029 = vmul.f32 %v844, %v861
    %v1030 = vmul.f32 %v844, %v862
    %v1031 = vmul.f32 %v844, %v863
    %v1032 = vmul.f32 %v844, %v864
    %v1033 = vmul.f32 %v844, %v865
    %v1034 = vmul.f32 %v848, %v854
    %v1035 = vmul.f32 %v848, %v855
    %v1036 = vmul.f32 %v848, %v856
    %v1037 = vmul.f32 %v848, %v857
    %v1038 = vmul.f32 %v848, %v858
    %v1039 = vmul.f32 %v848, %v859
    %v1040 = vmul.f32 %v848, %v860
    %v1041 = vmul.f32 %v848, %v861
    %v1042 = vmul.f32 %v848, %v862
    %v1043 = vmul.f32 %v848, %v863
    %v1044 = vmul.f32 %v848, %v864
    %v1045 = vmul.f32 %v848, %v865
    %v1046 = vmul.f32 %v852, %v854
    %v1047 = vmul.f32 %v852, %v855
    %v1048 = vmul.f32 %v852, %v856
    %v1049 = vmul.f32 %v852, %v857
    %v1050 = vmul.f32 %v852, %v858
    %v1051 = vmul.f32 %v852, %v859
    %v1052 = vmul.f32 %v852, %v860
    %v1053 = vmul.f32 %v852, %v861
    %v1054 = vmul.f32 %v852, %v862
    %v1055 = vmul.f32 %v852, %v863
    %v1056 = vmul.f32 %v852, %v864
    %v1057 = vmul.f32 %v852, %v865
    %v1058 = vadd.f32 %v598, %v866
    %v1059 = vadd.f32 %v599, %v867
    %v1060 = vadd.f32 %v600, %v868
    %v1061 = vadd.f32 %v601, %v869
    %v1062 = vadd.f32 %v602, %v870
    %v1063 = vadd.f32 %v603, %v871
    %v1064 = vadd.f32 %v604, %v872
    %v1065 = vadd.f32 %v605, %v873
    %v1066 = vadd.f32 %v606, %v874
    %v1067 = vadd.f32 %v607, %v875
    %v1068 = vadd.f32 %v608, %v876
    %v1069 = vadd.f32 %v609, %v877
    %v1070 = vadd.f32 %v610, %v878
    %v1071 = vadd.f32 %v611, %v879
    %v1072 = vadd.f32 %v612, %v880
    %v1073 = vadd.f32 %v613, %v881
    %v1074 = vadd.f32 %v614, %v882
    %v1075 = vadd.f32 %v615, %v883
    %v1076 = vadd.f32 %v616, %v884
    %v1077 = vadd.f32 %v617, %v885
    %v1078 = vadd.f32 %v618, %v886
    %v1079 = vadd.f32 %v619, %v887
    %v1080 = vadd.f32 %v620, %v888
    %v1081 = vadd.f32 %v621, %v889
    %v1082 = vadd.f32 %v622, %v890
    %v1083 = vadd.f32 %v623, %v891
    %v1084 = vadd.f32 %v624, %v892
    %v1085 = vadd.f32 %v625, %v893
    %v1086 = vadd.f32 %v626, %v894
    %v1087 = vadd.f32 %v627, %v895
    %v1088 = vadd.f32 %v628, %v896
    %v1089 = vadd.f32 %v629, %v897
    %v1090 = vadd.f32 %v630, %v898
    %v1091 = vadd.f32 %v631, %v899
    %v1092 = vadd.f32 %v632, %v900
    %v1093 = vadd.f32 %v633, %v901
    %v1094 = vadd.f32 %v634, %v902
    %v1095 = vadd.f32 %v635, %v903
    %v1096 = vadd.f32 %v636, %v904
    %v1097 = vadd.f32 %v637, %v905
    %v1098 = vadd.f32 %v638, %v906
    %v1099 = vadd.f32 %v639, %v907
    %v1100 = vadd.f32 %v640, %v908
    %v1101 = vadd.f32 %v641, %v909
    %v1102 = vadd.f32 %v642, %v910
    %v1103 = vadd.f32 %v643, %v911
    %v1104 = vadd.f32 %v644, %v912
    %v1105 = vadd.f32 %v645, %v913
    %v1106 = vadd.f32 %v646, %v914
    %v1107 = vadd.f32 %v647, %v915
    %v1108 = vadd.f32 %v648, %v916
    %v1109 = vadd.f32 %v649, %v917
    %v1110 = vadd.f32 %v650, %v918
    %v1111 = vadd.f32 %v651, %v919
    %v1112 = vadd.f32 %v652, %v920
    %v1113 = vadd.f32 %v653, %v921
    %v1114 = vadd.f32 %v654, %v922
    %v1115 = vadd.f32 %v655, %v923
    %v1116 = vadd.f32 %v656, %v924
    %v1117 = vadd.f32 %v657, %v925
    %v1118 = vadd.f32 %v658, %v926
    %v1119 = vadd.f32 %v659, %v927
    %v1120 = vadd.f32 %v660, %v928
    %v1121 = vadd.f32 %v661, %v929
    %v1122 = vadd.f32 %v662, %v930
    %v1123 = vadd.f32 %v663, %v931
    %v1124 = vadd.f32 %v664, %v932
    %v1125 = vadd.f32 %v665, %v933
    %v1126 = vadd.f32 %v666, %v934
    %v1127 = vadd.f32 %v667, %v935
    %v1128 = vadd.f32 %v668, %v936
    %v1129 = vadd.f32 %v669, %v937
    %v1130 = vadd.f32 %v670, %v938
    %v1131 = vadd.f32 %v671, %v939
    %v1132 = vadd.f32 %v672, %v940
    %v1133 = vadd.f32 %v673, %v941
    %v1134 = vadd.f32 %v674, %v942
    %v1135 = vadd.f32 %v675, %v943
    %v1136 = vadd.f32 %v676, %v944
    %v1137 = vadd.f32 %v677, %v945
    %v1138 = vadd.f32 %v678, %v946
    %v1139 = vadd.f32 %v679, %v947
    %v1140 = vadd.f32 %v680, %v948
    %v1141 = vadd.f32 %v681, %v949
    %v1142 = vadd.f32 %v682, %v950
    %v1143 = vadd.f32 %v683, %v951
    %v1144 = vadd.f32 %v684, %v952
    %v1145 = vadd.f32 %v685, %v953
    %v1146 = vadd.f32 %v686, %v954
    %v1147 = vadd.f32 %v687, %v955
    %v1148 = vadd.f32 %v688, %v956
    %v1149 = vadd.f32 %v689, %v957
    %v1150 = vadd.f32 %v690, %v958
    %v1151 = vadd.f32 %v691, %v959
    %v1152 = vadd.f32 %v692, %v960
    %v1153 = vadd.f32 %v693, %v961
    %v1154 = vadd.f32 %v694, %v962
    %v1155 = vadd.f32 %v695, %v963
    %v1156 = vadd.f32 %v696, %v964
    %v1157 = vadd.f32 %v697, %v965
    %v1158 = vadd.f32 %v698, %v966
    %v1159 = vadd.f32 %v699, %v967
    %v1160 = vadd.f32 %v700, %v968
    %v1161 = vadd.f32 %v701, %v969
    %v1162 = vadd.f32 %v702, %v970
    %v1163 = vadd.f32 %v703, %v971
    %v1164 = vadd.f32 %v704, %v972
    %v1165 = vadd.f32 %v705, %v973
    %v1166 = vadd.f32 %v706, %v974
    %v1167 = vadd.f32 %v707, %v975
    %v1168 = vadd.f32 %v708, %v976
    %v1169 = vadd.f32 %v709, %v977
    %v1170 = vadd.f32 %v710, %v978
    %v1171 = vadd.f32 %v711, %v979
    %v1172 = vadd.f32 %v712, %v980
    %v1173 = vadd.f32 %v713, %v981
    %v1174 = vadd.f32 %v714, %v982
    %v1175 = vadd.f32 %v715, %v983
    %v1176 = vadd.f32 %v716, %v984
    %v1177 = vadd.f32 %v717, %v985
    %v1178 = vadd.f32 %v718, %v986
    %v1179 = vadd.f32 %v719, %v987
    %v1180 = vadd.f32 %v720, %v988
    %v1181 = vadd.f32 %v721, %v989
    %v1182 = vadd.f32 %v722, %v990
    %v1183 = vadd.f32 %v723, %v991
    %v1184 = vadd.f32 %v724, %v992
    %v1185 = vadd.f32 %v725, %v993
    %v1186 = vadd.f32 %v726, %v994
    %v1187 = vadd.f32 %v727, %v995
    %v1188 = vadd.f32 %v728, %v996
    %v1189 = vadd.f32 %v729, %v997
    %v1190 = vadd.f32 %v730, %v998
    %v1191 = vadd.f32 %v731, %v999
    %v1192 = vadd.f32 %v732, %v1000
    %v1193 = vadd.f32 %v733, %v1001
    %v1194 = vadd.f32 %v734, %v1002
    %v1195 = vadd.f32 %v735, %v1003
    %v1196 = vadd.f32 %v736, %v1004
    %v1197 = vadd.f32 %v737, %v1005
    %v1198 = vadd.f32 %v738, %v1006
    %v1199 = vadd.f32 %v739, %v1007
    %v1200 = vadd.f32 %v740, %v1008
    %v1201 = vadd.f32 %v741, %v1009
    %v1202 = vadd.f32 %v742, %v1010
    %v1203 = vadd.f32 %v743, %v1011
    %v1204 = vadd.f32 %v744, %v1012
    %v1205 = vadd.f32 %v745, %v1013
    %v1206 = vadd.f32 %v746, %v1014
    %v1207 = vadd.f32 %v747, %v1015
    %v1208 = vadd.f32 %v748, %v1016
    %v1209 = vadd.f32 %v749, %v1017
    %v1210 = vadd.f32 %v750, %v1018
    %v1211 = vadd.f32 %v751, %v1019
    %v1212 = vadd.f32 %v752, %v1020
    %v1213 = vadd.f32 %v753, %v1021
    %v1214 = vadd.f32 %v754, %v1022
    %v1215 = vadd.f32 %v755, %v1023
    %v1216 = vadd.f32 %v756, %v1024
    %v1217 = vadd.f32 %v757, %v1025
    %v1218 = vadd.f32 %v758, %v1026
    %v1219 = vadd.f32 %v759, %v1027
    %v1220 = vadd.f32 %v760, %v1028
    %v1221 = vadd.f32 %v761, %v1029
    %v1222 = vadd.f32 %v762, %v1030
    %v1223 = vadd.f32 %v763, %v1031
    %v1224 = vadd.f32 %v764, %v1032
    %v1225 = vadd.f32 %v765, %v1033
    %v1226 = vadd.f32 %v766, %v1034
    %v1227 = vadd.f32 %v767, %v1035
    %v1228 = vadd.f32 %v768, %v1036
    %v1229 = vadd.f32 %v769, %v1037
    %v1230 = vadd.f32 %v770, %v1038
    %v1231 = vadd.f32 %v771, %v1039
    %v1232 = vadd.f32 %v772, %v1040
    %v1233 = vadd.f32 %v773, %v1041
    %v1234 = vadd.f32 %v774, %v1042
    %v1235 = vadd.f32 %v775, %v1043
    %v1236 = vadd.f32 %v776, %v1044
    %v1237 = vadd.f32 %v777, %v1045
    %v1238 = vadd.f32 %v778, %v1046
    %v1239 = vadd.f32 %v779, %v1047
    %v1240 = vadd.f32 %v780, %v1048
    %v1241 = vadd.f32 %v781, %v1049
    %v1242 = vadd.f32 %v782, %v1050
    %v1243 = vadd.f32 %v783, %v1051
    %v1244 = vadd.f32 %v784, %v1052
    %v1245 = vadd.f32 %v785, %v1053
    %v1246 = vadd.f32 %v786, %v1054
    %v1247 = vadd.f32 %v787, %v1055
    %v1248 = vadd.f32 %v788, %v1056
    %v1249 = vadd.f32 %v789, %v1057
    %1250 = vset.pattern.permute.xlu0 3
    %1251 = vperm.xlu0 %1250, %v30
    %v1252 = vpop.permute.xlu0 %1251
    %1254 = vset.pattern.permute.xlu0 3
    %1255 = vperm.xlu0 %1254, %v31
    %v1256 = vpop.permute.xlu0 %1255
    %1258 = vset.pattern.permute.xlu0 3
    %1259 = vperm.xlu0 %1258, %v32
    %v1260 = vpop.permute.xlu0 %1259
    %1262 = vset.pattern.permute.xlu0 3
    %1263 = vperm.xlu0 %1262, %v33
    %v1264 = vpop.permute.xlu0 %1263
    %1266 = vset.pattern.permute.xlu0 3
    %1267 = vperm.xlu0 %1266, %v34
    %v1268 = vpop.permute.xlu0 %1267
    %1270 = vset.pattern.permute.xlu0 3
    %1271 = vperm.xlu0 %1270, %v35
    %v1272 = vpop.permute.xlu0 %1271
    %1274 = vset.pattern.permute.xlu0 3
    %1275 = vperm.xlu0 %1274, %v36
    %v1276 = vpop.permute.xlu0 %1275
    %1278 = vset.pattern.permute.xlu0 3
    %1279 = vperm.xlu0 %1278, %v37
    %v1280 = vpop.permute.xlu0 %1279
    %1282 = vset.pattern.permute.xlu0 3
    %1283 = vperm.xlu0 %1282, %v38
    %v1284 = vpop.permute.xlu0 %1283
    %1286 = vset.pattern.permute.xlu0 3
    %1287 = vperm.xlu0 %1286, %v39
    %v1288 = vpop.permute.xlu0 %1287
    %1290 = vset.pattern.permute.xlu0 3
    %1291 = vperm.xlu0 %1290, %v40
    %v1292 = vpop.permute.xlu0 %1291
    %1294 = vset.pattern.permute.xlu0 3
    %1295 = vperm.xlu0 %1294, %v41
    %v1296 = vpop.permute.xlu0 %1295
    %1298 = vset.pattern.permute.xlu0 3
    %1299 = vperm.xlu0 %1298, %v42
    %v1300 = vpop.permute.xlu0 %1299
    %1302 = vset.pattern.permute.xlu0 3
    %1303 = vperm.xlu0 %1302, %v43
    %v1304 = vpop.permute.xlu0 %1303
    %1306 = vset.pattern.permute.xlu0 3
    %1307 = vperm.xlu0 %1306, %v44
    %v1308 = vpop.permute.xlu0 %1307
    %1310 = vset.pattern.permute.xlu0 3
    %1311 = vperm.xlu0 %1310, %v45
    %v1312 = vpop.permute.xlu0 %1311
    %v1314 = vadd.f32 %v1058, %v1252
    %v1315 = vadd.f32 %v1059, %v1252
    %v1316 = vadd.f32 %v1060, %v1252
    %v1317 = vadd.f32 %v1061, %v1252
    %v1318 = vadd.f32 %v1062, %v1252
    %v1319 = vadd.f32 %v1063, %v1252
    %v1320 = vadd.f32 %v1064, %v1252
    %v1321 = vadd.f32 %v1065, %v1252
    %v1322 = vadd.f32 %v1066, %v1252
    %v1323 = vadd.f32 %v1067, %v1252
    %v1324 = vadd.f32 %v1068, %v1252
    %v1325 = vadd.f32 %v1069, %v1252
    %v1326 = vadd.f32 %v1070, %v1256
    %v1327 = vadd.f32 %v1071, %v1256
    %v1328 = vadd.f32 %v1072, %v1256
    %v1329 = vadd.f32 %v1073, %v1256
    %v1330 = vadd.f32 %v1074, %v1256
    %v1331 = vadd.f32 %v1075, %v1256
    %v1332 = vadd.f32 %v1076, %v1256
    %v1333 = vadd.f32 %v1077, %v1256
    %v1334 = vadd.f32 %v1078, %v1256
    %v1335 = vadd.f32 %v1079, %v1256
    %v1336 = vadd.f32 %v1080, %v1256
    %v1337 = vadd.f32 %v1081, %v1256
    %v1338 = vadd.f32 %v1082, %v1260
    %v1339 = vadd.f32 %v1083, %v1260
    %v1340 = vadd.f32 %v1084, %v1260
    %v1341 = vadd.f32 %v1085, %v1260
    %v1342 = vadd.f32 %v1086, %v1260
    %v1343 = vadd.f32 %v1087, %v1260
    %v1344 = vadd.f32 %v1088, %v1260
    %v1345 = vadd.f32 %v1089, %v1260
    %v1346 = vadd.f32 %v1090, %v1260
    %v1347 = vadd.f32 %v1091, %v1260
    %v1348 = vadd.f32 %v1092, %v1260
    %v1349 = vadd.f32 %v1093, %v1260
    %v1350 = vadd.f32 %v1094, %v1264
    %v1351 = vadd.f32 %v1095, %v1264
    %v1352 = vadd.f32 %v1096, %v1264
    %v1353 = vadd.f32 %v1097, %v1264
    %v1354 = vadd.f32 %v1098, %v1264
    %v1355 = vadd.f32 %v1099, %v1264
    %v1356 = vadd.f32 %v1100, %v1264
    %v1357 = vadd.f32 %v1101, %v1264
    %v1358 = vadd.f32 %v1102, %v1264
    %v1359 = vadd.f32 %v1103, %v1264
    %v1360 = vadd.f32 %v1104, %v1264
    %v1361 = vadd.f32 %v1105, %v1264
    %v1362 = vadd.f32 %v1106, %v1268
    %v1363 = vadd.f32 %v1107, %v1268
    %v1364 = vadd.f32 %v1108, %v1268
    %v1365 = vadd.f32 %v1109, %v1268
    %v1366 = vadd.f32 %v1110, %v1268
    %v1367 = vadd.f32 %v1111, %v1268
    %v1368 = vadd.f32 %v1112, %v1268
    %v1369 = vadd.f32 %v1113, %v1268
    %v1370 = vadd.f32 %v1114, %v1268
    %v1371 = vadd.f32 %v1115, %v1268
    %v1372 = vadd.f32 %v1116, %v1268
    %v1373 = vadd.f32 %v1117, %v1268
    %v1374 = vadd.f32 %v1118, %v1272
    %v1375 = vadd.f32 %v1119, %v1272
    %v1376 = vadd.f32 %v1120, %v1272
    %v1377 = vadd.f32 %v1121, %v1272
    %v1378 = vadd.f32 %v1122, %v1272
    %v1379 = vadd.f32 %v1123, %v1272
    %v1380 = vadd.f32 %v1124, %v1272
    %v1381 = vadd.f32 %v1125, %v1272
    %v1382 = vadd.f32 %v1126, %v1272
    %v1383 = vadd.f32 %v1127, %v1272
    %v1384 = vadd.f32 %v1128, %v1272
    %v1385 = vadd.f32 %v1129, %v1272
    %v1386 = vadd.f32 %v1130, %v1276
    %v1387 = vadd.f32 %v1131, %v1276
    %v1388 = vadd.f32 %v1132, %v1276
    %v1389 = vadd.f32 %v1133, %v1276
    %v1390 = vadd.f32 %v1134, %v1276
    %v1391 = vadd.f32 %v1135, %v1276
    %v1392 = vadd.f32 %v1136, %v1276
    %v1393 = vadd.f32 %v1137, %v1276
    %v1394 = vadd.f32 %v1138, %v1276
    %v1395 = vadd.f32 %v1139, %v1276
    %v1396 = vadd.f32 %v1140, %v1276
    %v1397 = vadd.f32 %v1141, %v1276
    %v1398 = vadd.f32 %v1142, %v1280
    %v1399 = vadd.f32 %v1143, %v1280
    %v1400 = vadd.f32 %v1144, %v1280
    %v1401 = vadd.f32 %v1145, %v1280
    %v1402 = vadd.f32 %v1146, %v1280
    %v1403 = vadd.f32 %v1147, %v1280
    %v1404 = vadd.f32 %v1148, %v1280
    %v1405 = vadd.f32 %v1149, %v1280
    %v1406 = vadd.f32 %v1150, %v1280
    %v1407 = vadd.f32 %v1151, %v1280
    %v1408 = vadd.f32 %v1152, %v1280
    %v1409 = vadd.f32 %v1153, %v1280
    %v1410 = vadd.f32 %v1154, %v1284
    %v1411 = vadd.f32 %v1155, %v1284
    %v1412 = vadd.f32 %v1156, %v1284
    %v1413 = vadd.f32 %v1157, %v1284
    %v1414 = vadd.f32 %v1158, %v1284
    %v1415 = vadd.f32 %v1159, %v1284
    %v1416 = vadd.f32 %v1160, %v1284
    %v1417 = vadd.f32 %v1161, %v1284
    %v1418 = vadd.f32 %v1162, %v1284
    %v1419 = vadd.f32 %v1163, %v1284
    %v1420 = vadd.f32 %v1164, %v1284
    %v1421 = vadd.f32 %v1165, %v1284
    %v1422 = vadd.f32 %v1166, %v1288
    %v1423 = vadd.f32 %v1167, %v1288
    %v1424 = vadd.f32 %v1168, %v1288
    %v1425 = vadd.f32 %v1169, %v1288
    %v1426 = vadd.f32 %v1170, %v1288
    %v1427 = vadd.f32 %v1171, %v1288
    %v1428 = vadd.f32 %v1172, %v1288
    %v1429 = vadd.f32 %v1173, %v1288
    %v1430 = vadd.f32 %v1174, %v1288
    %v1431 = vadd.f32 %v1175, %v1288
    %v1432 = vadd.f32 %v1176, %v1288
    %v1433 = vadd.f32 %v1177, %v1288
    %v1434 = vadd.f32 %v1178, %v1292
    %v1435 = vadd.f32 %v1179, %v1292
    %v1436 = vadd.f32 %v1180, %v1292
    %v1437 = vadd.f32 %v1181, %v1292
    %v1438 = vadd.f32 %v1182, %v1292
    %v1439 = vadd.f32 %v1183, %v1292
    %v1440 = vadd.f32 %v1184, %v1292
    %v1441 = vadd.f32 %v1185, %v1292
    %v1442 = vadd.f32 %v1186, %v1292
    %v1443 = vadd.f32 %v1187, %v1292
    %v1444 = vadd.f32 %v1188, %v1292
    %v1445 = vadd.f32 %v1189, %v1292
    %v1446 = vadd.f32 %v1190, %v1296
    %v1447 = vadd.f32 %v1191, %v1296
    %v1448 = vadd.f32 %v1192, %v1296
    %v1449 = vadd.f32 %v1193, %v1296
    %v1450 = vadd.f32 %v1194, %v1296
    %v1451 = vadd.f32 %v1195, %v1296
    %v1452 = vadd.f32 %v1196, %v1296
    %v1453 = vadd.f32 %v1197, %v1296
    %v1454 = vadd.f32 %v1198, %v1296
    %v1455 = vadd.f32 %v1199, %v1296
    %v1456 = vadd.f32 %v1200, %v1296
    %v1457 = vadd.f32 %v1201, %v1296
    %v1458 = vadd.f32 %v1202, %v1300
    %v1459 = vadd.f32 %v1203, %v1300
    %v1460 = vadd.f32 %v1204, %v1300
    %v1461 = vadd.f32 %v1205, %v1300
    %v1462 = vadd.f32 %v1206, %v1300
    %v1463 = vadd.f32 %v1207, %v1300
    %v1464 = vadd.f32 %v1208, %v1300
    %v1465 = vadd.f32 %v1209, %v1300
    %v1466 = vadd.f32 %v1210, %v1300
    %v1467 = vadd.f32 %v1211, %v1300
    %v1468 = vadd.f32 %v1212, %v1300
    %v1469 = vadd.f32 %v1213, %v1300
    %v1470 = vadd.f32 %v1214, %v1304
    %v1471 = vadd.f32 %v1215, %v1304
    %v1472 = vadd.f32 %v1216, %v1304
    %v1473 = vadd.f32 %v1217, %v1304
    %v1474 = vadd.f32 %v1218, %v1304
    %v1475 = vadd.f32 %v1219, %v1304
    %v1476 = vadd.f32 %v1220, %v1304
    %v1477 = vadd.f32 %v1221, %v1304
    %v1478 = vadd.f32 %v1222, %v1304
    %v1479 = vadd.f32 %v1223, %v1304
    %v1480 = vadd.f32 %v1224, %v1304
    %v1481 = vadd.f32 %v1225, %v1304
    %v1482 = vadd.f32 %v1226, %v1308
    %v1483 = vadd.f32 %v1227, %v1308
    %v1484 = vadd.f32 %v1228, %v1308
    %v1485 = vadd.f32 %v1229, %v1308
    %v1486 = vadd.f32 %v1230, %v1308
    %v1487 = vadd.f32 %v1231, %v1308
    %v1488 = vadd.f32 %v1232, %v1308
    %v1489 = vadd.f32 %v1233, %v1308
    %v1490 = vadd.f32 %v1234, %v1308
    %v1491 = vadd.f32 %v1235, %v1308
    %v1492 = vadd.f32 %v1236, %v1308
    %v1493 = vadd.f32 %v1237, %v1308
    %v1494 = vadd.f32 %v1238, %v1312
    %v1495 = vadd.f32 %v1239, %v1312
    %v1496 = vadd.f32 %v1240, %v1312
    %v1497 = vadd.f32 %v1241, %v1312
    %v1498 = vadd.f32 %v1242, %v1312
    %v1499 = vadd.f32 %v1243, %v1312
    %v1500 = vadd.f32 %v1244, %v1312
    %v1501 = vadd.f32 %v1245, %v1312
    %v1502 = vadd.f32 %v1246, %v1312
    %v1503 = vadd.f32 %v1247, %v1312
    %v1504 = vadd.f32 %v1248, %v1312
    %v1505 = vadd.f32 %v1249, %v1312
    %v1506 = vmax.f32 %v1314, 0.0
    %v1507 = vmax.f32 %v1315, 0.0
    %v1508 = vmax.f32 %v1316, 0.0
    %v1509 = vmax.f32 %v1317, 0.0
    %v1510 = vmax.f32 %v1318, 0.0
    %v1511 = vmax.f32 %v1319, 0.0
    %v1512 = vmax.f32 %v1320, 0.0
    %v1513 = vmax.f32 %v1321, 0.0
    %v1514 = vmax.f32 %v1322, 0.0
    %v1515 = vmax.f32 %v1323, 0.0
    %v1516 = vmax.f32 %v1324, 0.0
    %v1517 = vmax.f32 %v1325, 0.0
    %v1518 = vmax.f32 %v1326, 0.0
    %v1519 = vmax.f32 %v1327, 0.0
    %v1520 = vmax.f32 %v1328, 0.0
    %v1521 = vmax.f32 %v1329, 0.0
    %v1522 = vmax.f32 %v1330, 0.0
    %v1523 = vmax.f32 %v1331, 0.0
    %v1524 = vmax.f32 %v1332, 0.0
    %v1525 = vmax.f32 %v1333, 0.0
    %v1526 = vmax.f32 %v1334, 0.0
    %v1527 = vmax.f32 %v1335, 0.0
    %v1528 = vmax.f32 %v1336, 0.0
    %v1529 = vmax.f32 %v1337, 0.0
    %v1530 = vmax.f32 %v1338, 0.0
    %v1531 = vmax.f32 %v1339, 0.0
    %v1532 = vmax.f32 %v1340, 0.0
    %v1533 = vmax.f32 %v1341, 0.0
    %v1534 = vmax.f32 %v1342, 0.0
    %v1535 = vmax.f32 %v1343, 0.0
    %v1536 = vmax.f32 %v1344, 0.0
    %v1537 = vmax.f32 %v1345, 0.0
    %v1538 = vmax.f32 %v1346, 0.0
    %v1539 = vmax.f32 %v1347, 0.0
    %v1540 = vmax.f32 %v1348, 0.0
    %v1541 = vmax.f32 %v1349, 0.0
    %v1542 = vmax.f32 %v1350, 0.0
    %v1543 = vmax.f32 %v1351, 0.0
    %v1544 = vmax.f32 %v1352, 0.0
    %v1545 = vmax.f32 %v1353, 0.0
    %v1546 = vmax.f32 %v1354, 0.0
    %v1547 = vmax.f32 %v1355, 0.0
    %v1548 = vmax.f32 %v1356, 0.0
    %v1549 = vmax.f32 %v1357, 0.0
    %v1550 = vmax.f32 %v1358, 0.0
    %v1551 = vmax.f32 %v1359, 0.0
    %v1552 = vmax.f32 %v1360, 0.0
    %v1553 = vmax.f32 %v1361, 0.0
    %v1554 = vmax.f32 %v1362, 0.0
    %v1555 = vmax.f32 %v1363, 0.0
    %v1556 = vmax.f32 %v1364, 0.0
    %v1557 = vmax.f32 %v1365, 0.0
    %v1558 = vmax.f32 %v1366, 0.0
    %v1559 = vmax.f32 %v1367, 0.0
    %v1560 = vmax.f32 %v1368, 0.0
    %v1561 = vmax.f32 %v1369, 0.0
    %v1562 = vmax.f32 %v1370, 0.0
    %v1563 = vmax.f32 %v1371, 0.0
    %v1564 = vmax.f32 %v1372, 0.0
    %v1565 = vmax.f32 %v1373, 0.0
    %v1566 = vmax.f32 %v1374, 0.0
    %v1567 = vmax.f32 %v1375, 0.0
    %v1568 = vmax.f32 %v1376, 0.0
    %v1569 = vmax.f32 %v1377, 0.0
    %v1570 = vmax.f32 %v1378, 0.0
    %v1571 = vmax.f32 %v1379, 0.0
    %v1572 = vmax.f32 %v1380, 0.0
    %v1573 = vmax.f32 %v1381, 0.0
    %v1574 = vmax.f32 %v1382, 0.0
    %v1575 = vmax.f32 %v1383, 0.0
    %v1576 = vmax.f32 %v1384, 0.0
    %v1577 = vmax.f32 %v1385, 0.0
    %v1578 = vmax.f32 %v1386, 0.0
    %v1579 = vmax.f32 %v1387, 0.0
    %v1580 = vmax.f32 %v1388, 0.0
    %v1581 = vmax.f32 %v1389, 0.0
    %v1582 = vmax.f32 %v1390, 0.0
    %v1583 = vmax.f32 %v1391, 0.0
    %v1584 = vmax.f32 %v1392, 0.0
    %v1585 = vmax.f32 %v1393, 0.0
    %v1586 = vmax.f32 %v1394, 0.0
    %v1587 = vmax.f32 %v1395, 0.0
    %v1588 = vmax.f32 %v1396, 0.0
    %v1589 = vmax.f32 %v1397, 0.0
    %v1590 = vmax.f32 %v1398, 0.0
    %v1591 = vmax.f32 %v1399, 0.0
    %v1592 = vmax.f32 %v1400, 0.0
    %v1593 = vmax.f32 %v1401, 0.0
    %v1594 = vmax.f32 %v1402, 0.0
    %v1595 = vmax.f32 %v1403, 0.0
    %v1596 = vmax.f32 %v1404, 0.0
    %v1597 = vmax.f32 %v1405, 0.0
    %v1598 = vmax.f32 %v1406, 0.0
    %v1599 = vmax.f32 %v1407, 0.0
    %v1600 = vmax.f32 %v1408, 0.0
    %v1601 = vmax.f32 %v1409, 0.0
    %v1602 = vmax.f32 %v1410, 0.0
    %v1603 = vmax.f32 %v1411, 0.0
    %v1604 = vmax.f32 %v1412, 0.0
    %v1605 = vmax.f32 %v1413, 0.0
    %v1606 = vmax.f32 %v1414, 0.0
    %v1607 = vmax.f32 %v1415, 0.0
    %v1608 = vmax.f32 %v1416, 0.0
    %v1609 = vmax.f32 %v1417, 0.0
    %v1610 = vmax.f32 %v1418, 0.0
    %v1611 = vmax.f32 %v1419, 0.0
    %v1612 = vmax.f32 %v1420, 0.0
    %v1613 = vmax.f32 %v1421, 0.0
    %v1614 = vmax.f32 %v1422, 0.0
    %v1615 = vmax.f32 %v1423, 0.0
    %v1616 = vmax.f32 %v1424, 0.0
    %v1617 = vmax.f32 %v1425, 0.0
    %v1618 = vmax.f32 %v1426, 0.0
    %v1619 = vmax.f32 %v1427, 0.0
    %v1620 = vmax.f32 %v1428, 0.0
    %v1621 = vmax.f32 %v1429, 0.0
    %v1622 = vmax.f32 %v1430, 0.0
    %v1623 = vmax.f32 %v1431, 0.0
    %v1624 = vmax.f32 %v1432, 0.0
    %v1625 = vmax.f32 %v1433, 0.0
    %v1626 = vmax.f32 %v1434, 0.0
    %v1627 = vmax.f32 %v1435, 0.0
    %v1628 = vmax.f32 %v1436, 0.0
    %v1629 = vmax.f32 %v1437, 0.0
    %v1630 = vmax.f32 %v1438, 0.0
    %v1631 = vmax.f32 %v1439, 0.0
    %v1632 = vmax.f32 %v1440, 0.0
    %v1633 = vmax.f32 %v1441, 0.0
    %v1634 = vmax.f32 %v1442, 0.0
    %v1635 = vmax.f32 %v1443, 0.0
    %v1636 = vmax.f32 %v1444, 0.0
    %v1637 = vmax.f32 %v1445, 0.0
    %v1638 = vmax.f32 %v1446, 0.0
    %v1639 = vmax.f32 %v1447, 0.0
    %v1640 = vmax.f32 %v1448, 0.0
    %v1641 = vmax.f32 %v1449, 0.0
    %v1642 = vmax.f32 %v1450, 0.0
    %v1643 = vmax.f32 %v1451, 0.0
    %v1644 = vmax.f32 %v1452, 0.0
    %v1645 = vmax.f32 %v1453, 0.0
    %v1646 = vmax.f32 %v1454, 0.0
    %v1647 = vmax.f32 %v1455, 0.0
    %v1648 = vmax.f32 %v1456, 0.0
    %v1649 = vmax.f32 %v1457, 0.0
    %v1650 = vmax.f32 %v1458, 0.0
    %v1651 = vmax.f32 %v1459, 0.0
    %v1652 = vmax.f32 %v1460, 0.0
    %v1653 = vmax.f32 %v1461, 0.0
    %v1654 = vmax.f32 %v1462, 0.0
    %v1655 = vmax.f32 %v1463, 0.0
    %v1656 = vmax.f32 %v1464, 0.0
    %v1657 = vmax.f32 %v1465, 0.0
    %v1658 = vmax.f32 %v1466, 0.0
    %v1659 = vmax.f32 %v1467, 0.0
    %v1660 = vmax.f32 %v1468, 0.0
    %v1661 = vmax.f32 %v1469, 0.0
    %v1662 = vmax.f32 %v1470, 0.0
    %v1663 = vmax.f32 %v1471, 0.0
    %v1664 = vmax.f32 %v1472, 0.0
    %v1665 = vmax.f32 %v1473, 0.0
    %v1666 = vmax.f32 %v1474, 0.0
    %v1667 = vmax.f32 %v1475, 0.0
    %v1668 = vmax.f32 %v1476, 0.0
    %v1669 = vmax.f32 %v1477, 0.0
    %v1670 = vmax.f32 %v1478, 0.0
    %v1671 = vmax.f32 %v1479, 0.0
    %v1672 = vmax.f32 %v1480, 0.0
    %v1673 = vmax.f32 %v1481, 0.0
    %v1674 = vmax.f32 %v1482, 0.0
    %v1675 = vmax.f32 %v1483, 0.0
    %v1676 = vmax.f32 %v1484, 0.0
    %v1677 = vmax.f32 %v1485, 0.0
    %v1678 = vmax.f32 %v1486, 0.0
    %v1679 = vmax.f32 %v1487, 0.0
    %v1680 = vmax.f32 %v1488, 0.0
    %v1681 = vmax.f32 %v1489, 0.0
    %v1682 = vmax.f32 %v1490, 0.0
    %v1683 = vmax.f32 %v1491, 0.0
    %v1684 = vmax.f32 %v1492, 0.0
    %v1685 = vmax.f32 %v1493, 0.0
    %v1686 = vmax.f32 %v1494, 0.0
    %v1687 = vmax.f32 %v1495, 0.0
    %v1688 = vmax.f32 %v1496, 0.0
    %v1689 = vmax.f32 %v1497, 0.0
    %v1690 = vmax.f32 %v1498, 0.0
    %v1691 = vmax.f32 %v1499, 0.0
    %v1692 = vmax.f32 %v1500, 0.0
    %v1693 = vmax.f32 %v1501, 0.0
    %v1694 = vmax.f32 %v1502, 0.0
    %v1695 = vmax.f32 %v1503, 0.0
    %v1696 = vmax.f32 %v1504, 0.0
    %v1697 = vmax.f32 %v1505, 0.0
    %v1698 = vpack.c.bf16 %v1518, %v1506
    %v1699 = vpack.c.bf16 %v1519, %v1507
    %v1700 = vpack.c.bf16 %v1520, %v1508
    %v1701 = vpack.c.bf16 %v1521, %v1509
    %v1702 = vpack.c.bf16 %v1522, %v1510
    %v1703 = vpack.c.bf16 %v1523, %v1511
    %v1704 = vpack.c.bf16 %v1524, %v1512
    %v1705 = vpack.c.bf16 %v1525, %v1513
    %v1706 = vpack.c.bf16 %v1526, %v1514
    %v1707 = vpack.c.bf16 %v1527, %v1515
    %v1708 = vpack.c.bf16 %v1528, %v1516
    %v1709 = vpack.c.bf16 %v1529, %v1517
    %v1710 = vpack.c.bf16 %v1542, %v1530
    %v1711 = vpack.c.bf16 %v1543, %v1531
    %v1712 = vpack.c.bf16 %v1544, %v1532
    %v1713 = vpack.c.bf16 %v1545, %v1533
    %v1714 = vpack.c.bf16 %v1546, %v1534
    %v1715 = vpack.c.bf16 %v1547, %v1535
    %v1716 = vpack.c.bf16 %v1548, %v1536
    %v1717 = vpack.c.bf16 %v1549, %v1537
    %v1718 = vpack.c.bf16 %v1550, %v1538
    %v1719 = vpack.c.bf16 %v1551, %v1539
    %v1720 = vpack.c.bf16 %v1552, %v1540
    %v1721 = vpack.c.bf16 %v1553, %v1541
    %v1722 = vpack.c.bf16 %v1566, %v1554
    %v1723 = vpack.c.bf16 %v1567, %v1555
    %v1724 = vpack.c.bf16 %v1568, %v1556
    %v1725 = vpack.c.bf16 %v1569, %v1557
    %v1726 = vpack.c.bf16 %v1570, %v1558
    %v1727 = vpack.c.bf16 %v1571, %v1559
    %v1728 = vpack.c.bf16 %v1572, %v1560
    %v1729 = vpack.c.bf16 %v1573, %v1561
    %v1730 = vpack.c.bf16 %v1574, %v1562
    %v1731 = vpack.c.bf16 %v1575, %v1563
    %v1732 = vpack.c.bf16 %v1576, %v1564
    %v1733 = vpack.c.bf16 %v1577, %v1565
    %v1734 = vpack.c.bf16 %v1590, %v1578
    %v1735 = vpack.c.bf16 %v1591, %v1579
    %v1736 = vpack.c.bf16 %v1592, %v1580
    %v1737 = vpack.c.bf16 %v1593, %v1581
    %v1738 = vpack.c.bf16 %v1594, %v1582
    %v1739 = vpack.c.bf16 %v1595, %v1583
    %v1740 = vpack.c.bf16 %v1596, %v1584
    %v1741 = vpack.c.bf16 %v1597, %v1585
    %v1742 = vpack.c.bf16 %v1598, %v1586
    %v1743 = vpack.c.bf16 %v1599, %v1587
    %v1744 = vpack.c.bf16 %v1600, %v1588
    %v1745 = vpack.c.bf16 %v1601, %v1589
    %v1746 = vpack.c.bf16 %v1614, %v1602
    %v1747 = vpack.c.bf16 %v1615, %v1603
    %v1748 = vpack.c.bf16 %v1616, %v1604
    %v1749 = vpack.c.bf16 %v1617, %v1605
    %v1750 = vpack.c.bf16 %v1618, %v1606
    %v1751 = vpack.c.bf16 %v1619, %v1607
    %v1752 = vpack.c.bf16 %v1620, %v1608
    %v1753 = vpack.c.bf16 %v1621, %v1609
    %v1754 = vpack.c.bf16 %v1622, %v1610
    %v1755 = vpack.c.bf16 %v1623, %v1611
    %v1756 = vpack.c.bf16 %v1624, %v1612
    %v1757 = vpack.c.bf16 %v1625, %v1613
    %v1758 = vpack.c.bf16 %v1638, %v1626
    %v1759 = vpack.c.bf16 %v1639, %v1627
    %v1760 = vpack.c.bf16 %v1640, %v1628
    %v1761 = vpack.c.bf16 %v1641, %v1629
    %v1762 = vpack.c.bf16 %v1642, %v1630
    %v1763 = vpack.c.bf16 %v1643, %v1631
    %v1764 = vpack.c.bf16 %v1644, %v1632
    %v1765 = vpack.c.bf16 %v1645, %v1633
    %v1766 = vpack.c.bf16 %v1646, %v1634
    %v1767 = vpack.c.bf16 %v1647, %v1635
    %v1768 = vpack.c.bf16 %v1648, %v1636
    %v1769 = vpack.c.bf16 %v1649, %v1637
    %v1770 = vpack.c.bf16 %v1662, %v1650
    %v1771 = vpack.c.bf16 %v1663, %v1651
    %v1772 = vpack.c.bf16 %v1664, %v1652
    %v1773 = vpack.c.bf16 %v1665, %v1653
    %v1774 = vpack.c.bf16 %v1666, %v1654
    %v1775 = vpack.c.bf16 %v1667, %v1655
    %v1776 = vpack.c.bf16 %v1668, %v1656
    %v1777 = vpack.c.bf16 %v1669, %v1657
    %v1778 = vpack.c.bf16 %v1670, %v1658
    %v1779 = vpack.c.bf16 %v1671, %v1659
    %v1780 = vpack.c.bf16 %v1672, %v1660
    %v1781 = vpack.c.bf16 %v1673, %v1661
    %v1782 = vpack.c.bf16 %v1686, %v1674
    %v1783 = vpack.c.bf16 %v1687, %v1675
    %v1784 = vpack.c.bf16 %v1688, %v1676
    %v1785 = vpack.c.bf16 %v1689, %v1677
    %v1786 = vpack.c.bf16 %v1690, %v1678
    %v1787 = vpack.c.bf16 %v1691, %v1679
    %v1788 = vpack.c.bf16 %v1692, %v1680
    %v1789 = vpack.c.bf16 %v1693, %v1681
    %v1790 = vpack.c.bf16 %v1694, %v1682
    %v1791 = vpack.c.bf16 %v1695, %v1683
    %v1792 = vpack.c.bf16 %v1696, %v1684
    %v1793 = vpack.c.bf16 %v1697, %v1685
    %v1794 = vld [vmem:[%s2] sm:$0xf]
    %v1795 = vld [vmem:[%s2 + $0x4] sm:$0xf]
    %v1796 = vld [vmem:[%s2 + $0x8] sm:$0xf]
    %v1797 = vld [vmem:[%s2 + $0xc] sm:$0xf]
    %v1798 = vld [vmem:[%s2 + $0x10] sm:$0xf]
    %v1799 = vld [vmem:[%s2 + $0x14] sm:$0xf]
    %v1800 = vld [vmem:[%s2 + $0x18] sm:$0xf]
    %v1801 = vld [vmem:[%s2 + $0x1c] sm:$0xf]
    %v1802 = vld [vmem:[%s2 + $0x20] sm:$0xf]
    %v1803 = vld [vmem:[%s2 + $0x24] sm:$0xf]
    %v1804 = vld [vmem:[%s2 + $0x28] sm:$0xf]
    %v1805 = vld [vmem:[%s2 + $0x2c] sm:$0xf]
    %v1806 = vld [vmem:[%s2 + $0x30] sm:$0xf]
    %v1807 = vld [vmem:[%s2 + $0x34] sm:$0xf]
    %v1808 = vld [vmem:[%s2 + $0x38] sm:$0xf]
    %v1809 = vld [vmem:[%s2 + $0x3c] sm:$0xf]
    %v1810 = vld [vmem:[%s2 + $0x40] sm:$0xf]
    %v1811 = vld [vmem:[%s2 + $0x44] sm:$0xf]
    %v1812 = vld [vmem:[%s2 + $0x48] sm:$0xf]
    %v1813 = vld [vmem:[%s2 + $0x4c] sm:$0xf]
    %v1814 = vld [vmem:[%s2 + $0x50] sm:$0xf]
    %v1815 = vld [vmem:[%s2 + $0x54] sm:$0xf]
    %v1816 = vld [vmem:[%s2 + $0x58] sm:$0xf]
    %v1817 = vld [vmem:[%s2 + $0x5c] sm:$0xf]
    %v1818 = vld [vmem:[%s2 + $0x60] sm:$0xf]
    %v1819 = vld [vmem:[%s2 + $0x64] sm:$0xf]
    %v1820 = vld [vmem:[%s2 + $0x68] sm:$0xf]
    %v1821 = vld [vmem:[%s2 + $0x6c] sm:$0xf]
    %v1822 = vld [vmem:[%s2 + $0x70] sm:$0xf]
    %v1823 = vld [vmem:[%s2 + $0x74] sm:$0xf]
    %v1824 = vld [vmem:[%s2 + $0x78] sm:$0xf]
    %v1825 = vld [vmem:[%s2 + $0x7c] sm:$0xf]
    %v1826 = vld [vmem:[%s3] sm:$0xff]
    %v1827 = vld [vmem:[%s3 + $0x8] sm:$0xff]
    %v1828 = vld [vmem:[%s3 + $0x10] sm:$0xff]
    %v1829 = vld [vmem:[%s3 + $0x18] sm:$0xff]
    %v1830 = vld [vmem:[%s3 + $0x20] sm:$0xff]
    %v1831 = vld [vmem:[%s3 + $0x28] sm:$0xff]
    %v1832 = vld [vmem:[%s3 + $0x30] sm:$0xff]
    %v1833 = vld [vmem:[%s3 + $0x38] sm:$0xff]
    %v1834 = vld [vmem:[%s3 + $0x40] sm:$0xff]
    %v1835 = vld [vmem:[%s3 + $0x48] sm:$0xff]
    %v1836 = vld [vmem:[%s3 + $0x50] sm:$0xff]
    %v1837 = vld [vmem:[%s3 + $0x58] sm:$0xff]
    %v1838 = vld [vmem:[%s3 + $0x60] sm:$0xff]
    %v1839 = vld [vmem:[%s3 + $0x68] sm:$0xff]
    %v1840 = vld [vmem:[%s3 + $0x70] sm:$0xff]
    %v1841 = vld [vmem:[%s3 + $0x78] sm:$0xff]
    %v1842 = vld [vmem:[%s3 + $0x80] sm:$0xff]
    %v1843 = vld [vmem:[%s3 + $0x88] sm:$0xff]
    %v1844 = vld [vmem:[%s3 + $0x90] sm:$0xff]
    %v1845 = vld [vmem:[%s3 + $0x98] sm:$0xff]
    %v1846 = vld [vmem:[%s3 + $0xa0] sm:$0xff]
    %v1847 = vld [vmem:[%s3 + $0xa8] sm:$0xff]
    %v1848 = vld [vmem:[%s3 + $0xb0] sm:$0xff]
    %v1849 = vld [vmem:[%s3 + $0xb8] sm:$0xff]
    %v1850 = vld [vmem:[%s3 + $0xc0] sm:$0xff]
    %v1851 = vld [vmem:[%s3 + $0xc8] sm:$0xff]
    %v1852 = vld [vmem:[%s3 + $0xd0] sm:$0xff]
    %v1853 = vld [vmem:[%s3 + $0xd8] sm:$0xff]
    %v1854 = vld [vmem:[%s3 + $0xe0] sm:$0xff]
    %v1855 = vld [vmem:[%s3 + $0xe8] sm:$0xff]
    %v1856 = vld [vmem:[%s3 + $0xf0] sm:$0xff]
    %v1857 = vld [vmem:[%s3 + $0xf8] sm:$0xff]
    %1859 = vset.pattern.permute.xlu0 0
    %1860 = vperm.xlu0 %1859, %v1826
    %v1861 = vpop.permute.xlu0 %1860
    %1864 = vset.pattern.permute.xlu0 0
    %1865 = vperm.xlu0 %1864, %v1827
    %v1866 = vpop.permute.xlu0 %1865
    %1869 = vset.pattern.permute.xlu0 0
    %1870 = vperm.xlu0 %1869, %v1828
    %v1871 = vpop.permute.xlu0 %1870
    %1874 = vset.pattern.permute.xlu0 0
    %1875 = vperm.xlu0 %1874, %v1829
    %v1876 = vpop.permute.xlu0 %1875
    %1879 = vset.pattern.permute.xlu0 0
    %1880 = vperm.xlu0 %1879, %v1830
    %v1881 = vpop.permute.xlu0 %1880
    %1884 = vset.pattern.permute.xlu0 0
    %1885 = vperm.xlu0 %1884, %v1831
    %v1886 = vpop.permute.xlu0 %1885
    %1889 = vset.pattern.permute.xlu0 0
    %1890 = vperm.xlu0 %1889, %v1832
    %v1891 = vpop.permute.xlu0 %1890
    %1894 = vset.pattern.permute.xlu0 0
    %1895 = vperm.xlu0 %1894, %v1833
    %v1896 = vpop.permute.xlu0 %1895
    %1899 = vset.pattern.permute.xlu0 0
    %1900 = vperm.xlu0 %1899, %v1834
    %v1901 = vpop.permute.xlu0 %1900
    %1904 = vset.pattern.permute.xlu0 0
    %1905 = vperm.xlu0 %1904, %v1835
    %v1906 = vpop.permute.xlu0 %1905
    %1909 = vset.pattern.permute.xlu0 0
    %1910 = vperm.xlu0 %1909, %v1836
    %v1911 = vpop.permute.xlu0 %1910
    %1914 = vset.pattern.permute.xlu0 0
    %1915 = vperm.xlu0 %1914, %v1837
    %v1916 = vpop.permute.xlu0 %1915
    %1919 = vset.pattern.permute.xlu0 0
    %1920 = vperm.xlu0 %1919, %v1838
    %v1921 = vpop.permute.xlu0 %1920
    %1924 = vset.pattern.permute.xlu0 0
    %1925 = vperm.xlu0 %1924, %v1839
    %v1926 = vpop.permute.xlu0 %1925
    %1929 = vset.pattern.permute.xlu0 0
    %1930 = vperm.xlu0 %1929, %v1840
    %v1931 = vpop.permute.xlu0 %1930
    %1934 = vset.pattern.permute.xlu0 0
    %1935 = vperm.xlu0 %1934, %v1841
    %v1936 = vpop.permute.xlu0 %1935
    %1939 = vset.pattern.permute.xlu0 0
    %1940 = vperm.xlu0 %1939, %v1842
    %v1941 = vpop.permute.xlu0 %1940
    %1944 = vset.pattern.permute.xlu0 0
    %1945 = vperm.xlu0 %1944, %v1843
    %v1946 = vpop.permute.xlu0 %1945
    %1949 = vset.pattern.permute.xlu0 0
    %1950 = vperm.xlu0 %1949, %v1844
    %v1951 = vpop.permute.xlu0 %1950
    %1954 = vset.pattern.permute.xlu0 0
    %1955 = vperm.xlu0 %1954, %v1845
    %v1956 = vpop.permute.xlu0 %1955
    %1959 = vset.pattern.permute.xlu0 0
    %1960 = vperm.xlu0 %1959, %v1846
    %v1961 = vpop.permute.xlu0 %1960
    %1964 = vset.pattern.permute.xlu0 0
    %1965 = vperm.xlu0 %1964, %v1847
    %v1966 = vpop.permute.xlu0 %1965
    %1969 = vset.pattern.permute.xlu0 0
    %1970 = vperm.xlu0 %1969, %v1848
    %v1971 = vpop.permute.xlu0 %1970
    %1974 = vset.pattern.permute.xlu0 0
    %1975 = vperm.xlu0 %1974, %v1849
    %v1976 = vpop.permute.xlu0 %1975
    %1979 = vset.pattern.permute.xlu0 0
    %1980 = vperm.xlu0 %1979, %v1850
    %v1981 = vpop.permute.xlu0 %1980
    %1984 = vset.pattern.permute.xlu0 0
    %1985 = vperm.xlu0 %1984, %v1851
    %v1986 = vpop.permute.xlu0 %1985
    %1989 = vset.pattern.permute.xlu0 0
    %1990 = vperm.xlu0 %1989, %v1852
    %v1991 = vpop.permute.xlu0 %1990
    %1994 = vset.pattern.permute.xlu0 0
    %1995 = vperm.xlu0 %1994, %v1853
    %v1996 = vpop.permute.xlu0 %1995
    %1999 = vset.pattern.permute.xlu0 0
    %2000 = vperm.xlu0 %1999, %v1854
    %v2001 = vpop.permute.xlu0 %2000
    %2004 = vset.pattern.permute.xlu0 0
    %2005 = vperm.xlu0 %2004, %v1855
    %v2006 = vpop.permute.xlu0 %2005
    %2009 = vset.pattern.permute.xlu0 0
    %2010 = vperm.xlu0 %2009, %v1856
    %v2011 = vpop.permute.xlu0 %2010
    %2014 = vset.pattern.permute.xlu0 0
    %2015 = vperm.xlu0 %2014, %v1857
    %v2016 = vpop.permute.xlu0 %2015
    %v2050 = vunpack.c.l.b16 %v1794
    %v2051 = vunpack.c.l.b16 %v1795
    %v2052 = vunpack.c.l.b16 %v1796
    %v2053 = vunpack.c.l.b16 %v1797
    %v2054 = vunpack.c.l.b16 %v1798
    %v2055 = vunpack.c.l.b16 %v1799
    %v2056 = vunpack.c.l.b16 %v1800
    %v2057 = vunpack.c.l.b16 %v1801
    %v2058 = vunpack.c.l.b16 %v1802
    %v2059 = vunpack.c.l.b16 %v1803
    %v2060 = vunpack.c.l.b16 %v1804
    %v2061 = vunpack.c.l.b16 %v1805
    %v2062 = vunpack.c.l.b16 %v1806
    %v2063 = vunpack.c.l.b16 %v1807
    %v2064 = vunpack.c.l.b16 %v1808
    %v2065 = vunpack.c.l.b16 %v1809
    %v2066 = vunpack.c.l.b16 %v1810
    %v2067 = vunpack.c.l.b16 %v1811
    %v2068 = vunpack.c.l.b16 %v1812
    %v2069 = vunpack.c.l.b16 %v1813
    %v2070 = vunpack.c.l.b16 %v1814
    %v2071 = vunpack.c.l.b16 %v1815
    %v2072 = vunpack.c.l.b16 %v1816
    %v2073 = vunpack.c.l.b16 %v1817
    %v2074 = vunpack.c.l.b16 %v1818
    %v2075 = vunpack.c.l.b16 %v1819
    %v2076 = vunpack.c.l.b16 %v1820
    %v2077 = vunpack.c.l.b16 %v1821
    %v2078 = vunpack.c.l.b16 %v1822
    %v2079 = vunpack.c.l.b16 %v1823
    %v2080 = vunpack.c.l.b16 %v1824
    %v2081 = vunpack.c.l.b16 %v1825
    %v2082 = vpack.c.b16 %v2051, %v2050
    %v2083 = vpack.c.b16 %v2053, %v2052
    %v2084 = vpack.c.b16 %v2055, %v2054
    %v2085 = vpack.c.b16 %v2057, %v2056
    %v2086 = vpack.c.b16 %v2059, %v2058
    %v2087 = vpack.c.b16 %v2061, %v2060
    %v2088 = vpack.c.b16 %v2063, %v2062
    %v2089 = vpack.c.b16 %v2065, %v2064
    %v2090 = vpack.c.b16 %v2067, %v2066
    %v2091 = vpack.c.b16 %v2069, %v2068
    %v2092 = vpack.c.b16 %v2071, %v2070
    %v2093 = vpack.c.b16 %v2073, %v2072
    %v2094 = vpack.c.b16 %v2075, %v2074
    %v2095 = vpack.c.b16 %v2077, %v2076
    %v2096 = vpack.c.b16 %v2079, %v2078
    %v2097 = vpack.c.b16 %v2081, %v2080
    %2114 = vmatpush.bf16.msra.mxu0 %v1782
    %2115 = vmatpush.bf16.msra.mxu0 %v1770
    %2116 = vmatpush.bf16.msra.mxu0 %v1758
    %2117 = vmatpush.bf16.msra.mxu0 %v1746
    %2118 = vmatpush.bf16.msra.mxu0 %v1734
    %2119 = vmatpush.bf16.msra.mxu0 %v1722
    %2120 = vmatpush.bf16.msra.mxu0 %v1710
    %2121 = vmatpush.bf16.msra.mxu0 %v1698
    %2122 = vmatmul.bf16.gmra.mxu0 %v2082
    %v2123 = vpop.f32.mrf.mxu0
    %v2124 = vadd.f32 %v1861, %v2123
    %v2125 = vpop.f32.mrf.mxu0
    %v2126 = vadd.f32 %v1866, %v2125
    %2127 = vmatmul.bf16.gmra.mxu0 %v2083
    %v2128 = vpop.f32.mrf.mxu0
    %v2129 = vadd.f32 %v1871, %v2128
    %v2130 = vpop.f32.mrf.mxu0
    %v2131 = vadd.f32 %v1876, %v2130
    %2132 = vmatmul.bf16.gmra.mxu0 %v2084
    %v2133 = vpop.f32.mrf.mxu0
    %v2134 = vadd.f32 %v1881, %v2133
    %v2135 = vpop.f32.mrf.mxu0
    %v2136 = vadd.f32 %v1886, %v2135
    %2137 = vmatmul.bf16.gmra.mxu0 %v2085
    %v2138 = vpop.f32.mrf.mxu0
    %v2139 = vadd.f32 %v1891, %v2138
    %v2140 = vpop.f32.mrf.mxu0
    %v2141 = vadd.f32 %v1896, %v2140
    %2142 = vmatmul.bf16.gmra.mxu0 %v2086
    %v2143 = vpop.f32.mrf.mxu0
    %v2144 = vadd.f32 %v1901, %v2143
    %v2145 = vpop.f32.mrf.mxu0
    %v2146 = vadd.f32 %v1906, %v2145
    %2147 = vmatmul.bf16.gmra.mxu0 %v2087
    %v2148 = vpop.f32.mrf.mxu0
    %v2149 = vadd.f32 %v1911, %v2148
    %v2150 = vpop.f32.mrf.mxu0
    %v2151 = vadd.f32 %v1916, %v2150
    %2152 = vmatmul.bf16.gmra.mxu0 %v2088
    %v2153 = vpop.f32.mrf.mxu0
    %v2154 = vadd.f32 %v1921, %v2153
    %v2155 = vpop.f32.mrf.mxu0
    %v2156 = vadd.f32 %v1926, %v2155
    %2157 = vmatmul.bf16.gmra.mxu0 %v2089
    %v2158 = vpop.f32.mrf.mxu0
    %v2159 = vadd.f32 %v1931, %v2158
    %v2160 = vpop.f32.mrf.mxu0
    %v2161 = vadd.f32 %v1936, %v2160
    %2162 = vmatmul.bf16.gmra.mxu0 %v2090
    %v2163 = vpop.f32.mrf.mxu0
    %v2164 = vadd.f32 %v1941, %v2163
    %v2165 = vpop.f32.mrf.mxu0
    %v2166 = vadd.f32 %v1946, %v2165
    %2167 = vmatmul.bf16.gmra.mxu0 %v2091
    %v2168 = vpop.f32.mrf.mxu0
    %v2169 = vadd.f32 %v1951, %v2168
    %v2170 = vpop.f32.mrf.mxu0
    %v2171 = vadd.f32 %v1956, %v2170
    %2172 = vmatmul.bf16.gmra.mxu0 %v2092
    %v2173 = vpop.f32.mrf.mxu0
    %v2174 = vadd.f32 %v1961, %v2173
    %v2175 = vpop.f32.mrf.mxu0
    %v2176 = vadd.f32 %v1966, %v2175
    %2177 = vmatmul.bf16.gmra.mxu0 %v2093
    %v2178 = vpop.f32.mrf.mxu0
    %v2179 = vadd.f32 %v1971, %v2178
    %v2180 = vpop.f32.mrf.mxu0
    %v2181 = vadd.f32 %v1976, %v2180
    %2182 = vmatmul.bf16.gmra.mxu0 %v2094
    %v2183 = vpop.f32.mrf.mxu0
    %v2184 = vadd.f32 %v1981, %v2183
    %v2185 = vpop.f32.mrf.mxu0
    %v2186 = vadd.f32 %v1986, %v2185
    %2187 = vmatmul.bf16.gmra.mxu0 %v2095
    %v2188 = vpop.f32.mrf.mxu0
    %v2189 = vadd.f32 %v1991, %v2188
    %v2190 = vpop.f32.mrf.mxu0
    %v2191 = vadd.f32 %v1996, %v2190
    %2192 = vmatmul.bf16.gmra.mxu0 %v2096
    %v2193 = vpop.f32.mrf.mxu0
    %v2194 = vadd.f32 %v2001, %v2193
    %v2195 = vpop.f32.mrf.mxu0
    %v2196 = vadd.f32 %v2006, %v2195
    %2197 = vmatmul.bf16.gmra.mxu0 %v2097
    %v2198 = vpop.f32.mrf.mxu0
    %v2199 = vadd.f32 %v2011, %v2198
    %v2200 = vpop.f32.mrf.mxu0
    %v2201 = vadd.f32 %v2016, %v2200
    %2202 = vdwg.mxu0
    %2203 = vmatpush.bf16.msra.mxu0 %v1783
    %2204 = vmatpush.bf16.msra.mxu0 %v1771
    %2205 = vmatpush.bf16.msra.mxu0 %v1759
    %2206 = vmatpush.bf16.msra.mxu0 %v1747
    %2207 = vmatpush.bf16.msra.mxu0 %v1735
    %2208 = vmatpush.bf16.msra.mxu0 %v1723
    %2209 = vmatpush.bf16.msra.mxu0 %v1711
    %2210 = vmatpush.bf16.msra.mxu0 %v1699
    %2211 = vmatmul.bf16.gmra.mxu0 %v2082
    %v2212 = vpop.f32.mrf.mxu0
    %v2213 = vadd.f32 %v1861, %v2212
    %v2214 = vpop.f32.mrf.mxu0
    %v2215 = vadd.f32 %v1866, %v2214
    %2216 = vmatmul.bf16.gmra.mxu0 %v2083
    %v2217 = vpop.f32.mrf.mxu0
    %v2218 = vadd.f32 %v1871, %v2217
    %v2219 = vpop.f32.mrf.mxu0
    %v2220 = vadd.f32 %v1876, %v2219
    %2221 = vmatmul.bf16.gmra.mxu0 %v2084
    %v2222 = vpop.f32.mrf.mxu0
    %v2223 = vadd.f32 %v1881, %v2222
    %v2224 = vpop.f32.mrf.mxu0
    %v2225 = vadd.f32 %v1886, %v2224
    %2226 = vmatmul.bf16.gmra.mxu0 %v2085
    %v2227 = vpop.f32.mrf.mxu0
    %v2228 = vadd.f32 %v1891, %v2227
    %v2229 = vpop.f32.mrf.mxu0
    %v2230 = vadd.f32 %v1896, %v2229
    %2231 = vmatmul.bf16.gmra.mxu0 %v2086
    %v2232 = vpop.f32.mrf.mxu0
    %v2233 = vadd.f32 %v1901, %v2232
    %v2234 = vpop.f32.mrf.mxu0
    %v2235 = vadd.f32 %v1906, %v2234
    %2236 = vmatmul.bf16.gmra.mxu0 %v2087
    %v2237 = vpop.f32.mrf.mxu0
    %v2238 = vadd.f32 %v1911, %v2237
    %v2239 = vpop.f32.mrf.mxu0
    %v2240 = vadd.f32 %v1916, %v2239
    %2241 = vmatmul.bf16.gmra.mxu0 %v2088
    %v2242 = vpop.f32.mrf.mxu0
    %v2243 = vadd.f32 %v1921, %v2242
    %v2244 = vpop.f32.mrf.mxu0
    %v2245 = vadd.f32 %v1926, %v2244
    %2246 = vmatmul.bf16.gmra.mxu0 %v2089
    %v2247 = vpop.f32.mrf.mxu0
    %v2248 = vadd.f32 %v1931, %v2247
    %v2249 = vpop.f32.mrf.mxu0
    %v2250 = vadd.f32 %v1936, %v2249
    %2251 = vmatmul.bf16.gmra.mxu0 %v2090
    %v2252 = vpop.f32.mrf.mxu0
    %v2253 = vadd.f32 %v1941, %v2252
    %v2254 = vpop.f32.mrf.mxu0
    %v2255 = vadd.f32 %v1946, %v2254
    %2256 = vmatmul.bf16.gmra.mxu0 %v2091
    %v2257 = vpop.f32.mrf.mxu0
    %v2258 = vadd.f32 %v1951, %v2257
    %v2259 = vpop.f32.mrf.mxu0
    %v2260 = vadd.f32 %v1956, %v2259
    %2261 = vmatmul.bf16.gmra.mxu0 %v2092
    %v2262 = vpop.f32.mrf.mxu0
    %v2263 = vadd.f32 %v1961, %v2262
    %v2264 = vpop.f32.mrf.mxu0
    %v2265 = vadd.f32 %v1966, %v2264
    %2266 = vmatmul.bf16.gmra.mxu0 %v2093
    %v2267 = vpop.f32.mrf.mxu0
    %v2268 = vadd.f32 %v1971, %v2267
    %v2269 = vpop.f32.mrf.mxu0
    %v2270 = vadd.f32 %v1976, %v2269
    %2271 = vmatmul.bf16.gmra.mxu0 %v2094
    %v2272 = vpop.f32.mrf.mxu0
    %v2273 = vadd.f32 %v1981, %v2272
    %v2274 = vpop.f32.mrf.mxu0
    %v2275 = vadd.f32 %v1986, %v2274
    %2276 = vmatmul.bf16.gmra.mxu0 %v2095
    %v2277 = vpop.f32.mrf.mxu0
    %v2278 = vadd.f32 %v1991, %v2277
    %v2279 = vpop.f32.mrf.mxu0
    %v2280 = vadd.f32 %v1996, %v2279
    %2281 = vmatmul.bf16.gmra.mxu0 %v2096
    %v2282 = vpop.f32.mrf.mxu0
    %v2283 = vadd.f32 %v2001, %v2282
    %v2284 = vpop.f32.mrf.mxu0
    %v2285 = vadd.f32 %v2006, %v2284
    %2286 = vmatmul.bf16.gmra.mxu0 %v2097
    %v2287 = vpop.f32.mrf.mxu0
    %v2288 = vadd.f32 %v2011, %v2287
    %v2289 = vpop.f32.mrf.mxu0
    %v2290 = vadd.f32 %v2016, %v2289
    %2291 = vdwg.mxu0
    %2292 = vmatpush.bf16.msra.mxu0 %v1784
    %2293 = vmatpush.bf16.msra.mxu0 %v1772
    %2294 = vmatpush.bf16.msra.mxu0 %v1760
    %2295 = vmatpush.bf16.msra.mxu0 %v1748
    %2296 = vmatpush.bf16.msra.mxu0 %v1736
    %2297 = vmatpush.bf16.msra.mxu0 %v1724
    %2298 = vmatpush.bf16.msra.mxu0 %v1712
    %2299 = vmatpush.bf16.msra.mxu0 %v1700
    %2300 = vmatmul.bf16.gmra.mxu0 %v2082
    %v2301 = vpop.f32.mrf.mxu0
    %v2302 = vadd.f32 %v1861, %v2301
    %v2303 = vpop.f32.mrf.mxu0
    %v2304 = vadd.f32 %v1866, %v2303
    %2305 = vmatmul.bf16.gmra.mxu0 %v2083
    %v2306 = vpop.f32.mrf.mxu0
    %v2307 = vadd.f32 %v1871, %v2306
    %v2308 = vpop.f32.mrf.mxu0
    %v2309 = vadd.f32 %v1876, %v2308
    %2310 = vmatmul.bf16.gmra.mxu0 %v2084
    %v2311 = vpop.f32.mrf.mxu0
    %v2312 = vadd.f32 %v1881, %v2311
    %v2313 = vpop.f32.mrf.mxu0
    %v2314 = vadd.f32 %v1886, %v2313
    %2315 = vmatmul.bf16.gmra.mxu0 %v2085
    %v2316 = vpop.f32.mrf.mxu0
    %v2317 = vadd.f32 %v1891, %v2316
    %v2318 = vpop.f32.mrf.mxu0
    %v2319 = vadd.f32 %v1896, %v2318
    %2320 = vmatmul.bf16.gmra.mxu0 %v2086
    %v2321 = vpop.f32.mrf.mxu0
    %v2322 = vadd.f32 %v1901, %v2321
    %v2323 = vpop.f32.mrf.mxu0
    %v2324 = vadd.f32 %v1906, %v2323
    %2325 = vmatmul.bf16.gmra.mxu0 %v2087
    %v2326 = vpop.f32.mrf.mxu0
    %v2327 = vadd.f32 %v1911, %v2326
    %v2328 = vpop.f32.mrf.mxu0
    %v2329 = vadd.f32 %v1916, %v2328
    %2330 = vmatmul.bf16.gmra.mxu0 %v2088
    %v2331 = vpop.f32.mrf.mxu0
    %v2332 = vadd.f32 %v1921, %v2331
    %v2333 = vpop.f32.mrf.mxu0
    %v2334 = vadd.f32 %v1926, %v2333
    %2335 = vmatmul.bf16.gmra.mxu0 %v2089
    %v2336 = vpop.f32.mrf.mxu0
    %v2337 = vadd.f32 %v1931, %v2336
    %v2338 = vpop.f32.mrf.mxu0
    %v2339 = vadd.f32 %v1936, %v2338
    %2340 = vmatmul.bf16.gmra.mxu0 %v2090
    %v2341 = vpop.f32.mrf.mxu0
    %v2342 = vadd.f32 %v1941, %v2341
    %v2343 = vpop.f32.mrf.mxu0
    %v2344 = vadd.f32 %v1946, %v2343
    %2345 = vmatmul.bf16.gmra.mxu0 %v2091
    %v2346 = vpop.f32.mrf.mxu0
    %v2347 = vadd.f32 %v1951, %v2346
    %v2348 = vpop.f32.mrf.mxu0
    %v2349 = vadd.f32 %v1956, %v2348
    %2350 = vmatmul.bf16.gmra.mxu0 %v2092
    %v2351 = vpop.f32.mrf.mxu0
    %v2352 = vadd.f32 %v1961, %v2351
    %v2353 = vpop.f32.mrf.mxu0
    %v2354 = vadd.f32 %v1966, %v2353
    %2355 = vmatmul.bf16.gmra.mxu0 %v2093
    %v2356 = vpop.f32.mrf.mxu0
    %v2357 = vadd.f32 %v1971, %v2356
    %v2358 = vpop.f32.mrf.mxu0
    %v2359 = vadd.f32 %v1976, %v2358
    %2360 = vmatmul.bf16.gmra.mxu0 %v2094
    %v2361 = vpop.f32.mrf.mxu0
    %v2362 = vadd.f32 %v1981, %v2361
    %v2363 = vpop.f32.mrf.mxu0
    %v2364 = vadd.f32 %v1986, %v2363
    %2365 = vmatmul.bf16.gmra.mxu0 %v2095
    %v2366 = vpop.f32.mrf.mxu0
    %v2367 = vadd.f32 %v1991, %v2366
    %v2368 = vpop.f32.mrf.mxu0
    %v2369 = vadd.f32 %v1996, %v2368
    %2370 = vmatmul.bf16.gmra.mxu0 %v2096
    %v2371 = vpop.f32.mrf.mxu0
    %v2372 = vadd.f32 %v2001, %v2371
    %v2373 = vpop.f32.mrf.mxu0
    %v2374 = vadd.f32 %v2006, %v2373
    %2375 = vmatmul.bf16.gmra.mxu0 %v2097
    %v2376 = vpop.f32.mrf.mxu0
    %v2377 = vadd.f32 %v2011, %v2376
    %v2378 = vpop.f32.mrf.mxu0
    %v2379 = vadd.f32 %v2016, %v2378
    %2380 = vdwg.mxu0
    %2381 = vmatpush.bf16.msra.mxu0 %v1785
    %2382 = vmatpush.bf16.msra.mxu0 %v1773
    %2383 = vmatpush.bf16.msra.mxu0 %v1761
    %2384 = vmatpush.bf16.msra.mxu0 %v1749
    %2385 = vmatpush.bf16.msra.mxu0 %v1737
    %2386 = vmatpush.bf16.msra.mxu0 %v1725
    %2387 = vmatpush.bf16.msra.mxu0 %v1713
    %2388 = vmatpush.bf16.msra.mxu0 %v1701
    %2389 = vmatmul.bf16.gmra.mxu0 %v2082
    %v2390 = vpop.f32.mrf.mxu0
    %v2391 = vadd.f32 %v1861, %v2390
    %v2392 = vpop.f32.mrf.mxu0
    %v2393 = vadd.f32 %v1866, %v2392
    %2394 = vmatmul.bf16.gmra.mxu0 %v2083
    %v2395 = vpop.f32.mrf.mxu0
    %v2396 = vadd.f32 %v1871, %v2395
    %v2397 = vpop.f32.mrf.mxu0
    %v2398 = vadd.f32 %v1876, %v2397
    %2399 = vmatmul.bf16.gmra.mxu0 %v2084
    %v2400 = vpop.f32.mrf.mxu0
    %v2401 = vadd.f32 %v1881, %v2400
    %v2402 = vpop.f32.mrf.mxu0
    %v2403 = vadd.f32 %v1886, %v2402
    %2404 = vmatmul.bf16.gmra.mxu0 %v2085
    %v2405 = vpop.f32.mrf.mxu0
    %v2406 = vadd.f32 %v1891, %v2405
    %v2407 = vpop.f32.mrf.mxu0
    %v2408 = vadd.f32 %v1896, %v2407
    %2409 = vmatmul.bf16.gmra.mxu0 %v2086
    %v2410 = vpop.f32.mrf.mxu0
    %v2411 = vadd.f32 %v1901, %v2410
    %v2412 = vpop.f32.mrf.mxu0
    %v2413 = vadd.f32 %v1906, %v2412
    %2414 = vmatmul.bf16.gmra.mxu0 %v2087
    %v2415 = vpop.f32.mrf.mxu0
    %v2416 = vadd.f32 %v1911, %v2415
    %v2417 = vpop.f32.mrf.mxu0
    %v2418 = vadd.f32 %v1916, %v2417
    %2419 = vmatmul.bf16.gmra.mxu0 %v2088
    %v2420 = vpop.f32.mrf.mxu0
    %v2421 = vadd.f32 %v1921, %v2420
    %v2422 = vpop.f32.mrf.mxu0
    %v2423 = vadd.f32 %v1926, %v2422
    %2424 = vmatmul.bf16.gmra.mxu0 %v2089
    %v2425 = vpop.f32.mrf.mxu0
    %v2426 = vadd.f32 %v1931, %v2425
    %v2427 = vpop.f32.mrf.mxu0
    %v2428 = vadd.f32 %v1936, %v2427
    %2429 = vmatmul.bf16.gmra.mxu0 %v2090
    %v2430 = vpop.f32.mrf.mxu0
    %v2431 = vadd.f32 %v1941, %v2430
    %v2432 = vpop.f32.mrf.mxu0
    %v2433 = vadd.f32 %v1946, %v2432
    %2434 = vmatmul.bf16.gmra.mxu0 %v2091
    %v2435 = vpop.f32.mrf.mxu0
    %v2436 = vadd.f32 %v1951, %v2435
    %v2437 = vpop.f32.mrf.mxu0
    %v2438 = vadd.f32 %v1956, %v2437
    %2439 = vmatmul.bf16.gmra.mxu0 %v2092
    %v2440 = vpop.f32.mrf.mxu0
    %v2441 = vadd.f32 %v1961, %v2440
    %v2442 = vpop.f32.mrf.mxu0
    %v2443 = vadd.f32 %v1966, %v2442
    %2444 = vmatmul.bf16.gmra.mxu0 %v2093
    %v2445 = vpop.f32.mrf.mxu0
    %v2446 = vadd.f32 %v1971, %v2445
    %v2447 = vpop.f32.mrf.mxu0
    %v2448 = vadd.f32 %v1976, %v2447
    %2449 = vmatmul.bf16.gmra.mxu0 %v2094
    %v2450 = vpop.f32.mrf.mxu0
    %v2451 = vadd.f32 %v1981, %v2450
    %v2452 = vpop.f32.mrf.mxu0
    %v2453 = vadd.f32 %v1986, %v2452
    %2454 = vmatmul.bf16.gmra.mxu0 %v2095
    %v2455 = vpop.f32.mrf.mxu0
    %v2456 = vadd.f32 %v1991, %v2455
    %v2457 = vpop.f32.mrf.mxu0
    %v2458 = vadd.f32 %v1996, %v2457
    %2459 = vmatmul.bf16.gmra.mxu0 %v2096
    %v2460 = vpop.f32.mrf.mxu0
    %v2461 = vadd.f32 %v2001, %v2460
    %v2462 = vpop.f32.mrf.mxu0
    %v2463 = vadd.f32 %v2006, %v2462
    %2464 = vmatmul.bf16.gmra.mxu0 %v2097
    %v2465 = vpop.f32.mrf.mxu0
    %v2466 = vadd.f32 %v2011, %v2465
    %v2467 = vpop.f32.mrf.mxu0
    %v2468 = vadd.f32 %v2016, %v2467
    %2469 = vdwg.mxu0
    %2470 = vmatpush.bf16.msra.mxu0 %v1786
    %2471 = vmatpush.bf16.msra.mxu0 %v1774
    %2472 = vmatpush.bf16.msra.mxu0 %v1762
    %2473 = vmatpush.bf16.msra.mxu0 %v1750
    %2474 = vmatpush.bf16.msra.mxu0 %v1738
    %2475 = vmatpush.bf16.msra.mxu0 %v1726
    %2476 = vmatpush.bf16.msra.mxu0 %v1714
    %2477 = vmatpush.bf16.msra.mxu0 %v1702
    %2478 = vmatmul.bf16.gmra.mxu0 %v2082
    %v2479 = vpop.f32.mrf.mxu0
    %v2480 = vadd.f32 %v1861, %v2479
    %v2481 = vpop.f32.mrf.mxu0
    %v2482 = vadd.f32 %v1866, %v2481
    %2483 = vmatmul.bf16.gmra.mxu0 %v2083
    %v2484 = vpop.f32.mrf.mxu0
    %v2485 = vadd.f32 %v1871, %v2484
    %v2486 = vpop.f32.mrf.mxu0
    %v2487 = vadd.f32 %v1876, %v2486
    %2488 = vmatmul.bf16.gmra.mxu0 %v2084
    %v2489 = vpop.f32.mrf.mxu0
    %v2490 = vadd.f32 %v1881, %v2489
    %v2491 = vpop.f32.mrf.mxu0
    %v2492 = vadd.f32 %v1886, %v2491
    %2493 = vmatmul.bf16.gmra.mxu0 %v2085
    %v2494 = vpop.f32.mrf.mxu0
    %v2495 = vadd.f32 %v1891, %v2494
    %v2496 = vpop.f32.mrf.mxu0
    %v2497 = vadd.f32 %v1896, %v2496
    %2498 = vmatmul.bf16.gmra.mxu0 %v2086
    %v2499 = vpop.f32.mrf.mxu0
    %v2500 = vadd.f32 %v1901, %v2499
    %v2501 = vpop.f32.mrf.mxu0
    %v2502 = vadd.f32 %v1906, %v2501
    %2503 = vmatmul.bf16.gmra.mxu0 %v2087
    %v2504 = vpop.f32.mrf.mxu0
    %v2505 = vadd.f32 %v1911, %v2504
    %v2506 = vpop.f32.mrf.mxu0
    %v2507 = vadd.f32 %v1916, %v2506
    %2508 = vmatmul.bf16.gmra.mxu0 %v2088
    %v2509 = vpop.f32.mrf.mxu0
    %v2510 = vadd.f32 %v1921, %v2509
    %v2511 = vpop.f32.mrf.mxu0
    %v2512 = vadd.f32 %v1926, %v2511
    %2513 = vmatmul.bf16.gmra.mxu0 %v2089
    %v2514 = vpop.f32.mrf.mxu0
    %v2515 = vadd.f32 %v1931, %v2514
    %v2516 = vpop.f32.mrf.mxu0
    %v2517 = vadd.f32 %v1936, %v2516
    %2518 = vmatmul.bf16.gmra.mxu0 %v2090
    %v2519 = vpop.f32.mrf.mxu0
    %v2520 = vadd.f32 %v1941, %v2519
    %v2521 = vpop.f32.mrf.mxu0
    %v2522 = vadd.f32 %v1946, %v2521
    %2523 = vmatmul.bf16.gmra.mxu0 %v2091
    %v2524 = vpop.f32.mrf.mxu0
    %v2525 = vadd.f32 %v1951, %v2524
    %v2526 = vpop.f32.mrf.mxu0
    %v2527 = vadd.f32 %v1956, %v2526
    %2528 = vmatmul.bf16.gmra.mxu0 %v2092
    %v2529 = vpop.f32.mrf.mxu0
    %v2530 = vadd.f32 %v1961, %v2529
    %v2531 = vpop.f32.mrf.mxu0
    %v2532 = vadd.f32 %v1966, %v2531
    %2533 = vmatmul.bf16.gmra.mxu0 %v2093
    %v2534 = vpop.f32.mrf.mxu0
    %v2535 = vadd.f32 %v1971, %v2534
    %v2536 = vpop.f32.mrf.mxu0
    %v2537 = vadd.f32 %v1976, %v2536
    %2538 = vmatmul.bf16.gmra.mxu0 %v2094
    %v2539 = vpop.f32.mrf.mxu0
    %v2540 = vadd.f32 %v1981, %v2539
    %v2541 = vpop.f32.mrf.mxu0
    %v2542 = vadd.f32 %v1986, %v2541
    %2543 = vmatmul.bf16.gmra.mxu0 %v2095
    %v2544 = vpop.f32.mrf.mxu0
    %v2545 = vadd.f32 %v1991, %v2544
    %v2546 = vpop.f32.mrf.mxu0
    %v2547 = vadd.f32 %v1996, %v2546
    %2548 = vmatmul.bf16.gmra.mxu0 %v2096
    %v2549 = vpop.f32.mrf.mxu0
    %v2550 = vadd.f32 %v2001, %v2549
    %v2551 = vpop.f32.mrf.mxu0
    %v2552 = vadd.f32 %v2006, %v2551
    %2553 = vmatmul.bf16.gmra.mxu0 %v2097
    %v2554 = vpop.f32.mrf.mxu0
    %v2555 = vadd.f32 %v2011, %v2554
    %v2556 = vpop.f32.mrf.mxu0
    %v2557 = vadd.f32 %v2016, %v2556
    %2558 = vdwg.mxu0
    %2559 = vmatpush.bf16.msra.mxu0 %v1787
    %2560 = vmatpush.bf16.msra.mxu0 %v1775
    %2561 = vmatpush.bf16.msra.mxu0 %v1763
    %2562 = vmatpush.bf16.msra.mxu0 %v1751
    %2563 = vmatpush.bf16.msra.mxu0 %v1739
    %2564 = vmatpush.bf16.msra.mxu0 %v1727
    %2565 = vmatpush.bf16.msra.mxu0 %v1715
    %2566 = vmatpush.bf16.msra.mxu0 %v1703
    %2567 = vmatmul.bf16.gmra.mxu0 %v2082
    %v2568 = vpop.f32.mrf.mxu0
    %v2569 = vadd.f32 %v1861, %v2568
    %v2570 = vpop.f32.mrf.mxu0
    %v2571 = vadd.f32 %v1866, %v2570
    %2572 = vmatmul.bf16.gmra.mxu0 %v2083
    %v2573 = vpop.f32.mrf.mxu0
    %v2574 = vadd.f32 %v1871, %v2573
    %v2575 = vpop.f32.mrf.mxu0
    %v2576 = vadd.f32 %v1876, %v2575
    %2577 = vmatmul.bf16.gmra.mxu0 %v2084
    %v2578 = vpop.f32.mrf.mxu0
    %v2579 = vadd.f32 %v1881, %v2578
    %v2580 = vpop.f32.mrf.mxu0
    %v2581 = vadd.f32 %v1886, %v2580
    %2582 = vmatmul.bf16.gmra.mxu0 %v2085
    %v2583 = vpop.f32.mrf.mxu0
    %v2584 = vadd.f32 %v1891, %v2583
    %v2585 = vpop.f32.mrf.mxu0
    %v2586 = vadd.f32 %v1896, %v2585
    %2587 = vmatmul.bf16.gmra.mxu0 %v2086
    %v2588 = vpop.f32.mrf.mxu0
    %v2589 = vadd.f32 %v1901, %v2588
    %v2590 = vpop.f32.mrf.mxu0
    %v2591 = vadd.f32 %v1906, %v2590
    %2592 = vmatmul.bf16.gmra.mxu0 %v2087
    %v2593 = vpop.f32.mrf.mxu0
    %v2594 = vadd.f32 %v1911, %v2593
    %v2595 = vpop.f32.mrf.mxu0
    %v2596 = vadd.f32 %v1916, %v2595
    %2597 = vmatmul.bf16.gmra.mxu0 %v2088
    %v2598 = vpop.f32.mrf.mxu0
    %v2599 = vadd.f32 %v1921, %v2598
    %v2600 = vpop.f32.mrf.mxu0
    %v2601 = vadd.f32 %v1926, %v2600
    %2602 = vmatmul.bf16.gmra.mxu0 %v2089
    %v2603 = vpop.f32.mrf.mxu0
    %v2604 = vadd.f32 %v1931, %v2603
    %v2605 = vpop.f32.mrf.mxu0
    %v2606 = vadd.f32 %v1936, %v2605
    %2607 = vmatmul.bf16.gmra.mxu0 %v2090
    %v2608 = vpop.f32.mrf.mxu0
    %v2609 = vadd.f32 %v1941, %v2608
    %v2610 = vpop.f32.mrf.mxu0
    %v2611 = vadd.f32 %v1946, %v2610
    %2612 = vmatmul.bf16.gmra.mxu0 %v2091
    %v2613 = vpop.f32.mrf.mxu0
    %v2614 = vadd.f32 %v1951, %v2613
    %v2615 = vpop.f32.mrf.mxu0
    %v2616 = vadd.f32 %v1956, %v2615
    %2617 = vmatmul.bf16.gmra.mxu0 %v2092
    %v2618 = vpop.f32.mrf.mxu0
    %v2619 = vadd.f32 %v1961, %v2618
    %v2620 = vpop.f32.mrf.mxu0
    %v2621 = vadd.f32 %v1966, %v2620
    %2622 = vmatmul.bf16.gmra.mxu0 %v2093
    %v2623 = vpop.f32.mrf.mxu0
    %v2624 = vadd.f32 %v1971, %v2623
    %v2625 = vpop.f32.mrf.mxu0
    %v2626 = vadd.f32 %v1976, %v2625
    %2627 = vmatmul.bf16.gmra.mxu0 %v2094
    %v2628 = vpop.f32.mrf.mxu0
    %v2629 = vadd.f32 %v1981, %v2628
    %v2630 = vpop.f32.mrf.mxu0
    %v2631 = vadd.f32 %v1986, %v2630
    %2632 = vmatmul.bf16.gmra.mxu0 %v2095
    %v2633 = vpop.f32.mrf.mxu0
    %v2634 = vadd.f32 %v1991, %v2633
    %v2635 = vpop.f32.mrf.mxu0
    %v2636 = vadd.f32 %v1996, %v2635
    %2637 = vmatmul.bf16.gmra.mxu0 %v2096
    %v2638 = vpop.f32.mrf.mxu0
    %v2639 = vadd.f32 %v2001, %v2638
    %v2640 = vpop.f32.mrf.mxu0
    %v2641 = vadd.f32 %v2006, %v2640
    %2642 = vmatmul.bf16.gmra.mxu0 %v2097
    %v2643 = vpop.f32.mrf.mxu0
    %v2644 = vadd.f32 %v2011, %v2643
    %v2645 = vpop.f32.mrf.mxu0
    %v2646 = vadd.f32 %v2016, %v2645
    %2647 = vdwg.mxu0
    %2648 = vmatpush.bf16.msra.mxu0 %v1788
    %2649 = vmatpush.bf16.msra.mxu0 %v1776
    %2650 = vmatpush.bf16.msra.mxu0 %v1764
    %2651 = vmatpush.bf16.msra.mxu0 %v1752
    %2652 = vmatpush.bf16.msra.mxu0 %v1740
    %2653 = vmatpush.bf16.msra.mxu0 %v1728
    %2654 = vmatpush.bf16.msra.mxu0 %v1716
    %2655 = vmatpush.bf16.msra.mxu0 %v1704
    %2656 = vmatmul.bf16.gmra.mxu0 %v2082
    %v2657 = vpop.f32.mrf.mxu0
    %v2658 = vadd.f32 %v1861, %v2657
    %v2659 = vpop.f32.mrf.mxu0
    %v2660 = vadd.f32 %v1866, %v2659
    %2661 = vmatmul.bf16.gmra.mxu0 %v2083
    %v2662 = vpop.f32.mrf.mxu0
    %v2663 = vadd.f32 %v1871, %v2662
    %v2664 = vpop.f32.mrf.mxu0
    %v2665 = vadd.f32 %v1876, %v2664
    %2666 = vmatmul.bf16.gmra.mxu0 %v2084
    %v2667 = vpop.f32.mrf.mxu0
    %v2668 = vadd.f32 %v1881, %v2667
    %v2669 = vpop.f32.mrf.mxu0
    %v2670 = vadd.f32 %v1886, %v2669
    %2671 = vmatmul.bf16.gmra.mxu0 %v2085
    %v2672 = vpop.f32.mrf.mxu0
    %v2673 = vadd.f32 %v1891, %v2672
    %v2674 = vpop.f32.mrf.mxu0
    %v2675 = vadd.f32 %v1896, %v2674
    %2676 = vmatmul.bf16.gmra.mxu0 %v2086
    %v2677 = vpop.f32.mrf.mxu0
    %v2678 = vadd.f32 %v1901, %v2677
    %v2679 = vpop.f32.mrf.mxu0
    %v2680 = vadd.f32 %v1906, %v2679
    %2681 = vmatmul.bf16.gmra.mxu0 %v2087
    %v2682 = vpop.f32.mrf.mxu0
    %v2683 = vadd.f32 %v1911, %v2682
    %v2684 = vpop.f32.mrf.mxu0
    %v2685 = vadd.f32 %v1916, %v2684
    %2686 = vmatmul.bf16.gmra.mxu0 %v2088
    %v2687 = vpop.f32.mrf.mxu0
    %v2688 = vadd.f32 %v1921, %v2687
    %v2689 = vpop.f32.mrf.mxu0
    %v2690 = vadd.f32 %v1926, %v2689
    %2691 = vmatmul.bf16.gmra.mxu0 %v2089
    %v2692 = vpop.f32.mrf.mxu0
    %v2693 = vadd.f32 %v1931, %v2692
    %v2694 = vpop.f32.mrf.mxu0
    %v2695 = vadd.f32 %v1936, %v2694
    %2696 = vmatmul.bf16.gmra.mxu0 %v2090
    %v2697 = vpop.f32.mrf.mxu0
    %v2698 = vadd.f32 %v1941, %v2697
    %v2699 = vpop.f32.mrf.mxu0
    %v2700 = vadd.f32 %v1946, %v2699
    %2701 = vmatmul.bf16.gmra.mxu0 %v2091
    %v2702 = vpop.f32.mrf.mxu0
    %v2703 = vadd.f32 %v1951, %v2702
    %v2704 = vpop.f32.mrf.mxu0
    %v2705 = vadd.f32 %v1956, %v2704
    %2706 = vmatmul.bf16.gmra.mxu0 %v2092
    %v2707 = vpop.f32.mrf.mxu0
    %v2708 = vadd.f32 %v1961, %v2707
    %v2709 = vpop.f32.mrf.mxu0
    %v2710 = vadd.f32 %v1966, %v2709
    %2711 = vmatmul.bf16.gmra.mxu0 %v2093
    %v2712 = vpop.f32.mrf.mxu0
    %v2713 = vadd.f32 %v1971, %v2712
    %v2714 = vpop.f32.mrf.mxu0
    %v2715 = vadd.f32 %v1976, %v2714
    %2716 = vmatmul.bf16.gmra.mxu0 %v2094
    %v2717 = vpop.f32.mrf.mxu0
    %v2718 = vadd.f32 %v1981, %v2717
    %v2719 = vpop.f32.mrf.mxu0
    %v2720 = vadd.f32 %v1986, %v2719
    %2721 = vmatmul.bf16.gmra.mxu0 %v2095
    %v2722 = vpop.f32.mrf.mxu0
    %v2723 = vadd.f32 %v1991, %v2722
    %v2724 = vpop.f32.mrf.mxu0
    %v2725 = vadd.f32 %v1996, %v2724
    %2726 = vmatmul.bf16.gmra.mxu0 %v2096
    %v2727 = vpop.f32.mrf.mxu0
    %v2728 = vadd.f32 %v2001, %v2727
    %v2729 = vpop.f32.mrf.mxu0
    %v2730 = vadd.f32 %v2006, %v2729
    %2731 = vmatmul.bf16.gmra.mxu0 %v2097
    %v2732 = vpop.f32.mrf.mxu0
    %v2733 = vadd.f32 %v2011, %v2732
    %v2734 = vpop.f32.mrf.mxu0
    %v2735 = vadd.f32 %v2016, %v2734
    %2736 = vdwg.mxu0
    %2737 = vmatpush.bf16.msra.mxu0 %v1789
    %2738 = vmatpush.bf16.msra.mxu0 %v1777
    %2739 = vmatpush.bf16.msra.mxu0 %v1765
    %2740 = vmatpush.bf16.msra.mxu0 %v1753
    %2741 = vmatpush.bf16.msra.mxu0 %v1741
    %2742 = vmatpush.bf16.msra.mxu0 %v1729
    %2743 = vmatpush.bf16.msra.mxu0 %v1717
    %2744 = vmatpush.bf16.msra.mxu0 %v1705
    %2745 = vmatmul.bf16.gmra.mxu0 %v2082
    %v2746 = vpop.f32.mrf.mxu0
    %v2747 = vadd.f32 %v1861, %v2746
    %v2748 = vpop.f32.mrf.mxu0
    %v2749 = vadd.f32 %v1866, %v2748
    %2750 = vmatmul.bf16.gmra.mxu0 %v2083
    %v2751 = vpop.f32.mrf.mxu0
    %v2752 = vadd.f32 %v1871, %v2751
    %v2753 = vpop.f32.mrf.mxu0
    %v2754 = vadd.f32 %v1876, %v2753
    %2755 = vmatmul.bf16.gmra.mxu0 %v2084
    %v2756 = vpop.f32.mrf.mxu0
    %v2757 = vadd.f32 %v1881, %v2756
    %v2758 = vpop.f32.mrf.mxu0
    %v2759 = vadd.f32 %v1886, %v2758
    %2760 = vmatmul.bf16.gmra.mxu0 %v2085
    %v2761 = vpop.f32.mrf.mxu0
    %v2762 = vadd.f32 %v1891, %v2761
    %v2763 = vpop.f32.mrf.mxu0
    %v2764 = vadd.f32 %v1896, %v2763
    %2765 = vmatmul.bf16.gmra.mxu0 %v2086
    %v2766 = vpop.f32.mrf.mxu0
    %v2767 = vadd.f32 %v1901, %v2766
    %v2768 = vpop.f32.mrf.mxu0
    %v2769 = vadd.f32 %v1906, %v2768
    %2770 = vmatmul.bf16.gmra.mxu0 %v2087
    %v2771 = vpop.f32.mrf.mxu0
    %v2772 = vadd.f32 %v1911, %v2771
    %v2773 = vpop.f32.mrf.mxu0
    %v2774 = vadd.f32 %v1916, %v2773
    %2775 = vmatmul.bf16.gmra.mxu0 %v2088
    %v2776 = vpop.f32.mrf.mxu0
    %v2777 = vadd.f32 %v1921, %v2776
    %v2778 = vpop.f32.mrf.mxu0
    %v2779 = vadd.f32 %v1926, %v2778
    %2780 = vmatmul.bf16.gmra.mxu0 %v2089
    %v2781 = vpop.f32.mrf.mxu0
    %v2782 = vadd.f32 %v1931, %v2781
    %v2783 = vpop.f32.mrf.mxu0
    %v2784 = vadd.f32 %v1936, %v2783
    %2785 = vmatmul.bf16.gmra.mxu0 %v2090
    %v2786 = vpop.f32.mrf.mxu0
    %v2787 = vadd.f32 %v1941, %v2786
    %v2788 = vpop.f32.mrf.mxu0
    %v2789 = vadd.f32 %v1946, %v2788
    %2790 = vmatmul.bf16.gmra.mxu0 %v2091
    %v2791 = vpop.f32.mrf.mxu0
    %v2792 = vadd.f32 %v1951, %v2791
    %v2793 = vpop.f32.mrf.mxu0
    %v2794 = vadd.f32 %v1956, %v2793
    %2795 = vmatmul.bf16.gmra.mxu0 %v2092
    %v2796 = vpop.f32.mrf.mxu0
    %v2797 = vadd.f32 %v1961, %v2796
    %v2798 = vpop.f32.mrf.mxu0
    %v2799 = vadd.f32 %v1966, %v2798
    %2800 = vmatmul.bf16.gmra.mxu0 %v2093
    %v2801 = vpop.f32.mrf.mxu0
    %v2802 = vadd.f32 %v1971, %v2801
    %v2803 = vpop.f32.mrf.mxu0
    %v2804 = vadd.f32 %v1976, %v2803
    %2805 = vmatmul.bf16.gmra.mxu0 %v2094
    %v2806 = vpop.f32.mrf.mxu0
    %v2807 = vadd.f32 %v1981, %v2806
    %v2808 = vpop.f32.mrf.mxu0
    %v2809 = vadd.f32 %v1986, %v2808
    %2810 = vmatmul.bf16.gmra.mxu0 %v2095
    %v2811 = vpop.f32.mrf.mxu0
    %v2812 = vadd.f32 %v1991, %v2811
    %v2813 = vpop.f32.mrf.mxu0
    %v2814 = vadd.f32 %v1996, %v2813
    %2815 = vmatmul.bf16.gmra.mxu0 %v2096
    %v2816 = vpop.f32.mrf.mxu0
    %v2817 = vadd.f32 %v2001, %v2816
    %v2818 = vpop.f32.mrf.mxu0
    %v2819 = vadd.f32 %v2006, %v2818
    %2820 = vmatmul.bf16.gmra.mxu0 %v2097
    %v2821 = vpop.f32.mrf.mxu0
    %v2822 = vadd.f32 %v2011, %v2821
    %v2823 = vpop.f32.mrf.mxu0
    %v2824 = vadd.f32 %v2016, %v2823
    %2825 = vdwg.mxu0
    %2826 = vmatpush.bf16.msra.mxu0 %v1790
    %2827 = vmatpush.bf16.msra.mxu0 %v1778
    %2828 = vmatpush.bf16.msra.mxu0 %v1766
    %2829 = vmatpush.bf16.msra.mxu0 %v1754
    %2830 = vmatpush.bf16.msra.mxu0 %v1742
    %2831 = vmatpush.bf16.msra.mxu0 %v1730
    %2832 = vmatpush.bf16.msra.mxu0 %v1718
    %2833 = vmatpush.bf16.msra.mxu0 %v1706
    %2834 = vmatmul.bf16.gmra.mxu0 %v2082
    %v2835 = vpop.f32.mrf.mxu0
    %v2836 = vadd.f32 %v1861, %v2835
    %v2837 = vpop.f32.mrf.mxu0
    %v2838 = vadd.f32 %v1866, %v2837
    %2839 = vmatmul.bf16.gmra.mxu0 %v2083
    %v2840 = vpop.f32.mrf.mxu0
    %v2841 = vadd.f32 %v1871, %v2840
    %v2842 = vpop.f32.mrf.mxu0
    %v2843 = vadd.f32 %v1876, %v2842
    %2844 = vmatmul.bf16.gmra.mxu0 %v2084
    %v2845 = vpop.f32.mrf.mxu0
    %v2846 = vadd.f32 %v1881, %v2845
    %v2847 = vpop.f32.mrf.mxu0
    %v2848 = vadd.f32 %v1886, %v2847
    %2849 = vmatmul.bf16.gmra.mxu0 %v2085
    %v2850 = vpop.f32.mrf.mxu0
    %v2851 = vadd.f32 %v1891, %v2850
    %v2852 = vpop.f32.mrf.mxu0
    %v2853 = vadd.f32 %v1896, %v2852
    %2854 = vmatmul.bf16.gmra.mxu0 %v2086
    %v2855 = vpop.f32.mrf.mxu0
    %v2856 = vadd.f32 %v1901, %v2855
    %v2857 = vpop.f32.mrf.mxu0
    %v2858 = vadd.f32 %v1906, %v2857
    %2859 = vmatmul.bf16.gmra.mxu0 %v2087
    %v2860 = vpop.f32.mrf.mxu0
    %v2861 = vadd.f32 %v1911, %v2860
    %v2862 = vpop.f32.mrf.mxu0
    %v2863 = vadd.f32 %v1916, %v2862
    %2864 = vmatmul.bf16.gmra.mxu0 %v2088
    %v2865 = vpop.f32.mrf.mxu0
    %v2866 = vadd.f32 %v1921, %v2865
    %v2867 = vpop.f32.mrf.mxu0
    %v2868 = vadd.f32 %v1926, %v2867
    %2869 = vmatmul.bf16.gmra.mxu0 %v2089
    %v2870 = vpop.f32.mrf.mxu0
    %v2871 = vadd.f32 %v1931, %v2870
    %v2872 = vpop.f32.mrf.mxu0
    %v2873 = vadd.f32 %v1936, %v2872
    %2874 = vmatmul.bf16.gmra.mxu0 %v2090
    %v2875 = vpop.f32.mrf.mxu0
    %v2876 = vadd.f32 %v1941, %v2875
    %v2877 = vpop.f32.mrf.mxu0
    %v2878 = vadd.f32 %v1946, %v2877
    %2879 = vmatmul.bf16.gmra.mxu0 %v2091
    %v2880 = vpop.f32.mrf.mxu0
    %v2881 = vadd.f32 %v1951, %v2880
    %v2882 = vpop.f32.mrf.mxu0
    %v2883 = vadd.f32 %v1956, %v2882
    %2884 = vmatmul.bf16.gmra.mxu0 %v2092
    %v2885 = vpop.f32.mrf.mxu0
    %v2886 = vadd.f32 %v1961, %v2885
    %v2887 = vpop.f32.mrf.mxu0
    %v2888 = vadd.f32 %v1966, %v2887
    %2889 = vmatmul.bf16.gmra.mxu0 %v2093
    %v2890 = vpop.f32.mrf.mxu0
    %v2891 = vadd.f32 %v1971, %v2890
    %v2892 = vpop.f32.mrf.mxu0
    %v2893 = vadd.f32 %v1976, %v2892
    %2894 = vmatmul.bf16.gmra.mxu0 %v2094
    %v2895 = vpop.f32.mrf.mxu0
    %v2896 = vadd.f32 %v1981, %v2895
    %v2897 = vpop.f32.mrf.mxu0
    %v2898 = vadd.f32 %v1986, %v2897
    %2899 = vmatmul.bf16.gmra.mxu0 %v2095
    %v2900 = vpop.f32.mrf.mxu0
    %v2901 = vadd.f32 %v1991, %v2900
    %v2902 = vpop.f32.mrf.mxu0
    %v2903 = vadd.f32 %v1996, %v2902
    %2904 = vmatmul.bf16.gmra.mxu0 %v2096
    %v2905 = vpop.f32.mrf.mxu0
    %v2906 = vadd.f32 %v2001, %v2905
    %v2907 = vpop.f32.mrf.mxu0
    %v2908 = vadd.f32 %v2006, %v2907
    %2909 = vmatmul.bf16.gmra.mxu0 %v2097
    %v2910 = vpop.f32.mrf.mxu0
    %v2911 = vadd.f32 %v2011, %v2910
    %v2912 = vpop.f32.mrf.mxu0
    %v2913 = vadd.f32 %v2016, %v2912
    %2914 = vdwg.mxu0
    %2915 = vmatpush.bf16.msra.mxu0 %v1791
    %2916 = vmatpush.bf16.msra.mxu0 %v1779
    %2917 = vmatpush.bf16.msra.mxu0 %v1767
    %2918 = vmatpush.bf16.msra.mxu0 %v1755
    %2919 = vmatpush.bf16.msra.mxu0 %v1743
    %2920 = vmatpush.bf16.msra.mxu0 %v1731
    %2921 = vmatpush.bf16.msra.mxu0 %v1719
    %2922 = vmatpush.bf16.msra.mxu0 %v1707
    %2923 = vmatmul.bf16.gmra.mxu0 %v2082
    %v2924 = vpop.f32.mrf.mxu0
    %v2925 = vadd.f32 %v1861, %v2924
    %v2926 = vpop.f32.mrf.mxu0
    %v2927 = vadd.f32 %v1866, %v2926
    %2928 = vmatmul.bf16.gmra.mxu0 %v2083
    %v2929 = vpop.f32.mrf.mxu0
    %v2930 = vadd.f32 %v1871, %v2929
    %v2931 = vpop.f32.mrf.mxu0
    %v2932 = vadd.f32 %v1876, %v2931
    %2933 = vmatmul.bf16.gmra.mxu0 %v2084
    %v2934 = vpop.f32.mrf.mxu0
    %v2935 = vadd.f32 %v1881, %v2934
    %v2936 = vpop.f32.mrf.mxu0
    %v2937 = vadd.f32 %v1886, %v2936
    %2938 = vmatmul.bf16.gmra.mxu0 %v2085
    %v2939 = vpop.f32.mrf.mxu0
    %v2940 = vadd.f32 %v1891, %v2939
    %v2941 = vpop.f32.mrf.mxu0
    %v2942 = vadd.f32 %v1896, %v2941
    %2943 = vmatmul.bf16.gmra.mxu0 %v2086
    %v2944 = vpop.f32.mrf.mxu0
    %v2945 = vadd.f32 %v1901, %v2944
    %v2946 = vpop.f32.mrf.mxu0
    %v2947 = vadd.f32 %v1906, %v2946
    %2948 = vmatmul.bf16.gmra.mxu0 %v2087
    %v2949 = vpop.f32.mrf.mxu0
    %v2950 = vadd.f32 %v1911, %v2949
    %v2951 = vpop.f32.mrf.mxu0
    %v2952 = vadd.f32 %v1916, %v2951
    %2953 = vmatmul.bf16.gmra.mxu0 %v2088
    %v2954 = vpop.f32.mrf.mxu0
    %v2955 = vadd.f32 %v1921, %v2954
    %v2956 = vpop.f32.mrf.mxu0
    %v2957 = vadd.f32 %v1926, %v2956
    %2958 = vmatmul.bf16.gmra.mxu0 %v2089
    %v2959 = vpop.f32.mrf.mxu0
    %v2960 = vadd.f32 %v1931, %v2959
    %v2961 = vpop.f32.mrf.mxu0
    %v2962 = vadd.f32 %v1936, %v2961
    %2963 = vmatmul.bf16.gmra.mxu0 %v2090
    %v2964 = vpop.f32.mrf.mxu0
    %v2965 = vadd.f32 %v1941, %v2964
    %v2966 = vpop.f32.mrf.mxu0
    %v2967 = vadd.f32 %v1946, %v2966
    %2968 = vmatmul.bf16.gmra.mxu0 %v2091
    %v2969 = vpop.f32.mrf.mxu0
    %v2970 = vadd.f32 %v1951, %v2969
    %v2971 = vpop.f32.mrf.mxu0
    %v2972 = vadd.f32 %v1956, %v2971
    %2973 = vmatmul.bf16.gmra.mxu0 %v2092
    %v2974 = vpop.f32.mrf.mxu0
    %v2975 = vadd.f32 %v1961, %v2974
    %v2976 = vpop.f32.mrf.mxu0
    %v2977 = vadd.f32 %v1966, %v2976
    %2978 = vmatmul.bf16.gmra.mxu0 %v2093
    %v2979 = vpop.f32.mrf.mxu0
    %v2980 = vadd.f32 %v1971, %v2979
    %v2981 = vpop.f32.mrf.mxu0
    %v2982 = vadd.f32 %v1976, %v2981
    %2983 = vmatmul.bf16.gmra.mxu0 %v2094
    %v2984 = vpop.f32.mrf.mxu0
    %v2985 = vadd.f32 %v1981, %v2984
    %v2986 = vpop.f32.mrf.mxu0
    %v2987 = vadd.f32 %v1986, %v2986
    %2988 = vmatmul.bf16.gmra.mxu0 %v2095
    %v2989 = vpop.f32.mrf.mxu0
    %v2990 = vadd.f32 %v1991, %v2989
    %v2991 = vpop.f32.mrf.mxu0
    %v2992 = vadd.f32 %v1996, %v2991
    %2993 = vmatmul.bf16.gmra.mxu0 %v2096
    %v2994 = vpop.f32.mrf.mxu0
    %v2995 = vadd.f32 %v2001, %v2994
    %v2996 = vpop.f32.mrf.mxu0
    %v2997 = vadd.f32 %v2006, %v2996
    %2998 = vmatmul.bf16.gmra.mxu0 %v2097
    %v2999 = vpop.f32.mrf.mxu0
    %v3000 = vadd.f32 %v2011, %v2999
    %v3001 = vpop.f32.mrf.mxu0
    %v3002 = vadd.f32 %v2016, %v3001
    %3003 = vdwg.mxu0
    %3004 = vmatpush.bf16.msra.mxu0 %v1792
    %3005 = vmatpush.bf16.msra.mxu0 %v1780
    %3006 = vmatpush.bf16.msra.mxu0 %v1768
    %3007 = vmatpush.bf16.msra.mxu0 %v1756
    %3008 = vmatpush.bf16.msra.mxu0 %v1744
    %3009 = vmatpush.bf16.msra.mxu0 %v1732
    %3010 = vmatpush.bf16.msra.mxu0 %v1720
    %3011 = vmatpush.bf16.msra.mxu0 %v1708
    %3012 = vmatmul.bf16.gmra.mxu0 %v2082
    %v3013 = vpop.f32.mrf.mxu0
    %v3014 = vadd.f32 %v1861, %v3013
    %v3015 = vpop.f32.mrf.mxu0
    %v3016 = vadd.f32 %v1866, %v3015
    %3017 = vmatmul.bf16.gmra.mxu0 %v2083
    %v3018 = vpop.f32.mrf.mxu0
    %v3019 = vadd.f32 %v1871, %v3018
    %v3020 = vpop.f32.mrf.mxu0
    %v3021 = vadd.f32 %v1876, %v3020
    %3022 = vmatmul.bf16.gmra.mxu0 %v2084
    %v3023 = vpop.f32.mrf.mxu0
    %v3024 = vadd.f32 %v1881, %v3023
    %v3025 = vpop.f32.mrf.mxu0
    %v3026 = vadd.f32 %v1886, %v3025
    %3027 = vmatmul.bf16.gmra.mxu0 %v2085
    %v3028 = vpop.f32.mrf.mxu0
    %v3029 = vadd.f32 %v1891, %v3028
    %v3030 = vpop.f32.mrf.mxu0
    %v3031 = vadd.f32 %v1896, %v3030
    %3032 = vmatmul.bf16.gmra.mxu0 %v2086
    %v3033 = vpop.f32.mrf.mxu0
    %v3034 = vadd.f32 %v1901, %v3033
    %v3035 = vpop.f32.mrf.mxu0
    %v3036 = vadd.f32 %v1906, %v3035
    %3037 = vmatmul.bf16.gmra.mxu0 %v2087
    %v3038 = vpop.f32.mrf.mxu0
    %v3039 = vadd.f32 %v1911, %v3038
    %v3040 = vpop.f32.mrf.mxu0
    %v3041 = vadd.f32 %v1916, %v3040
    %3042 = vmatmul.bf16.gmra.mxu0 %v2088
    %v3043 = vpop.f32.mrf.mxu0
    %v3044 = vadd.f32 %v1921, %v3043
    %v3045 = vpop.f32.mrf.mxu0
    %v3046 = vadd.f32 %v1926, %v3045
    %3047 = vmatmul.bf16.gmra.mxu0 %v2089
    %v3048 = vpop.f32.mrf.mxu0
    %v3049 = vadd.f32 %v1931, %v3048
    %v3050 = vpop.f32.mrf.mxu0
    %v3051 = vadd.f32 %v1936, %v3050
    %3052 = vmatmul.bf16.gmra.mxu0 %v2090
    %v3053 = vpop.f32.mrf.mxu0
    %v3054 = vadd.f32 %v1941, %v3053
    %v3055 = vpop.f32.mrf.mxu0
    %v3056 = vadd.f32 %v1946, %v3055
    %3057 = vmatmul.bf16.gmra.mxu0 %v2091
    %v3058 = vpop.f32.mrf.mxu0
    %v3059 = vadd.f32 %v1951, %v3058
    %v3060 = vpop.f32.mrf.mxu0
    %v3061 = vadd.f32 %v1956, %v3060
    %3062 = vmatmul.bf16.gmra.mxu0 %v2092
    %v3063 = vpop.f32.mrf.mxu0
    %v3064 = vadd.f32 %v1961, %v3063
    %v3065 = vpop.f32.mrf.mxu0
    %v3066 = vadd.f32 %v1966, %v3065
    %3067 = vmatmul.bf16.gmra.mxu0 %v2093
    %v3068 = vpop.f32.mrf.mxu0
    %v3069 = vadd.f32 %v1971, %v3068
    %v3070 = vpop.f32.mrf.mxu0
    %v3071 = vadd.f32 %v1976, %v3070
    %3072 = vmatmul.bf16.gmra.mxu0 %v2094
    %v3073 = vpop.f32.mrf.mxu0
    %v3074 = vadd.f32 %v1981, %v3073
    %v3075 = vpop.f32.mrf.mxu0
    %v3076 = vadd.f32 %v1986, %v3075
    %3077 = vmatmul.bf16.gmra.mxu0 %v2095
    %v3078 = vpop.f32.mrf.mxu0
    %v3079 = vadd.f32 %v1991, %v3078
    %v3080 = vpop.f32.mrf.mxu0
    %v3081 = vadd.f32 %v1996, %v3080
    %3082 = vmatmul.bf16.gmra.mxu0 %v2096
    %v3083 = vpop.f32.mrf.mxu0
    %v3084 = vadd.f32 %v2001, %v3083
    %v3085 = vpop.f32.mrf.mxu0
    %v3086 = vadd.f32 %v2006, %v3085
    %3087 = vmatmul.bf16.gmra.mxu0 %v2097
    %v3088 = vpop.f32.mrf.mxu0
    %v3089 = vadd.f32 %v2011, %v3088
    %v3090 = vpop.f32.mrf.mxu0
    %v3091 = vadd.f32 %v2016, %v3090
    %3092 = vdwg.mxu0
    %3093 = vmatpush.bf16.msra.mxu0 %v1793
    %3094 = vmatpush.bf16.msra.mxu0 %v1781
    %3095 = vmatpush.bf16.msra.mxu0 %v1769
    %3096 = vmatpush.bf16.msra.mxu0 %v1757
    %3097 = vmatpush.bf16.msra.mxu0 %v1745
    %3098 = vmatpush.bf16.msra.mxu0 %v1733
    %3099 = vmatpush.bf16.msra.mxu0 %v1721
    %3100 = vmatpush.bf16.msra.mxu0 %v1709
    %3101 = vmatmul.bf16.gmra.mxu0 %v2082
    %v3102 = vpop.f32.mrf.mxu0
    %v3103 = vadd.f32 %v1861, %v3102
    %v3104 = vpop.f32.mrf.mxu0
    %v3105 = vadd.f32 %v1866, %v3104
    %3106 = vmatmul.bf16.gmra.mxu0 %v2083
    %v3107 = vpop.f32.mrf.mxu0
    %v3108 = vadd.f32 %v1871, %v3107
    %v3109 = vpop.f32.mrf.mxu0
    %v3110 = vadd.f32 %v1876, %v3109
    %3111 = vmatmul.bf16.gmra.mxu0 %v2084
    %v3112 = vpop.f32.mrf.mxu0
    %v3113 = vadd.f32 %v1881, %v3112
    %v3114 = vpop.f32.mrf.mxu0
    %v3115 = vadd.f32 %v1886, %v3114
    %3116 = vmatmul.bf16.gmra.mxu0 %v2085
    %v3117 = vpop.f32.mrf.mxu0
    %v3118 = vadd.f32 %v1891, %v3117
    %v3119 = vpop.f32.mrf.mxu0
    %v3120 = vadd.f32 %v1896, %v3119
    %3121 = vmatmul.bf16.gmra.mxu0 %v2086
    %v3122 = vpop.f32.mrf.mxu0
    %v3123 = vadd.f32 %v1901, %v3122
    %v3124 = vpop.f32.mrf.mxu0
    %v3125 = vadd.f32 %v1906, %v3124
    %3126 = vmatmul.bf16.gmra.mxu0 %v2087
    %v3127 = vpop.f32.mrf.mxu0
    %v3128 = vadd.f32 %v1911, %v3127
    %v3129 = vpop.f32.mrf.mxu0
    %v3130 = vadd.f32 %v1916, %v3129
    %3131 = vmatmul.bf16.gmra.mxu0 %v2088
    %v3132 = vpop.f32.mrf.mxu0
    %v3133 = vadd.f32 %v1921, %v3132
    %v3134 = vpop.f32.mrf.mxu0
    %v3135 = vadd.f32 %v1926, %v3134
    %3136 = vmatmul.bf16.gmra.mxu0 %v2089
    %v3137 = vpop.f32.mrf.mxu0
    %v3138 = vadd.f32 %v1931, %v3137
    %v3139 = vpop.f32.mrf.mxu0
    %v3140 = vadd.f32 %v1936, %v3139
    %3141 = vmatmul.bf16.gmra.mxu0 %v2090
    %v3142 = vpop.f32.mrf.mxu0
    %v3143 = vadd.f32 %v1941, %v3142
    %v3144 = vpop.f32.mrf.mxu0
    %v3145 = vadd.f32 %v1946, %v3144
    %3146 = vmatmul.bf16.gmra.mxu0 %v2091
    %v3147 = vpop.f32.mrf.mxu0
    %v3148 = vadd.f32 %v1951, %v3147
    %v3149 = vpop.f32.mrf.mxu0
    %v3150 = vadd.f32 %v1956, %v3149
    %3151 = vmatmul.bf16.gmra.mxu0 %v2092
    %v3152 = vpop.f32.mrf.mxu0
    %v3153 = vadd.f32 %v1961, %v3152
    %v3154 = vpop.f32.mrf.mxu0
    %v3155 = vadd.f32 %v1966, %v3154
    %3156 = vmatmul.bf16.gmra.mxu0 %v2093
    %v3157 = vpop.f32.mrf.mxu0
    %v3158 = vadd.f32 %v1971, %v3157
    %v3159 = vpop.f32.mrf.mxu0
    %v3160 = vadd.f32 %v1976, %v3159
    %3161 = vmatmul.bf16.gmra.mxu0 %v2094
    %v3162 = vpop.f32.mrf.mxu0
    %v3163 = vadd.f32 %v1981, %v3162
    %v3164 = vpop.f32.mrf.mxu0
    %v3165 = vadd.f32 %v1986, %v3164
    %3166 = vmatmul.bf16.gmra.mxu0 %v2095
    %v3167 = vpop.f32.mrf.mxu0
    %v3168 = vadd.f32 %v1991, %v3167
    %v3169 = vpop.f32.mrf.mxu0
    %v3170 = vadd.f32 %v1996, %v3169
    %3171 = vmatmul.bf16.gmra.mxu0 %v2096
    %v3172 = vpop.f32.mrf.mxu0
    %v3173 = vadd.f32 %v2001, %v3172
    %v3174 = vpop.f32.mrf.mxu0
    %v3175 = vadd.f32 %v2006, %v3174
    %3176 = vmatmul.bf16.gmra.mxu0 %v2097
    %v3177 = vpop.f32.mrf.mxu0
    %v3178 = vadd.f32 %v2011, %v3177
    %v3179 = vpop.f32.mrf.mxu0
    %v3180 = vadd.f32 %v2016, %v3179
    %3181 = vdwg.mxu0
    %v3182 = vmax.f32 %v2124, %v2126
    %v3183 = vmax.f32 %v3182, %v2129
    %v3184 = vmax.f32 %v3183, %v2131
    %v3185 = vmax.f32 %v3184, %v2134
    %v3186 = vmax.f32 %v3185, %v2136
    %v3187 = vmax.f32 %v3186, %v2139
    %v3188 = vmax.f32 %v3187, %v2141
    %v3189 = vmax.f32 %v3188, %v2144
    %v3190 = vmax.f32 %v3189, %v2146
    %v3191 = vmax.f32 %v3190, %v2149
    %v3192 = vmax.f32 %v3191, %v2151
    %v3193 = vmax.f32 %v3192, %v2154
    %v3194 = vmax.f32 %v3193, %v2156
    %v3195 = vmax.f32 %v3194, %v2159
    %v3196 = vmax.f32 %v3195, %v2161
    %v3197 = vmax.f32 %v3196, %v2164
    %v3198 = vmax.f32 %v3197, %v2166
    %v3199 = vmax.f32 %v3198, %v2169
    %v3200 = vmax.f32 %v3199, %v2171
    %v3201 = vmax.f32 %v3200, %v2174
    %v3202 = vmax.f32 %v3201, %v2176
    %v3203 = vmax.f32 %v3202, %v2179
    %v3204 = vmax.f32 %v3203, %v2181
    %v3205 = vmax.f32 %v3204, %v2184
    %v3206 = vmax.f32 %v3205, %v2186
    %v3207 = vmax.f32 %v3206, %v2189
    %v3208 = vmax.f32 %v3207, %v2191
    %v3209 = vmax.f32 %v3208, %v2194
    %v3210 = vmax.f32 %v3209, %v2196
    %v3211 = vmax.f32 %v3210, %v2199
    %v3212 = vmax.f32 %v3211, %v2201
    %v3213 = vrot.slane %v3212, 4
    %v3214 = vmax.f32 %v3212, %v3213
    %v3215 = vrot.slane %v3214, 2
    %v3216 = vmax.f32 %v3214, %v3215
    %v3217 = vrot.slane %v3216, 1
    %v3218 = vmax.f32 %v3216, %v3217
    %v3219 = vmax.f32 %v2213, %v2215
    %v3220 = vmax.f32 %v3219, %v2218
    %v3221 = vmax.f32 %v3220, %v2220
    %v3222 = vmax.f32 %v3221, %v2223
    %v3223 = vmax.f32 %v3222, %v2225
    %v3224 = vmax.f32 %v3223, %v2228
    %v3225 = vmax.f32 %v3224, %v2230
    %v3226 = vmax.f32 %v3225, %v2233
    %v3227 = vmax.f32 %v3226, %v2235
    %v3228 = vmax.f32 %v3227, %v2238
    %v3229 = vmax.f32 %v3228, %v2240
    %v3230 = vmax.f32 %v3229, %v2243
    %v3231 = vmax.f32 %v3230, %v2245
    %v3232 = vmax.f32 %v3231, %v2248
    %v3233 = vmax.f32 %v3232, %v2250
    %v3234 = vmax.f32 %v3233, %v2253
    %v3235 = vmax.f32 %v3234, %v2255
    %v3236 = vmax.f32 %v3235, %v2258
    %v3237 = vmax.f32 %v3236, %v2260
    %v3238 = vmax.f32 %v3237, %v2263
    %v3239 = vmax.f32 %v3238, %v2265
    %v3240 = vmax.f32 %v3239, %v2268
    %v3241 = vmax.f32 %v3240, %v2270
    %v3242 = vmax.f32 %v3241, %v2273
    %v3243 = vmax.f32 %v3242, %v2275
    %v3244 = vmax.f32 %v3243, %v2278
    %v3245 = vmax.f32 %v3244, %v2280
    %v3246 = vmax.f32 %v3245, %v2283
    %v3247 = vmax.f32 %v3246, %v2285
    %v3248 = vmax.f32 %v3247, %v2288
    %v3249 = vmax.f32 %v3248, %v2290
    %v3250 = vrot.slane %v3249, 4
    %v3251 = vmax.f32 %v3249, %v3250
    %v3252 = vrot.slane %v3251, 2
    %v3253 = vmax.f32 %v3251, %v3252
    %v3254 = vrot.slane %v3253, 1
    %v3255 = vmax.f32 %v3253, %v3254
    %v3256 = vmax.f32 %v2302, %v2304
    %v3257 = vmax.f32 %v3256, %v2307
    %v3258 = vmax.f32 %v3257, %v2309
    %v3259 = vmax.f32 %v3258, %v2312
    %v3260 = vmax.f32 %v3259, %v2314
    %v3261 = vmax.f32 %v3260, %v2317
    %v3262 = vmax.f32 %v3261, %v2319
    %v3263 = vmax.f32 %v3262, %v2322
    %v3264 = vmax.f32 %v3263, %v2324
    %v3265 = vmax.f32 %v3264, %v2327
    %v3266 = vmax.f32 %v3265, %v2329
    %v3267 = vmax.f32 %v3266, %v2332
    %v3268 = vmax.f32 %v3267, %v2334
    %v3269 = vmax.f32 %v3268, %v2337
    %v3270 = vmax.f32 %v3269, %v2339
    %v3271 = vmax.f32 %v3270, %v2342
    %v3272 = vmax.f32 %v3271, %v2344
    %v3273 = vmax.f32 %v3272, %v2347
    %v3274 = vmax.f32 %v3273, %v2349
    %v3275 = vmax.f32 %v3274, %v2352
    %v3276 = vmax.f32 %v3275, %v2354
    %v3277 = vmax.f32 %v3276, %v2357
    %v3278 = vmax.f32 %v3277, %v2359
    %v3279 = vmax.f32 %v3278, %v2362
    %v3280 = vmax.f32 %v3279, %v2364
    %v3281 = vmax.f32 %v3280, %v2367
    %v3282 = vmax.f32 %v3281, %v2369
    %v3283 = vmax.f32 %v3282, %v2372
    %v3284 = vmax.f32 %v3283, %v2374
    %v3285 = vmax.f32 %v3284, %v2377
    %v3286 = vmax.f32 %v3285, %v2379
    %v3287 = vrot.slane %v3286, 4
    %v3288 = vmax.f32 %v3286, %v3287
    %v3289 = vrot.slane %v3288, 2
    %v3290 = vmax.f32 %v3288, %v3289
    %v3291 = vrot.slane %v3290, 1
    %v3292 = vmax.f32 %v3290, %v3291
    %v3293 = vmax.f32 %v2391, %v2393
    %v3294 = vmax.f32 %v3293, %v2396
    %v3295 = vmax.f32 %v3294, %v2398
    %v3296 = vmax.f32 %v3295, %v2401
    %v3297 = vmax.f32 %v3296, %v2403
    %v3298 = vmax.f32 %v3297, %v2406
    %v3299 = vmax.f32 %v3298, %v2408
    %v3300 = vmax.f32 %v3299, %v2411
    %v3301 = vmax.f32 %v3300, %v2413
    %v3302 = vmax.f32 %v3301, %v2416
    %v3303 = vmax.f32 %v3302, %v2418
    %v3304 = vmax.f32 %v3303, %v2421
    %v3305 = vmax.f32 %v3304, %v2423
    %v3306 = vmax.f32 %v3305, %v2426
    %v3307 = vmax.f32 %v3306, %v2428
    %v3308 = vmax.f32 %v3307, %v2431
    %v3309 = vmax.f32 %v3308, %v2433
    %v3310 = vmax.f32 %v3309, %v2436
    %v3311 = vmax.f32 %v3310, %v2438
    %v3312 = vmax.f32 %v3311, %v2441
    %v3313 = vmax.f32 %v3312, %v2443
    %v3314 = vmax.f32 %v3313, %v2446
    %v3315 = vmax.f32 %v3314, %v2448
    %v3316 = vmax.f32 %v3315, %v2451
    %v3317 = vmax.f32 %v3316, %v2453
    %v3318 = vmax.f32 %v3317, %v2456
    %v3319 = vmax.f32 %v3318, %v2458
    %v3320 = vmax.f32 %v3319, %v2461
    %v3321 = vmax.f32 %v3320, %v2463
    %v3322 = vmax.f32 %v3321, %v2466
    %v3323 = vmax.f32 %v3322, %v2468
    %v3324 = vrot.slane %v3323, 4
    %v3325 = vmax.f32 %v3323, %v3324
    %v3326 = vrot.slane %v3325, 2
    %v3327 = vmax.f32 %v3325, %v3326
    %v3328 = vrot.slane %v3327, 1
    %v3329 = vmax.f32 %v3327, %v3328
    %v3330 = vmax.f32 %v2480, %v2482
    %v3331 = vmax.f32 %v3330, %v2485
    %v3332 = vmax.f32 %v3331, %v2487
    %v3333 = vmax.f32 %v3332, %v2490
    %v3334 = vmax.f32 %v3333, %v2492
    %v3335 = vmax.f32 %v3334, %v2495
    %v3336 = vmax.f32 %v3335, %v2497
    %v3337 = vmax.f32 %v3336, %v2500
    %v3338 = vmax.f32 %v3337, %v2502
    %v3339 = vmax.f32 %v3338, %v2505
    %v3340 = vmax.f32 %v3339, %v2507
    %v3341 = vmax.f32 %v3340, %v2510
    %v3342 = vmax.f32 %v3341, %v2512
    %v3343 = vmax.f32 %v3342, %v2515
    %v3344 = vmax.f32 %v3343, %v2517
    %v3345 = vmax.f32 %v3344, %v2520
    %v3346 = vmax.f32 %v3345, %v2522
    %v3347 = vmax.f32 %v3346, %v2525
    %v3348 = vmax.f32 %v3347, %v2527
    %v3349 = vmax.f32 %v3348, %v2530
    %v3350 = vmax.f32 %v3349, %v2532
    %v3351 = vmax.f32 %v3350, %v2535
    %v3352 = vmax.f32 %v3351, %v2537
    %v3353 = vmax.f32 %v3352, %v2540
    %v3354 = vmax.f32 %v3353, %v2542
    %v3355 = vmax.f32 %v3354, %v2545
    %v3356 = vmax.f32 %v3355, %v2547
    %v3357 = vmax.f32 %v3356, %v2550
    %v3358 = vmax.f32 %v3357, %v2552
    %v3359 = vmax.f32 %v3358, %v2555
    %v3360 = vmax.f32 %v3359, %v2557
    %v3361 = vrot.slane %v3360, 4
    %v3362 = vmax.f32 %v3360, %v3361
    %v3363 = vrot.slane %v3362, 2
    %v3364 = vmax.f32 %v3362, %v3363
    %v3365 = vrot.slane %v3364, 1
    %v3366 = vmax.f32 %v3364, %v3365
    %v3367 = vmax.f32 %v2569, %v2571
    %v3368 = vmax.f32 %v3367, %v2574
    %v3369 = vmax.f32 %v3368, %v2576
    %v3370 = vmax.f32 %v3369, %v2579
    %v3371 = vmax.f32 %v3370, %v2581
    %v3372 = vmax.f32 %v3371, %v2584
    %v3373 = vmax.f32 %v3372, %v2586
    %v3374 = vmax.f32 %v3373, %v2589
    %v3375 = vmax.f32 %v3374, %v2591
    %v3376 = vmax.f32 %v3375, %v2594
    %v3377 = vmax.f32 %v3376, %v2596
    %v3378 = vmax.f32 %v3377, %v2599
    %v3379 = vmax.f32 %v3378, %v2601
    %v3380 = vmax.f32 %v3379, %v2604
    %v3381 = vmax.f32 %v3380, %v2606
    %v3382 = vmax.f32 %v3381, %v2609
    %v3383 = vmax.f32 %v3382, %v2611
    %v3384 = vmax.f32 %v3383, %v2614
    %v3385 = vmax.f32 %v3384, %v2616
    %v3386 = vmax.f32 %v3385, %v2619
    %v3387 = vmax.f32 %v3386, %v2621
    %v3388 = vmax.f32 %v3387, %v2624
    %v3389 = vmax.f32 %v3388, %v2626
    %v3390 = vmax.f32 %v3389, %v2629
    %v3391 = vmax.f32 %v3390, %v2631
    %v3392 = vmax.f32 %v3391, %v2634
    %v3393 = vmax.f32 %v3392, %v2636
    %v3394 = vmax.f32 %v3393, %v2639
    %v3395 = vmax.f32 %v3394, %v2641
    %v3396 = vmax.f32 %v3395, %v2644
    %v3397 = vmax.f32 %v3396, %v2646
    %v3398 = vrot.slane %v3397, 4
    %v3399 = vmax.f32 %v3397, %v3398
    %v3400 = vrot.slane %v3399, 2
    %v3401 = vmax.f32 %v3399, %v3400
    %v3402 = vrot.slane %v3401, 1
    %v3403 = vmax.f32 %v3401, %v3402
    %v3404 = vmax.f32 %v2658, %v2660
    %v3405 = vmax.f32 %v3404, %v2663
    %v3406 = vmax.f32 %v3405, %v2665
    %v3407 = vmax.f32 %v3406, %v2668
    %v3408 = vmax.f32 %v3407, %v2670
    %v3409 = vmax.f32 %v3408, %v2673
    %v3410 = vmax.f32 %v3409, %v2675
    %v3411 = vmax.f32 %v3410, %v2678
    %v3412 = vmax.f32 %v3411, %v2680
    %v3413 = vmax.f32 %v3412, %v2683
    %v3414 = vmax.f32 %v3413, %v2685
    %v3415 = vmax.f32 %v3414, %v2688
    %v3416 = vmax.f32 %v3415, %v2690
    %v3417 = vmax.f32 %v3416, %v2693
    %v3418 = vmax.f32 %v3417, %v2695
    %v3419 = vmax.f32 %v3418, %v2698
    %v3420 = vmax.f32 %v3419, %v2700
    %v3421 = vmax.f32 %v3420, %v2703
    %v3422 = vmax.f32 %v3421, %v2705
    %v3423 = vmax.f32 %v3422, %v2708
    %v3424 = vmax.f32 %v3423, %v2710
    %v3425 = vmax.f32 %v3424, %v2713
    %v3426 = vmax.f32 %v3425, %v2715
    %v3427 = vmax.f32 %v3426, %v2718
    %v3428 = vmax.f32 %v3427, %v2720
    %v3429 = vmax.f32 %v3428, %v2723
    %v3430 = vmax.f32 %v3429, %v2725
    %v3431 = vmax.f32 %v3430, %v2728
    %v3432 = vmax.f32 %v3431, %v2730
    %v3433 = vmax.f32 %v3432, %v2733
    %v3434 = vmax.f32 %v3433, %v2735
    %v3435 = vrot.slane %v3434, 4
    %v3436 = vmax.f32 %v3434, %v3435
    %v3437 = vrot.slane %v3436, 2
    %v3438 = vmax.f32 %v3436, %v3437
    %v3439 = vrot.slane %v3438, 1
    %v3440 = vmax.f32 %v3438, %v3439
    %v3441 = vmax.f32 %v2747, %v2749
    %v3442 = vmax.f32 %v3441, %v2752
    %v3443 = vmax.f32 %v3442, %v2754
    %v3444 = vmax.f32 %v3443, %v2757
    %v3445 = vmax.f32 %v3444, %v2759
    %v3446 = vmax.f32 %v3445, %v2762
    %v3447 = vmax.f32 %v3446, %v2764
    %v3448 = vmax.f32 %v3447, %v2767
    %v3449 = vmax.f32 %v3448, %v2769
    %v3450 = vmax.f32 %v3449, %v2772
    %v3451 = vmax.f32 %v3450, %v2774
    %v3452 = vmax.f32 %v3451, %v2777
    %v3453 = vmax.f32 %v3452, %v2779
    %v3454 = vmax.f32 %v3453, %v2782
    %v3455 = vmax.f32 %v3454, %v2784
    %v3456 = vmax.f32 %v3455, %v2787
    %v3457 = vmax.f32 %v3456, %v2789
    %v3458 = vmax.f32 %v3457, %v2792
    %v3459 = vmax.f32 %v3458, %v2794
    %v3460 = vmax.f32 %v3459, %v2797
    %v3461 = vmax.f32 %v3460, %v2799
    %v3462 = vmax.f32 %v3461, %v2802
    %v3463 = vmax.f32 %v3462, %v2804
    %v3464 = vmax.f32 %v3463, %v2807
    %v3465 = vmax.f32 %v3464, %v2809
    %v3466 = vmax.f32 %v3465, %v2812
    %v3467 = vmax.f32 %v3466, %v2814
    %v3468 = vmax.f32 %v3467, %v2817
    %v3469 = vmax.f32 %v3468, %v2819
    %v3470 = vmax.f32 %v3469, %v2822
    %v3471 = vmax.f32 %v3470, %v2824
    %v3472 = vrot.slane %v3471, 4
    %v3473 = vmax.f32 %v3471, %v3472
    %v3474 = vrot.slane %v3473, 2
    %v3475 = vmax.f32 %v3473, %v3474
    %v3476 = vrot.slane %v3475, 1
    %v3477 = vmax.f32 %v3475, %v3476
    %v3478 = vmax.f32 %v2836, %v2838
    %v3479 = vmax.f32 %v3478, %v2841
    %v3480 = vmax.f32 %v3479, %v2843
    %v3481 = vmax.f32 %v3480, %v2846
    %v3482 = vmax.f32 %v3481, %v2848
    %v3483 = vmax.f32 %v3482, %v2851
    %v3484 = vmax.f32 %v3483, %v2853
    %v3485 = vmax.f32 %v3484, %v2856
    %v3486 = vmax.f32 %v3485, %v2858
    %v3487 = vmax.f32 %v3486, %v2861
    %v3488 = vmax.f32 %v3487, %v2863
    %v3489 = vmax.f32 %v3488, %v2866
    %v3490 = vmax.f32 %v3489, %v2868
    %v3491 = vmax.f32 %v3490, %v2871
    %v3492 = vmax.f32 %v3491, %v2873
    %v3493 = vmax.f32 %v3492, %v2876
    %v3494 = vmax.f32 %v3493, %v2878
    %v3495 = vmax.f32 %v3494, %v2881
    %v3496 = vmax.f32 %v3495, %v2883
    %v3497 = vmax.f32 %v3496, %v2886
    %v3498 = vmax.f32 %v3497, %v2888
    %v3499 = vmax.f32 %v3498, %v2891
    %v3500 = vmax.f32 %v3499, %v2893
    %v3501 = vmax.f32 %v3500, %v2896
    %v3502 = vmax.f32 %v3501, %v2898
    %v3503 = vmax.f32 %v3502, %v2901
    %v3504 = vmax.f32 %v3503, %v2903
    %v3505 = vmax.f32 %v3504, %v2906
    %v3506 = vmax.f32 %v3505, %v2908
    %v3507 = vmax.f32 %v3506, %v2911
    %v3508 = vmax.f32 %v3507, %v2913
    %v3509 = vrot.slane %v3508, 4
    %v3510 = vmax.f32 %v3508, %v3509
    %v3511 = vrot.slane %v3510, 2
    %v3512 = vmax.f32 %v3510, %v3511
    %v3513 = vrot.slane %v3512, 1
    %v3514 = vmax.f32 %v3512, %v3513
    %v3515 = vmax.f32 %v2925, %v2927
    %v3516 = vmax.f32 %v3515, %v2930
    %v3517 = vmax.f32 %v3516, %v2932
    %v3518 = vmax.f32 %v3517, %v2935
    %v3519 = vmax.f32 %v3518, %v2937
    %v3520 = vmax.f32 %v3519, %v2940
    %v3521 = vmax.f32 %v3520, %v2942
    %v3522 = vmax.f32 %v3521, %v2945
    %v3523 = vmax.f32 %v3522, %v2947
    %v3524 = vmax.f32 %v3523, %v2950
    %v3525 = vmax.f32 %v3524, %v2952
    %v3526 = vmax.f32 %v3525, %v2955
    %v3527 = vmax.f32 %v3526, %v2957
    %v3528 = vmax.f32 %v3527, %v2960
    %v3529 = vmax.f32 %v3528, %v2962
    %v3530 = vmax.f32 %v3529, %v2965
    %v3531 = vmax.f32 %v3530, %v2967
    %v3532 = vmax.f32 %v3531, %v2970
    %v3533 = vmax.f32 %v3532, %v2972
    %v3534 = vmax.f32 %v3533, %v2975
    %v3535 = vmax.f32 %v3534, %v2977
    %v3536 = vmax.f32 %v3535, %v2980
    %v3537 = vmax.f32 %v3536, %v2982
    %v3538 = vmax.f32 %v3537, %v2985
    %v3539 = vmax.f32 %v3538, %v2987
    %v3540 = vmax.f32 %v3539, %v2990
    %v3541 = vmax.f32 %v3540, %v2992
    %v3542 = vmax.f32 %v3541, %v2995
    %v3543 = vmax.f32 %v3542, %v2997
    %v3544 = vmax.f32 %v3543, %v3000
    %v3545 = vmax.f32 %v3544, %v3002
    %v3546 = vrot.slane %v3545, 4
    %v3547 = vmax.f32 %v3545, %v3546
    %v3548 = vrot.slane %v3547, 2
    %v3549 = vmax.f32 %v3547, %v3548
    %v3550 = vrot.slane %v3549, 1
    %v3551 = vmax.f32 %v3549, %v3550
    %v3552 = vmax.f32 %v3014, %v3016
    %v3553 = vmax.f32 %v3552, %v3019
    %v3554 = vmax.f32 %v3553, %v3021
    %v3555 = vmax.f32 %v3554, %v3024
    %v3556 = vmax.f32 %v3555, %v3026
    %v3557 = vmax.f32 %v3556, %v3029
    %v3558 = vmax.f32 %v3557, %v3031
    %v3559 = vmax.f32 %v3558, %v3034
    %v3560 = vmax.f32 %v3559, %v3036
    %v3561 = vmax.f32 %v3560, %v3039
    %v3562 = vmax.f32 %v3561, %v3041
    %v3563 = vmax.f32 %v3562, %v3044
    %v3564 = vmax.f32 %v3563, %v3046
    %v3565 = vmax.f32 %v3564, %v3049
    %v3566 = vmax.f32 %v3565, %v3051
    %v3567 = vmax.f32 %v3566, %v3054
    %v3568 = vmax.f32 %v3567, %v3056
    %v3569 = vmax.f32 %v3568, %v3059
    %v3570 = vmax.f32 %v3569, %v3061
    %v3571 = vmax.f32 %v3570, %v3064
    %v3572 = vmax.f32 %v3571, %v3066
    %v3573 = vmax.f32 %v3572, %v3069
    %v3574 = vmax.f32 %v3573, %v3071
    %v3575 = vmax.f32 %v3574, %v3074
    %v3576 = vmax.f32 %v3575, %v3076
    %v3577 = vmax.f32 %v3576, %v3079
    %v3578 = vmax.f32 %v3577, %v3081
    %v3579 = vmax.f32 %v3578, %v3084
    %v3580 = vmax.f32 %v3579, %v3086
    %v3581 = vmax.f32 %v3580, %v3089
    %v3582 = vmax.f32 %v3581, %v3091
    %v3583 = vrot.slane %v3582, 4
    %v3584 = vmax.f32 %v3582, %v3583
    %v3585 = vrot.slane %v3584, 2
    %v3586 = vmax.f32 %v3584, %v3585
    %v3587 = vrot.slane %v3586, 1
    %v3588 = vmax.f32 %v3586, %v3587
    %v3589 = vmax.f32 %v3103, %v3105
    %v3590 = vmax.f32 %v3589, %v3108
    %v3591 = vmax.f32 %v3590, %v3110
    %v3592 = vmax.f32 %v3591, %v3113
    %v3593 = vmax.f32 %v3592, %v3115
    %v3594 = vmax.f32 %v3593, %v3118
    %v3595 = vmax.f32 %v3594, %v3120
    %v3596 = vmax.f32 %v3595, %v3123
    %v3597 = vmax.f32 %v3596, %v3125
    %v3598 = vmax.f32 %v3597, %v3128
    %v3599 = vmax.f32 %v3598, %v3130
    %v3600 = vmax.f32 %v3599, %v3133
    %v3601 = vmax.f32 %v3600, %v3135
    %v3602 = vmax.f32 %v3601, %v3138
    %v3603 = vmax.f32 %v3602, %v3140
    %v3604 = vmax.f32 %v3603, %v3143
    %v3605 = vmax.f32 %v3604, %v3145
    %v3606 = vmax.f32 %v3605, %v3148
    %v3607 = vmax.f32 %v3606, %v3150
    %v3608 = vmax.f32 %v3607, %v3153
    %v3609 = vmax.f32 %v3608, %v3155
    %v3610 = vmax.f32 %v3609, %v3158
    %v3611 = vmax.f32 %v3610, %v3160
    %v3612 = vmax.f32 %v3611, %v3163
    %v3613 = vmax.f32 %v3612, %v3165
    %v3614 = vmax.f32 %v3613, %v3168
    %v3615 = vmax.f32 %v3614, %v3170
    %v3616 = vmax.f32 %v3615, %v3173
    %v3617 = vmax.f32 %v3616, %v3175
    %v3618 = vmax.f32 %v3617, %v3178
    %v3619 = vmax.f32 %v3618, %v3180
    %v3620 = vrot.slane %v3619, 4
    %v3621 = vmax.f32 %v3619, %v3620
    %v3622 = vrot.slane %v3621, 2
    %v3623 = vmax.f32 %v3621, %v3622
    %v3624 = vrot.slane %v3623, 1
    %v3625 = vmax.f32 %v3623, %v3624
    %v3626 = vsub.f32 %v2124, %v3218
    %v3627 = vsub.f32 %v2213, %v3255
    %v3628 = vsub.f32 %v2302, %v3292
    %v3629 = vsub.f32 %v2391, %v3329
    %v3630 = vsub.f32 %v2480, %v3366
    %v3631 = vsub.f32 %v2569, %v3403
    %v3632 = vsub.f32 %v2658, %v3440
    %v3633 = vsub.f32 %v2747, %v3477
    %v3634 = vsub.f32 %v2836, %v3514
    %v3635 = vsub.f32 %v2925, %v3551
    %v3636 = vsub.f32 %v3014, %v3588
    %v3637 = vsub.f32 %v3103, %v3625
    %v3638 = vsub.f32 %v2126, %v3218
    %v3639 = vsub.f32 %v2215, %v3255
    %v3640 = vsub.f32 %v2304, %v3292
    %v3641 = vsub.f32 %v2393, %v3329
    %v3642 = vsub.f32 %v2482, %v3366
    %v3643 = vsub.f32 %v2571, %v3403
    %v3644 = vsub.f32 %v2660, %v3440
    %v3645 = vsub.f32 %v2749, %v3477
    %v3646 = vsub.f32 %v2838, %v3514
    %v3647 = vsub.f32 %v2927, %v3551
    %v3648 = vsub.f32 %v3016, %v3588
    %v3649 = vsub.f32 %v3105, %v3625
    %v3650 = vsub.f32 %v2129, %v3218
    %v3651 = vsub.f32 %v2218, %v3255
    %v3652 = vsub.f32 %v2307, %v3292
    %v3653 = vsub.f32 %v2396, %v3329
    %v3654 = vsub.f32 %v2485, %v3366
    %v3655 = vsub.f32 %v2574, %v3403
    %v3656 = vsub.f32 %v2663, %v3440
    %v3657 = vsub.f32 %v2752, %v3477
    %v3658 = vsub.f32 %v2841, %v3514
    %v3659 = vsub.f32 %v2930, %v3551
    %v3660 = vsub.f32 %v3019, %v3588
    %v3661 = vsub.f32 %v3108, %v3625
    %v3662 = vsub.f32 %v2131, %v3218
    %v3663 = vsub.f32 %v2220, %v3255
    %v3664 = vsub.f32 %v2309, %v3292
    %v3665 = vsub.f32 %v2398, %v3329
    %v3666 = vsub.f32 %v2487, %v3366
    %v3667 = vsub.f32 %v2576, %v3403
    %v3668 = vsub.f32 %v2665, %v3440
    %v3669 = vsub.f32 %v2754, %v3477
    %v3670 = vsub.f32 %v2843, %v3514
    %v3671 = vsub.f32 %v2932, %v3551
    %v3672 = vsub.f32 %v3021, %v3588
    %v3673 = vsub.f32 %v3110, %v3625
    %v3674 = vsub.f32 %v2134, %v3218
    %v3675 = vsub.f32 %v2223, %v3255
    %v3676 = vsub.f32 %v2312, %v3292
    %v3677 = vsub.f32 %v2401, %v3329
    %v3678 = vsub.f32 %v2490, %v3366
    %v3679 = vsub.f32 %v2579, %v3403
    %v3680 = vsub.f32 %v2668, %v3440
    %v3681 = vsub.f32 %v2757, %v3477
    %v3682 = vsub.f32 %v2846, %v3514
    %v3683 = vsub.f32 %v2935, %v3551
    %v3684 = vsub.f32 %v3024, %v3588
    %v3685 = vsub.f32 %v3113, %v3625
    %v3686 = vsub.f32 %v2136, %v3218
    %v3687 = vsub.f32 %v2225, %v3255
    %v3688 = vsub.f32 %v2314, %v3292
    %v3689 = vsub.f32 %v2403, %v3329
    %v3690 = vsub.f32 %v2492, %v3366
    %v3691 = vsub.f32 %v2581, %v3403
    %v3692 = vsub.f32 %v2670, %v3440
    %v3693 = vsub.f32 %v2759, %v3477
    %v3694 = vsub.f32 %v2848, %v3514
    %v3695 = vsub.f32 %v2937, %v3551
    %v3696 = vsub.f32 %v3026, %v3588
    %v3697 = vsub.f32 %v3115, %v3625
    %v3698 = vsub.f32 %v2139, %v3218
    %v3699 = vsub.f32 %v2228, %v3255
    %v3700 = vsub.f32 %v2317, %v3292
    %v3701 = vsub.f32 %v2406, %v3329
    %v3702 = vsub.f32 %v2495, %v3366
    %v3703 = vsub.f32 %v2584, %v3403
    %v3704 = vsub.f32 %v2673, %v3440
    %v3705 = vsub.f32 %v2762, %v3477
    %v3706 = vsub.f32 %v2851, %v3514
    %v3707 = vsub.f32 %v2940, %v3551
    %v3708 = vsub.f32 %v3029, %v3588
    %v3709 = vsub.f32 %v3118, %v3625
    %v3710 = vsub.f32 %v2141, %v3218
    %v3711 = vsub.f32 %v2230, %v3255
    %v3712 = vsub.f32 %v2319, %v3292
    %v3713 = vsub.f32 %v2408, %v3329
    %v3714 = vsub.f32 %v2497, %v3366
    %v3715 = vsub.f32 %v2586, %v3403
    %v3716 = vsub.f32 %v2675, %v3440
    %v3717 = vsub.f32 %v2764, %v3477
    %v3718 = vsub.f32 %v2853, %v3514
    %v3719 = vsub.f32 %v2942, %v3551
    %v3720 = vsub.f32 %v3031, %v3588
    %v3721 = vsub.f32 %v3120, %v3625
    %v3722 = vsub.f32 %v2144, %v3218
    %v3723 = vsub.f32 %v2233, %v3255
    %v3724 = vsub.f32 %v2322, %v3292
    %v3725 = vsub.f32 %v2411, %v3329
    %v3726 = vsub.f32 %v2500, %v3366
    %v3727 = vsub.f32 %v2589, %v3403
    %v3728 = vsub.f32 %v2678, %v3440
    %v3729 = vsub.f32 %v2767, %v3477
    %v3730 = vsub.f32 %v2856, %v3514
    %v3731 = vsub.f32 %v2945, %v3551
    %v3732 = vsub.f32 %v3034, %v3588
    %v3733 = vsub.f32 %v3123, %v3625
    %v3734 = vsub.f32 %v2146, %v3218
    %v3735 = vsub.f32 %v2235, %v3255
    %v3736 = vsub.f32 %v2324, %v3292
    %v3737 = vsub.f32 %v2413, %v3329
    %v3738 = vsub.f32 %v2502, %v3366
    %v3739 = vsub.f32 %v2591, %v3403
    %v3740 = vsub.f32 %v2680, %v3440
    %v3741 = vsub.f32 %v2769, %v3477
    %v3742 = vsub.f32 %v2858, %v3514
    %v3743 = vsub.f32 %v2947, %v3551
    %v3744 = vsub.f32 %v3036, %v3588
    %v3745 = vsub.f32 %v3125, %v3625
    %v3746 = vsub.f32 %v2149, %v3218
    %v3747 = vsub.f32 %v2238, %v3255
    %v3748 = vsub.f32 %v2327, %v3292
    %v3749 = vsub.f32 %v2416, %v3329
    %v3750 = vsub.f32 %v2505, %v3366
    %v3751 = vsub.f32 %v2594, %v3403
    %v3752 = vsub.f32 %v2683, %v3440
    %v3753 = vsub.f32 %v2772, %v3477
    %v3754 = vsub.f32 %v2861, %v3514
    %v3755 = vsub.f32 %v2950, %v3551
    %v3756 = vsub.f32 %v3039, %v3588
    %v3757 = vsub.f32 %v3128, %v3625
    %v3758 = vsub.f32 %v2151, %v3218
    %v3759 = vsub.f32 %v2240, %v3255
    %v3760 = vsub.f32 %v2329, %v3292
    %v3761 = vsub.f32 %v2418, %v3329
    %v3762 = vsub.f32 %v2507, %v3366
    %v3763 = vsub.f32 %v2596, %v3403
    %v3764 = vsub.f32 %v2685, %v3440
    %v3765 = vsub.f32 %v2774, %v3477
    %v3766 = vsub.f32 %v2863, %v3514
    %v3767 = vsub.f32 %v2952, %v3551
    %v3768 = vsub.f32 %v3041, %v3588
    %v3769 = vsub.f32 %v3130, %v3625
    %v3770 = vsub.f32 %v2154, %v3218
    %v3771 = vsub.f32 %v2243, %v3255
    %v3772 = vsub.f32 %v2332, %v3292
    %v3773 = vsub.f32 %v2421, %v3329
    %v3774 = vsub.f32 %v2510, %v3366
    %v3775 = vsub.f32 %v2599, %v3403
    %v3776 = vsub.f32 %v2688, %v3440
    %v3777 = vsub.f32 %v2777, %v3477
    %v3778 = vsub.f32 %v2866, %v3514
    %v3779 = vsub.f32 %v2955, %v3551
    %v3780 = vsub.f32 %v3044, %v3588
    %v3781 = vsub.f32 %v3133, %v3625
    %v3782 = vsub.f32 %v2156, %v3218
    %v3783 = vsub.f32 %v2245, %v3255
    %v3784 = vsub.f32 %v2334, %v3292
    %v3785 = vsub.f32 %v2423, %v3329
    %v3786 = vsub.f32 %v2512, %v3366
    %v3787 = vsub.f32 %v2601, %v3403
    %v3788 = vsub.f32 %v2690, %v3440
    %v3789 = vsub.f32 %v2779, %v3477
    %v3790 = vsub.f32 %v2868, %v3514
    %v3791 = vsub.f32 %v2957, %v3551
    %v3792 = vsub.f32 %v3046, %v3588
    %v3793 = vsub.f32 %v3135, %v3625
    %v3794 = vsub.f32 %v2159, %v3218
    %v3795 = vsub.f32 %v2248, %v3255
    %v3796 = vsub.f32 %v2337, %v3292
    %v3797 = vsub.f32 %v2426, %v3329
    %v3798 = vsub.f32 %v2515, %v3366
    %v3799 = vsub.f32 %v2604, %v3403
    %v3800 = vsub.f32 %v2693, %v3440
    %v3801 = vsub.f32 %v2782, %v3477
    %v3802 = vsub.f32 %v2871, %v3514
    %v3803 = vsub.f32 %v2960, %v3551
    %v3804 = vsub.f32 %v3049, %v3588
    %v3805 = vsub.f32 %v3138, %v3625
    %v3806 = vsub.f32 %v2161, %v3218
    %v3807 = vsub.f32 %v2250, %v3255
    %v3808 = vsub.f32 %v2339, %v3292
    %v3809 = vsub.f32 %v2428, %v3329
    %v3810 = vsub.f32 %v2517, %v3366
    %v3811 = vsub.f32 %v2606, %v3403
    %v3812 = vsub.f32 %v2695, %v3440
    %v3813 = vsub.f32 %v2784, %v3477
    %v3814 = vsub.f32 %v2873, %v3514
    %v3815 = vsub.f32 %v2962, %v3551
    %v3816 = vsub.f32 %v3051, %v3588
    %v3817 = vsub.f32 %v3140, %v3625
    %v3818 = vsub.f32 %v2164, %v3218
    %v3819 = vsub.f32 %v2253, %v3255
    %v3820 = vsub.f32 %v2342, %v3292
    %v3821 = vsub.f32 %v2431, %v3329
    %v3822 = vsub.f32 %v2520, %v3366
    %v3823 = vsub.f32 %v2609, %v3403
    %v3824 = vsub.f32 %v2698, %v3440
    %v3825 = vsub.f32 %v2787, %v3477
    %v3826 = vsub.f32 %v2876, %v3514
    %v3827 = vsub.f32 %v2965, %v3551
    %v3828 = vsub.f32 %v3054, %v3588
    %v3829 = vsub.f32 %v3143, %v3625
    %v3830 = vsub.f32 %v2166, %v3218
    %v3831 = vsub.f32 %v2255, %v3255
    %v3832 = vsub.f32 %v2344, %v3292
    %v3833 = vsub.f32 %v2433, %v3329
    %v3834 = vsub.f32 %v2522, %v3366
    %v3835 = vsub.f32 %v2611, %v3403
    %v3836 = vsub.f32 %v2700, %v3440
    %v3837 = vsub.f32 %v2789, %v3477
    %v3838 = vsub.f32 %v2878, %v3514
    %v3839 = vsub.f32 %v2967, %v3551
    %v3840 = vsub.f32 %v3056, %v3588
    %v3841 = vsub.f32 %v3145, %v3625
    %v3842 = vsub.f32 %v2169, %v3218
    %v3843 = vsub.f32 %v2258, %v3255
    %v3844 = vsub.f32 %v2347, %v3292
    %v3845 = vsub.f32 %v2436, %v3329
    %v3846 = vsub.f32 %v2525, %v3366
    %v3847 = vsub.f32 %v2614, %v3403
    %v3848 = vsub.f32 %v2703, %v3440
    %v3849 = vsub.f32 %v2792, %v3477
    %v3850 = vsub.f32 %v2881, %v3514
    %v3851 = vsub.f32 %v2970, %v3551
    %v3852 = vsub.f32 %v3059, %v3588
    %v3853 = vsub.f32 %v3148, %v3625
    %v3854 = vsub.f32 %v2171, %v3218
    %v3855 = vsub.f32 %v2260, %v3255
    %v3856 = vsub.f32 %v2349, %v3292
    %v3857 = vsub.f32 %v2438, %v3329
    %v3858 = vsub.f32 %v2527, %v3366
    %v3859 = vsub.f32 %v2616, %v3403
    %v3860 = vsub.f32 %v2705, %v3440
    %v3861 = vsub.f32 %v2794, %v3477
    %v3862 = vsub.f32 %v2883, %v3514
    %v3863 = vsub.f32 %v2972, %v3551
    %v3864 = vsub.f32 %v3061, %v3588
    %v3865 = vsub.f32 %v3150, %v3625
    %v3866 = vsub.f32 %v2174, %v3218
    %v3867 = vsub.f32 %v2263, %v3255
    %v3868 = vsub.f32 %v2352, %v3292
    %v3869 = vsub.f32 %v2441, %v3329
    %v3870 = vsub.f32 %v2530, %v3366
    %v3871 = vsub.f32 %v2619, %v3403
    %v3872 = vsub.f32 %v2708, %v3440
    %v3873 = vsub.f32 %v2797, %v3477
    %v3874 = vsub.f32 %v2886, %v3514
    %v3875 = vsub.f32 %v2975, %v3551
    %v3876 = vsub.f32 %v3064, %v3588
    %v3877 = vsub.f32 %v3153, %v3625
    %v3878 = vsub.f32 %v2176, %v3218
    %v3879 = vsub.f32 %v2265, %v3255
    %v3880 = vsub.f32 %v2354, %v3292
    %v3881 = vsub.f32 %v2443, %v3329
    %v3882 = vsub.f32 %v2532, %v3366
    %v3883 = vsub.f32 %v2621, %v3403
    %v3884 = vsub.f32 %v2710, %v3440
    %v3885 = vsub.f32 %v2799, %v3477
    %v3886 = vsub.f32 %v2888, %v3514
    %v3887 = vsub.f32 %v2977, %v3551
    %v3888 = vsub.f32 %v3066, %v3588
    %v3889 = vsub.f32 %v3155, %v3625
    %v3890 = vsub.f32 %v2179, %v3218
    %v3891 = vsub.f32 %v2268, %v3255
    %v3892 = vsub.f32 %v2357, %v3292
    %v3893 = vsub.f32 %v2446, %v3329
    %v3894 = vsub.f32 %v2535, %v3366
    %v3895 = vsub.f32 %v2624, %v3403
    %v3896 = vsub.f32 %v2713, %v3440
    %v3897 = vsub.f32 %v2802, %v3477
    %v3898 = vsub.f32 %v2891, %v3514
    %v3899 = vsub.f32 %v2980, %v3551
    %v3900 = vsub.f32 %v3069, %v3588
    %v3901 = vsub.f32 %v3158, %v3625
    %v3902 = vsub.f32 %v2181, %v3218
    %v3903 = vsub.f32 %v2270, %v3255
    %v3904 = vsub.f32 %v2359, %v3292
    %v3905 = vsub.f32 %v2448, %v3329
    %v3906 = vsub.f32 %v2537, %v3366
    %v3907 = vsub.f32 %v2626, %v3403
    %v3908 = vsub.f32 %v2715, %v3440
    %v3909 = vsub.f32 %v2804, %v3477
    %v3910 = vsub.f32 %v2893, %v3514
    %v3911 = vsub.f32 %v2982, %v3551
    %v3912 = vsub.f32 %v3071, %v3588
    %v3913 = vsub.f32 %v3160, %v3625
    %v3914 = vsub.f32 %v2184, %v3218
    %v3915 = vsub.f32 %v2273, %v3255
    %v3916 = vsub.f32 %v2362, %v3292
    %v3917 = vsub.f32 %v2451, %v3329
    %v3918 = vsub.f32 %v2540, %v3366
    %v3919 = vsub.f32 %v2629, %v3403
    %v3920 = vsub.f32 %v2718, %v3440
    %v3921 = vsub.f32 %v2807, %v3477
    %v3922 = vsub.f32 %v2896, %v3514
    %v3923 = vsub.f32 %v2985, %v3551
    %v3924 = vsub.f32 %v3074, %v3588
    %v3925 = vsub.f32 %v3163, %v3625
    %v3926 = vsub.f32 %v2186, %v3218
    %v3927 = vsub.f32 %v2275, %v3255
    %v3928 = vsub.f32 %v2364, %v3292
    %v3929 = vsub.f32 %v2453, %v3329
    %v3930 = vsub.f32 %v2542, %v3366
    %v3931 = vsub.f32 %v2631, %v3403
    %v3932 = vsub.f32 %v2720, %v3440
    %v3933 = vsub.f32 %v2809, %v3477
    %v3934 = vsub.f32 %v2898, %v3514
    %v3935 = vsub.f32 %v2987, %v3551
    %v3936 = vsub.f32 %v3076, %v3588
    %v3937 = vsub.f32 %v3165, %v3625
    %v3938 = vsub.f32 %v2189, %v3218
    %v3939 = vsub.f32 %v2278, %v3255
    %v3940 = vsub.f32 %v2367, %v3292
    %v3941 = vsub.f32 %v2456, %v3329
    %v3942 = vsub.f32 %v2545, %v3366
    %v3943 = vsub.f32 %v2634, %v3403
    %v3944 = vsub.f32 %v2723, %v3440
    %v3945 = vsub.f32 %v2812, %v3477
    %v3946 = vsub.f32 %v2901, %v3514
    %v3947 = vsub.f32 %v2990, %v3551
    %v3948 = vsub.f32 %v3079, %v3588
    %v3949 = vsub.f32 %v3168, %v3625
    %v3950 = vsub.f32 %v2191, %v3218
    %v3951 = vsub.f32 %v2280, %v3255
    %v3952 = vsub.f32 %v2369, %v3292
    %v3953 = vsub.f32 %v2458, %v3329
    %v3954 = vsub.f32 %v2547, %v3366
    %v3955 = vsub.f32 %v2636, %v3403
    %v3956 = vsub.f32 %v2725, %v3440
    %v3957 = vsub.f32 %v2814, %v3477
    %v3958 = vsub.f32 %v2903, %v3514
    %v3959 = vsub.f32 %v2992, %v3551
    %v3960 = vsub.f32 %v3081, %v3588
    %v3961 = vsub.f32 %v3170, %v3625
    %v3962 = vsub.f32 %v2194, %v3218
    %v3963 = vsub.f32 %v2283, %v3255
    %v3964 = vsub.f32 %v2372, %v3292
    %v3965 = vsub.f32 %v2461, %v3329
    %v3966 = vsub.f32 %v2550, %v3366
    %v3967 = vsub.f32 %v2639, %v3403
    %v3968 = vsub.f32 %v2728, %v3440
    %v3969 = vsub.f32 %v2817, %v3477
    %v3970 = vsub.f32 %v2906, %v3514
    %v3971 = vsub.f32 %v2995, %v3551
    %v3972 = vsub.f32 %v3084, %v3588
    %v3973 = vsub.f32 %v3173, %v3625
    %v3974 = vsub.f32 %v2196, %v3218
    %v3975 = vsub.f32 %v2285, %v3255
    %v3976 = vsub.f32 %v2374, %v3292
    %v3977 = vsub.f32 %v2463, %v3329
    %v3978 = vsub.f32 %v2552, %v3366
    %v3979 = vsub.f32 %v2641, %v3403
    %v3980 = vsub.f32 %v2730, %v3440
    %v3981 = vsub.f32 %v2819, %v3477
    %v3982 = vsub.f32 %v2908, %v3514
    %v3983 = vsub.f32 %v2997, %v3551
    %v3984 = vsub.f32 %v3086, %v3588
    %v3985 = vsub.f32 %v3175, %v3625
    %v3986 = vsub.f32 %v2199, %v3218
    %v3987 = vsub.f32 %v2288, %v3255
    %v3988 = vsub.f32 %v2377, %v3292
    %v3989 = vsub.f32 %v2466, %v3329
    %v3990 = vsub.f32 %v2555, %v3366
    %v3991 = vsub.f32 %v2644, %v3403
    %v3992 = vsub.f32 %v2733, %v3440
    %v3993 = vsub.f32 %v2822, %v3477
    %v3994 = vsub.f32 %v2911, %v3514
    %v3995 = vsub.f32 %v3000, %v3551
    %v3996 = vsub.f32 %v3089, %v3588
    %v3997 = vsub.f32 %v3178, %v3625
    %v3998 = vsub.f32 %v2201, %v3218
    %v3999 = vsub.f32 %v2290, %v3255
    %v4000 = vsub.f32 %v2379, %v3292
    %v4001 = vsub.f32 %v2468, %v3329
    %v4002 = vsub.f32 %v2557, %v3366
    %v4003 = vsub.f32 %v2646, %v3403
    %v4004 = vsub.f32 %v2735, %v3440
    %v4005 = vsub.f32 %v2824, %v3477
    %v4006 = vsub.f32 %v2913, %v3514
    %v4007 = vsub.f32 %v3002, %v3551
    %v4008 = vsub.f32 %v3091, %v3588
    %v4009 = vsub.f32 %v3180, %v3625
    %v4010 = vmul.f32 %v3626, 1.442695
    %v4011 = vpow.pop %v4010
    %v4012 = vmul.f32 %v3627, 1.442695
    %v4013 = vpow.pop %v4012
    %v4014 = vmul.f32 %v3628, 1.442695
    %v4015 = vpow.pop %v4014
    %v4016 = vmul.f32 %v3629, 1.442695
    %v4017 = vpow.pop %v4016
    %v4018 = vmul.f32 %v3630, 1.442695
    %v4019 = vpow.pop %v4018
    %v4020 = vmul.f32 %v3631, 1.442695
    %v4021 = vpow.pop %v4020
    %v4022 = vmul.f32 %v3632, 1.442695
    %v4023 = vpow.pop %v4022
    %v4024 = vmul.f32 %v3633, 1.442695
    %v4025 = vpow.pop %v4024
    %v4026 = vmul.f32 %v3634, 1.442695
    %v4027 = vpow.pop %v4026
    %v4028 = vmul.f32 %v3635, 1.442695
    %v4029 = vpow.pop %v4028
    %v4030 = vmul.f32 %v3636, 1.442695
    %v4031 = vpow.pop %v4030
    %v4032 = vmul.f32 %v3637, 1.442695
    %v4033 = vpow.pop %v4032
    %v4034 = vmul.f32 %v3638, 1.442695
    %v4035 = vpow.pop %v4034
    %v4036 = vmul.f32 %v3639, 1.442695
    %v4037 = vpow.pop %v4036
    %v4038 = vmul.f32 %v3640, 1.442695
    %v4039 = vpow.pop %v4038
    %v4040 = vmul.f32 %v3641, 1.442695
    %v4041 = vpow.pop %v4040
    %v4042 = vmul.f32 %v3642, 1.442695
    %v4043 = vpow.pop %v4042
    %v4044 = vmul.f32 %v3643, 1.442695
    %v4045 = vpow.pop %v4044
    %v4046 = vmul.f32 %v3644, 1.442695
    %v4047 = vpow.pop %v4046
    %v4048 = vmul.f32 %v3645, 1.442695
    %v4049 = vpow.pop %v4048
    %v4050 = vmul.f32 %v3646, 1.442695
    %v4051 = vpow.pop %v4050
    %v4052 = vmul.f32 %v3647, 1.442695
    %v4053 = vpow.pop %v4052
    %v4054 = vmul.f32 %v3648, 1.442695
    %v4055 = vpow.pop %v4054
    %v4056 = vmul.f32 %v3649, 1.442695
    %v4057 = vpow.pop %v4056
    %v4058 = vmul.f32 %v3650, 1.442695
    %v4059 = vpow.pop %v4058
    %v4060 = vmul.f32 %v3651, 1.442695
    %v4061 = vpow.pop %v4060
    %v4062 = vmul.f32 %v3652, 1.442695
    %v4063 = vpow.pop %v4062
    %v4064 = vmul.f32 %v3653, 1.442695
    %v4065 = vpow.pop %v4064
    %v4066 = vmul.f32 %v3654, 1.442695
    %v4067 = vpow.pop %v4066
    %v4068 = vmul.f32 %v3655, 1.442695
    %v4069 = vpow.pop %v4068
    %v4070 = vmul.f32 %v3656, 1.442695
    %v4071 = vpow.pop %v4070
    %v4072 = vmul.f32 %v3657, 1.442695
    %v4073 = vpow.pop %v4072
    %v4074 = vmul.f32 %v3658, 1.442695
    %v4075 = vpow.pop %v4074
    %v4076 = vmul.f32 %v3659, 1.442695
    %v4077 = vpow.pop %v4076
    %v4078 = vmul.f32 %v3660, 1.442695
    %v4079 = vpow.pop %v4078
    %v4080 = vmul.f32 %v3661, 1.442695
    %v4081 = vpow.pop %v4080
    %v4082 = vmul.f32 %v3662, 1.442695
    %v4083 = vpow.pop %v4082
    %v4084 = vmul.f32 %v3663, 1.442695
    %v4085 = vpow.pop %v4084
    %v4086 = vmul.f32 %v3664, 1.442695
    %v4087 = vpow.pop %v4086
    %v4088 = vmul.f32 %v3665, 1.442695
    %v4089 = vpow.pop %v4088
    %v4090 = vmul.f32 %v3666, 1.442695
    %v4091 = vpow.pop %v4090
    %v4092 = vmul.f32 %v3667, 1.442695
    %v4093 = vpow.pop %v4092
    %v4094 = vmul.f32 %v3668, 1.442695
    %v4095 = vpow.pop %v4094
    %v4096 = vmul.f32 %v3669, 1.442695
    %v4097 = vpow.pop %v4096
    %v4098 = vmul.f32 %v3670, 1.442695
    %v4099 = vpow.pop %v4098
    %v4100 = vmul.f32 %v3671, 1.442695
    %v4101 = vpow.pop %v4100
    %v4102 = vmul.f32 %v3672, 1.442695
    %v4103 = vpow.pop %v4102
    %v4104 = vmul.f32 %v3673, 1.442695
    %v4105 = vpow.pop %v4104
    %v4106 = vmul.f32 %v3674, 1.442695
    %v4107 = vpow.pop %v4106
    %v4108 = vmul.f32 %v3675, 1.442695
    %v4109 = vpow.pop %v4108
    %v4110 = vmul.f32 %v3676, 1.442695
    %v4111 = vpow.pop %v4110
    %v4112 = vmul.f32 %v3677, 1.442695
    %v4113 = vpow.pop %v4112
    %v4114 = vmul.f32 %v3678, 1.442695
    %v4115 = vpow.pop %v4114
    %v4116 = vmul.f32 %v3679, 1.442695
    %v4117 = vpow.pop %v4116
    %v4118 = vmul.f32 %v3680, 1.442695
    %v4119 = vpow.pop %v4118
    %v4120 = vmul.f32 %v3681, 1.442695
    %v4121 = vpow.pop %v4120
    %v4122 = vmul.f32 %v3682, 1.442695
    %v4123 = vpow.pop %v4122
    %v4124 = vmul.f32 %v3683, 1.442695
    %v4125 = vpow.pop %v4124
    %v4126 = vmul.f32 %v3684, 1.442695
    %v4127 = vpow.pop %v4126
    %v4128 = vmul.f32 %v3685, 1.442695
    %v4129 = vpow.pop %v4128
    %v4130 = vmul.f32 %v3686, 1.442695
    %v4131 = vpow.pop %v4130
    %v4132 = vmul.f32 %v3687, 1.442695
    %v4133 = vpow.pop %v4132
    %v4134 = vmul.f32 %v3688, 1.442695
    %v4135 = vpow.pop %v4134
    %v4136 = vmul.f32 %v3689, 1.442695
    %v4137 = vpow.pop %v4136
    %v4138 = vmul.f32 %v3690, 1.442695
    %v4139 = vpow.pop %v4138
    %v4140 = vmul.f32 %v3691, 1.442695
    %v4141 = vpow.pop %v4140
    %v4142 = vmul.f32 %v3692, 1.442695
    %v4143 = vpow.pop %v4142
    %v4144 = vmul.f32 %v3693, 1.442695
    %v4145 = vpow.pop %v4144
    %v4146 = vmul.f32 %v3694, 1.442695
    %v4147 = vpow.pop %v4146
    %v4148 = vmul.f32 %v3695, 1.442695
    %v4149 = vpow.pop %v4148
    %v4150 = vmul.f32 %v3696, 1.442695
    %v4151 = vpow.pop %v4150
    %v4152 = vmul.f32 %v3697, 1.442695
    %v4153 = vpow.pop %v4152
    %v4154 = vmul.f32 %v3698, 1.442695
    %v4155 = vpow.pop %v4154
    %v4156 = vmul.f32 %v3699, 1.442695
    %v4157 = vpow.pop %v4156
    %v4158 = vmul.f32 %v3700, 1.442695
    %v4159 = vpow.pop %v4158
    %v4160 = vmul.f32 %v3701, 1.442695
    %v4161 = vpow.pop %v4160
    %v4162 = vmul.f32 %v3702, 1.442695
    %v4163 = vpow.pop %v4162
    %v4164 = vmul.f32 %v3703, 1.442695
    %v4165 = vpow.pop %v4164
    %v4166 = vmul.f32 %v3704, 1.442695
    %v4167 = vpow.pop %v4166
    %v4168 = vmul.f32 %v3705, 1.442695
    %v4169 = vpow.pop %v4168
    %v4170 = vmul.f32 %v3706, 1.442695
    %v4171 = vpow.pop %v4170
    %v4172 = vmul.f32 %v3707, 1.442695
    %v4173 = vpow.pop %v4172
    %v4174 = vmul.f32 %v3708, 1.442695
    %v4175 = vpow.pop %v4174
    %v4176 = vmul.f32 %v3709, 1.442695
    %v4177 = vpow.pop %v4176
    %v4178 = vmul.f32 %v3710, 1.442695
    %v4179 = vpow.pop %v4178
    %v4180 = vmul.f32 %v3711, 1.442695
    %v4181 = vpow.pop %v4180
    %v4182 = vmul.f32 %v3712, 1.442695
    %v4183 = vpow.pop %v4182
    %v4184 = vmul.f32 %v3713, 1.442695
    %v4185 = vpow.pop %v4184
    %v4186 = vmul.f32 %v3714, 1.442695
    %v4187 = vpow.pop %v4186
    %v4188 = vmul.f32 %v3715, 1.442695
    %v4189 = vpow.pop %v4188
    %v4190 = vmul.f32 %v3716, 1.442695
    %v4191 = vpow.pop %v4190
    %v4192 = vmul.f32 %v3717, 1.442695
    %v4193 = vpow.pop %v4192
    %v4194 = vmul.f32 %v3718, 1.442695
    %v4195 = vpow.pop %v4194
    %v4196 = vmul.f32 %v3719, 1.442695
    %v4197 = vpow.pop %v4196
    %v4198 = vmul.f32 %v3720, 1.442695
    %v4199 = vpow.pop %v4198
    %v4200 = vmul.f32 %v3721, 1.442695
    %v4201 = vpow.pop %v4200
    %v4202 = vmul.f32 %v3722, 1.442695
    %v4203 = vpow.pop %v4202
    %v4204 = vmul.f32 %v3723, 1.442695
    %v4205 = vpow.pop %v4204
    %v4206 = vmul.f32 %v3724, 1.442695
    %v4207 = vpow.pop %v4206
    %v4208 = vmul.f32 %v3725, 1.442695
    %v4209 = vpow.pop %v4208
    %v4210 = vmul.f32 %v3726, 1.442695
    %v4211 = vpow.pop %v4210
    %v4212 = vmul.f32 %v3727, 1.442695
    %v4213 = vpow.pop %v4212
    %v4214 = vmul.f32 %v3728, 1.442695
    %v4215 = vpow.pop %v4214
    %v4216 = vmul.f32 %v3729, 1.442695
    %v4217 = vpow.pop %v4216
    %v4218 = vmul.f32 %v3730, 1.442695
    %v4219 = vpow.pop %v4218
    %v4220 = vmul.f32 %v3731, 1.442695
    %v4221 = vpow.pop %v4220
    %v4222 = vmul.f32 %v3732, 1.442695
    %v4223 = vpow.pop %v4222
    %v4224 = vmul.f32 %v3733, 1.442695
    %v4225 = vpow.pop %v4224
    %v4226 = vmul.f32 %v3734, 1.442695
    %v4227 = vpow.pop %v4226
    %v4228 = vmul.f32 %v3735, 1.442695
    %v4229 = vpow.pop %v4228
    %v4230 = vmul.f32 %v3736, 1.442695
    %v4231 = vpow.pop %v4230
    %v4232 = vmul.f32 %v3737, 1.442695
    %v4233 = vpow.pop %v4232
    %v4234 = vmul.f32 %v3738, 1.442695
    %v4235 = vpow.pop %v4234
    %v4236 = vmul.f32 %v3739, 1.442695
    %v4237 = vpow.pop %v4236
    %v4238 = vmul.f32 %v3740, 1.442695
    %v4239 = vpow.pop %v4238
    %v4240 = vmul.f32 %v3741, 1.442695
    %v4241 = vpow.pop %v4240
    %v4242 = vmul.f32 %v3742, 1.442695
    %v4243 = vpow.pop %v4242
    %v4244 = vmul.f32 %v3743, 1.442695
    %v4245 = vpow.pop %v4244
    %v4246 = vmul.f32 %v3744, 1.442695
    %v4247 = vpow.pop %v4246
    %v4248 = vmul.f32 %v3745, 1.442695
    %v4249 = vpow.pop %v4248
    %v4250 = vmul.f32 %v3746, 1.442695
    %v4251 = vpow.pop %v4250
    %v4252 = vmul.f32 %v3747, 1.442695
    %v4253 = vpow.pop %v4252
    %v4254 = vmul.f32 %v3748, 1.442695
    %v4255 = vpow.pop %v4254
    %v4256 = vmul.f32 %v3749, 1.442695
    %v4257 = vpow.pop %v4256
    %v4258 = vmul.f32 %v3750, 1.442695
    %v4259 = vpow.pop %v4258
    %v4260 = vmul.f32 %v3751, 1.442695
    %v4261 = vpow.pop %v4260
    %v4262 = vmul.f32 %v3752, 1.442695
    %v4263 = vpow.pop %v4262
    %v4264 = vmul.f32 %v3753, 1.442695
    %v4265 = vpow.pop %v4264
    %v4266 = vmul.f32 %v3754, 1.442695
    %v4267 = vpow.pop %v4266
    %v4268 = vmul.f32 %v3755, 1.442695
    %v4269 = vpow.pop %v4268
    %v4270 = vmul.f32 %v3756, 1.442695
    %v4271 = vpow.pop %v4270
    %v4272 = vmul.f32 %v3757, 1.442695
    %v4273 = vpow.pop %v4272
    %v4274 = vmul.f32 %v3758, 1.442695
    %v4275 = vpow.pop %v4274
    %v4276 = vmul.f32 %v3759, 1.442695
    %v4277 = vpow.pop %v4276
    %v4278 = vmul.f32 %v3760, 1.442695
    %v4279 = vpow.pop %v4278
    %v4280 = vmul.f32 %v3761, 1.442695
    %v4281 = vpow.pop %v4280
    %v4282 = vmul.f32 %v3762, 1.442695
    %v4283 = vpow.pop %v4282
    %v4284 = vmul.f32 %v3763, 1.442695
    %v4285 = vpow.pop %v4284
    %v4286 = vmul.f32 %v3764, 1.442695
    %v4287 = vpow.pop %v4286
    %v4288 = vmul.f32 %v3765, 1.442695
    %v4289 = vpow.pop %v4288
    %v4290 = vmul.f32 %v3766, 1.442695
    %v4291 = vpow.pop %v4290
    %v4292 = vmul.f32 %v3767, 1.442695
    %v4293 = vpow.pop %v4292
    %v4294 = vmul.f32 %v3768, 1.442695
    %v4295 = vpow.pop %v4294
    %v4296 = vmul.f32 %v3769, 1.442695
    %v4297 = vpow.pop %v4296
    %v4298 = vmul.f32 %v3770, 1.442695
    %v4299 = vpow.pop %v4298
    %v4300 = vmul.f32 %v3771, 1.442695
    %v4301 = vpow.pop %v4300
    %v4302 = vmul.f32 %v3772, 1.442695
    %v4303 = vpow.pop %v4302
    %v4304 = vmul.f32 %v3773, 1.442695
    %v4305 = vpow.pop %v4304
    %v4306 = vmul.f32 %v3774, 1.442695
    %v4307 = vpow.pop %v4306
    %v4308 = vmul.f32 %v3775, 1.442695
    %v4309 = vpow.pop %v4308
    %v4310 = vmul.f32 %v3776, 1.442695
    %v4311 = vpow.pop %v4310
    %v4312 = vmul.f32 %v3777, 1.442695
    %v4313 = vpow.pop %v4312
    %v4314 = vmul.f32 %v3778, 1.442695
    %v4315 = vpow.pop %v4314
    %v4316 = vmul.f32 %v3779, 1.442695
    %v4317 = vpow.pop %v4316
    %v4318 = vmul.f32 %v3780, 1.442695
    %v4319 = vpow.pop %v4318
    %v4320 = vmul.f32 %v3781, 1.442695
    %v4321 = vpow.pop %v4320
    %v4322 = vmul.f32 %v3782, 1.442695
    %v4323 = vpow.pop %v4322
    %v4324 = vmul.f32 %v3783, 1.442695
    %v4325 = vpow.pop %v4324
    %v4326 = vmul.f32 %v3784, 1.442695
    %v4327 = vpow.pop %v4326
    %v4328 = vmul.f32 %v3785, 1.442695
    %v4329 = vpow.pop %v4328
    %v4330 = vmul.f32 %v3786, 1.442695
    %v4331 = vpow.pop %v4330
    %v4332 = vmul.f32 %v3787, 1.442695
    %v4333 = vpow.pop %v4332
    %v4334 = vmul.f32 %v3788, 1.442695
    %v4335 = vpow.pop %v4334
    %v4336 = vmul.f32 %v3789, 1.442695
    %v4337 = vpow.pop %v4336
    %v4338 = vmul.f32 %v3790, 1.442695
    %v4339 = vpow.pop %v4338
    %v4340 = vmul.f32 %v3791, 1.442695
    %v4341 = vpow.pop %v4340
    %v4342 = vmul.f32 %v3792, 1.442695
    %v4343 = vpow.pop %v4342
    %v4344 = vmul.f32 %v3793, 1.442695
    %v4345 = vpow.pop %v4344
    %v4346 = vmul.f32 %v3794, 1.442695
    %v4347 = vpow.pop %v4346
    %v4348 = vmul.f32 %v3795, 1.442695
    %v4349 = vpow.pop %v4348
    %v4350 = vmul.f32 %v3796, 1.442695
    %v4351 = vpow.pop %v4350
    %v4352 = vmul.f32 %v3797, 1.442695
    %v4353 = vpow.pop %v4352
    %v4354 = vmul.f32 %v3798, 1.442695
    %v4355 = vpow.pop %v4354
    %v4356 = vmul.f32 %v3799, 1.442695
    %v4357 = vpow.pop %v4356
    %v4358 = vmul.f32 %v3800, 1.442695
    %v4359 = vpow.pop %v4358
    %v4360 = vmul.f32 %v3801, 1.442695
    %v4361 = vpow.pop %v4360
    %v4362 = vmul.f32 %v3802, 1.442695
    %v4363 = vpow.pop %v4362
    %v4364 = vmul.f32 %v3803, 1.442695
    %v4365 = vpow.pop %v4364
    %v4366 = vmul.f32 %v3804, 1.442695
    %v4367 = vpow.pop %v4366
    %v4368 = vmul.f32 %v3805, 1.442695
    %v4369 = vpow.pop %v4368
    %v4370 = vmul.f32 %v3806, 1.442695
    %v4371 = vpow.pop %v4370
    %v4372 = vmul.f32 %v3807, 1.442695
    %v4373 = vpow.pop %v4372
    %v4374 = vmul.f32 %v3808, 1.442695
    %v4375 = vpow.pop %v4374
    %v4376 = vmul.f32 %v3809, 1.442695
    %v4377 = vpow.pop %v4376
    %v4378 = vmul.f32 %v3810, 1.442695
    %v4379 = vpow.pop %v4378
    %v4380 = vmul.f32 %v3811, 1.442695
    %v4381 = vpow.pop %v4380
    %v4382 = vmul.f32 %v3812, 1.442695
    %v4383 = vpow.pop %v4382
    %v4384 = vmul.f32 %v3813, 1.442695
    %v4385 = vpow.pop %v4384
    %v4386 = vmul.f32 %v3814, 1.442695
    %v4387 = vpow.pop %v4386
    %v4388 = vmul.f32 %v3815, 1.442695
    %v4389 = vpow.pop %v4388
    %v4390 = vmul.f32 %v3816, 1.442695
    %v4391 = vpow.pop %v4390
    %v4392 = vmul.f32 %v3817, 1.442695
    %v4393 = vpow.pop %v4392
    %v4394 = vmul.f32 %v3818, 1.442695
    %v4395 = vpow.pop %v4394
    %v4396 = vmul.f32 %v3819, 1.442695
    %v4397 = vpow.pop %v4396
    %v4398 = vmul.f32 %v3820, 1.442695
    %v4399 = vpow.pop %v4398
    %v4400 = vmul.f32 %v3821, 1.442695
    %v4401 = vpow.pop %v4400
    %v4402 = vmul.f32 %v3822, 1.442695
    %v4403 = vpow.pop %v4402
    %v4404 = vmul.f32 %v3823, 1.442695
    %v4405 = vpow.pop %v4404
    %v4406 = vmul.f32 %v3824, 1.442695
    %v4407 = vpow.pop %v4406
    %v4408 = vmul.f32 %v3825, 1.442695
    %v4409 = vpow.pop %v4408
    %v4410 = vmul.f32 %v3826, 1.442695
    %v4411 = vpow.pop %v4410
    %v4412 = vmul.f32 %v3827, 1.442695
    %v4413 = vpow.pop %v4412
    %v4414 = vmul.f32 %v3828, 1.442695
    %v4415 = vpow.pop %v4414
    %v4416 = vmul.f32 %v3829, 1.442695
    %v4417 = vpow.pop %v4416
    %v4418 = vmul.f32 %v3830, 1.442695
    %v4419 = vpow.pop %v4418
    %v4420 = vmul.f32 %v3831, 1.442695
    %v4421 = vpow.pop %v4420
    %v4422 = vmul.f32 %v3832, 1.442695
    %v4423 = vpow.pop %v4422
    %v4424 = vmul.f32 %v3833, 1.442695
    %v4425 = vpow.pop %v4424
    %v4426 = vmul.f32 %v3834, 1.442695
    %v4427 = vpow.pop %v4426
    %v4428 = vmul.f32 %v3835, 1.442695
    %v4429 = vpow.pop %v4428
    %v4430 = vmul.f32 %v3836, 1.442695
    %v4431 = vpow.pop %v4430
    %v4432 = vmul.f32 %v3837, 1.442695
    %v4433 = vpow.pop %v4432
    %v4434 = vmul.f32 %v3838, 1.442695
    %v4435 = vpow.pop %v4434
    %v4436 = vmul.f32 %v3839, 1.442695
    %v4437 = vpow.pop %v4436
    %v4438 = vmul.f32 %v3840, 1.442695
    %v4439 = vpow.pop %v4438
    %v4440 = vmul.f32 %v3841, 1.442695
    %v4441 = vpow.pop %v4440
    %v4442 = vmul.f32 %v3842, 1.442695
    %v4443 = vpow.pop %v4442
    %v4444 = vmul.f32 %v3843, 1.442695
    %v4445 = vpow.pop %v4444
    %v4446 = vmul.f32 %v3844, 1.442695
    %v4447 = vpow.pop %v4446
    %v4448 = vmul.f32 %v3845, 1.442695
    %v4449 = vpow.pop %v4448
    %v4450 = vmul.f32 %v3846, 1.442695
    %v4451 = vpow.pop %v4450
    %v4452 = vmul.f32 %v3847, 1.442695
    %v4453 = vpow.pop %v4452
    %v4454 = vmul.f32 %v3848, 1.442695
    %v4455 = vpow.pop %v4454
    %v4456 = vmul.f32 %v3849, 1.442695
    %v4457 = vpow.pop %v4456
    %v4458 = vmul.f32 %v3850, 1.442695
    %v4459 = vpow.pop %v4458
    %v4460 = vmul.f32 %v3851, 1.442695
    %v4461 = vpow.pop %v4460
    %v4462 = vmul.f32 %v3852, 1.442695
    %v4463 = vpow.pop %v4462
    %v4464 = vmul.f32 %v3853, 1.442695
    %v4465 = vpow.pop %v4464
    %v4466 = vmul.f32 %v3854, 1.442695
    %v4467 = vpow.pop %v4466
    %v4468 = vmul.f32 %v3855, 1.442695
    %v4469 = vpow.pop %v4468
    %v4470 = vmul.f32 %v3856, 1.442695
    %v4471 = vpow.pop %v4470
    %v4472 = vmul.f32 %v3857, 1.442695
    %v4473 = vpow.pop %v4472
    %v4474 = vmul.f32 %v3858, 1.442695
    %v4475 = vpow.pop %v4474
    %v4476 = vmul.f32 %v3859, 1.442695
    %v4477 = vpow.pop %v4476
    %v4478 = vmul.f32 %v3860, 1.442695
    %v4479 = vpow.pop %v4478
    %v4480 = vmul.f32 %v3861, 1.442695
    %v4481 = vpow.pop %v4480
    %v4482 = vmul.f32 %v3862, 1.442695
    %v4483 = vpow.pop %v4482
    %v4484 = vmul.f32 %v3863, 1.442695
    %v4485 = vpow.pop %v4484
    %v4486 = vmul.f32 %v3864, 1.442695
    %v4487 = vpow.pop %v4486
    %v4488 = vmul.f32 %v3865, 1.442695
    %v4489 = vpow.pop %v4488
    %v4490 = vmul.f32 %v3866, 1.442695
    %v4491 = vpow.pop %v4490
    %v4492 = vmul.f32 %v3867, 1.442695
    %v4493 = vpow.pop %v4492
    %v4494 = vmul.f32 %v3868, 1.442695
    %v4495 = vpow.pop %v4494
    %v4496 = vmul.f32 %v3869, 1.442695
    %v4497 = vpow.pop %v4496
    %v4498 = vmul.f32 %v3870, 1.442695
    %v4499 = vpow.pop %v4498
    %v4500 = vmul.f32 %v3871, 1.442695
    %v4501 = vpow.pop %v4500
    %v4502 = vmul.f32 %v3872, 1.442695
    %v4503 = vpow.pop %v4502
    %v4504 = vmul.f32 %v3873, 1.442695
    %v4505 = vpow.pop %v4504
    %v4506 = vmul.f32 %v3874, 1.442695
    %v4507 = vpow.pop %v4506
    %v4508 = vmul.f32 %v3875, 1.442695
    %v4509 = vpow.pop %v4508
    %v4510 = vmul.f32 %v3876, 1.442695
    %v4511 = vpow.pop %v4510
    %v4512 = vmul.f32 %v3877, 1.442695
    %v4513 = vpow.pop %v4512
    %v4514 = vmul.f32 %v3878, 1.442695
    %v4515 = vpow.pop %v4514
    %v4516 = vmul.f32 %v3879, 1.442695
    %v4517 = vpow.pop %v4516
    %v4518 = vmul.f32 %v3880, 1.442695
    %v4519 = vpow.pop %v4518
    %v4520 = vmul.f32 %v3881, 1.442695
    %v4521 = vpow.pop %v4520
    %v4522 = vmul.f32 %v3882, 1.442695
    %v4523 = vpow.pop %v4522
    %v4524 = vmul.f32 %v3883, 1.442695
    %v4525 = vpow.pop %v4524
    %v4526 = vmul.f32 %v3884, 1.442695
    %v4527 = vpow.pop %v4526
    %v4528 = vmul.f32 %v3885, 1.442695
    %v4529 = vpow.pop %v4528
    %v4530 = vmul.f32 %v3886, 1.442695
    %v4531 = vpow.pop %v4530
    %v4532 = vmul.f32 %v3887, 1.442695
    %v4533 = vpow.pop %v4532
    %v4534 = vmul.f32 %v3888, 1.442695
    %v4535 = vpow.pop %v4534
    %v4536 = vmul.f32 %v3889, 1.442695
    %v4537 = vpow.pop %v4536
    %v4538 = vmul.f32 %v3890, 1.442695
    %v4539 = vpow.pop %v4538
    %v4540 = vmul.f32 %v3891, 1.442695
    %v4541 = vpow.pop %v4540
    %v4542 = vmul.f32 %v3892, 1.442695
    %v4543 = vpow.pop %v4542
    %v4544 = vmul.f32 %v3893, 1.442695
    %v4545 = vpow.pop %v4544
    %v4546 = vmul.f32 %v3894, 1.442695
    %v4547 = vpow.pop %v4546
    %v4548 = vmul.f32 %v3895, 1.442695
    %v4549 = vpow.pop %v4548
    %v4550 = vmul.f32 %v3896, 1.442695
    %v4551 = vpow.pop %v4550
    %v4552 = vmul.f32 %v3897, 1.442695
    %v4553 = vpow.pop %v4552
    %v4554 = vmul.f32 %v3898, 1.442695
    %v4555 = vpow.pop %v4554
    %v4556 = vmul.f32 %v3899, 1.442695
    %v4557 = vpow.pop %v4556
    %v4558 = vmul.f32 %v3900, 1.442695
    %v4559 = vpow.pop %v4558
    %v4560 = vmul.f32 %v3901, 1.442695
    %v4561 = vpow.pop %v4560
    %v4562 = vmul.f32 %v3902, 1.442695
    %v4563 = vpow.pop %v4562
    %v4564 = vmul.f32 %v3903, 1.442695
    %v4565 = vpow.pop %v4564
    %v4566 = vmul.f32 %v3904, 1.442695
    %v4567 = vpow.pop %v4566
    %v4568 = vmul.f32 %v3905, 1.442695
    %v4569 = vpow.pop %v4568
    %v4570 = vmul.f32 %v3906, 1.442695
    %v4571 = vpow.pop %v4570
    %v4572 = vmul.f32 %v3907, 1.442695
    %v4573 = vpow.pop %v4572
    %v4574 = vmul.f32 %v3908, 1.442695
    %v4575 = vpow.pop %v4574
    %v4576 = vmul.f32 %v3909, 1.442695
    %v4577 = vpow.pop %v4576
    %v4578 = vmul.f32 %v3910, 1.442695
    %v4579 = vpow.pop %v4578
    %v4580 = vmul.f32 %v3911, 1.442695
    %v4581 = vpow.pop %v4580
    %v4582 = vmul.f32 %v3912, 1.442695
    %v4583 = vpow.pop %v4582
    %v4584 = vmul.f32 %v3913, 1.442695
    %v4585 = vpow.pop %v4584
    %v4586 = vmul.f32 %v3914, 1.442695
    %v4587 = vpow.pop %v4586
    %v4588 = vmul.f32 %v3915, 1.442695
    %v4589 = vpow.pop %v4588
    %v4590 = vmul.f32 %v3916, 1.442695
    %v4591 = vpow.pop %v4590
    %v4592 = vmul.f32 %v3917, 1.442695
    %v4593 = vpow.pop %v4592
    %v4594 = vmul.f32 %v3918, 1.442695
    %v4595 = vpow.pop %v4594
    %v4596 = vmul.f32 %v3919, 1.442695
    %v4597 = vpow.pop %v4596
    %v4598 = vmul.f32 %v3920, 1.442695
    %v4599 = vpow.pop %v4598
    %v4600 = vmul.f32 %v3921, 1.442695
    %v4601 = vpow.pop %v4600
    %v4602 = vmul.f32 %v3922, 1.442695
    %v4603 = vpow.pop %v4602
    %v4604 = vmul.f32 %v3923, 1.442695
    %v4605 = vpow.pop %v4604
    %v4606 = vmul.f32 %v3924, 1.442695
    %v4607 = vpow.pop %v4606
    %v4608 = vmul.f32 %v3925, 1.442695
    %v4609 = vpow.pop %v4608
    %v4610 = vmul.f32 %v3926, 1.442695
    %v4611 = vpow.pop %v4610
    %v4612 = vmul.f32 %v3927, 1.442695
    %v4613 = vpow.pop %v4612
    %v4614 = vmul.f32 %v3928, 1.442695
    %v4615 = vpow.pop %v4614
    %v4616 = vmul.f32 %v3929, 1.442695
    %v4617 = vpow.pop %v4616
    %v4618 = vmul.f32 %v3930, 1.442695
    %v4619 = vpow.pop %v4618
    %v4620 = vmul.f32 %v3931, 1.442695
    %v4621 = vpow.pop %v4620
    %v4622 = vmul.f32 %v3932, 1.442695
    %v4623 = vpow.pop %v4622
    %v4624 = vmul.f32 %v3933, 1.442695
    %v4625 = vpow.pop %v4624
    %v4626 = vmul.f32 %v3934, 1.442695
    %v4627 = vpow.pop %v4626
    %v4628 = vmul.f32 %v3935, 1.442695
    %v4629 = vpow.pop %v4628
    %v4630 = vmul.f32 %v3936, 1.442695
    %v4631 = vpow.pop %v4630
    %v4632 = vmul.f32 %v3937, 1.442695
    %v4633 = vpow.pop %v4632
    %v4634 = vmul.f32 %v3938, 1.442695
    %v4635 = vpow.pop %v4634
    %v4636 = vmul.f32 %v3939, 1.442695
    %v4637 = vpow.pop %v4636
    %v4638 = vmul.f32 %v3940, 1.442695
    %v4639 = vpow.pop %v4638
    %v4640 = vmul.f32 %v3941, 1.442695
    %v4641 = vpow.pop %v4640
    %v4642 = vmul.f32 %v3942, 1.442695
    %v4643 = vpow.pop %v4642
    %v4644 = vmul.f32 %v3943, 1.442695
    %v4645 = vpow.pop %v4644
    %v4646 = vmul.f32 %v3944, 1.442695
    %v4647 = vpow.pop %v4646
    %v4648 = vmul.f32 %v3945, 1.442695
    %v4649 = vpow.pop %v4648
    %v4650 = vmul.f32 %v3946, 1.442695
    %v4651 = vpow.pop %v4650
    %v4652 = vmul.f32 %v3947, 1.442695
    %v4653 = vpow.pop %v4652
    %v4654 = vmul.f32 %v3948, 1.442695
    %v4655 = vpow.pop %v4654
    %v4656 = vmul.f32 %v3949, 1.442695
    %v4657 = vpow.pop %v4656
    %v4658 = vmul.f32 %v3950, 1.442695
    %v4659 = vpow.pop %v4658
    %v4660 = vmul.f32 %v3951, 1.442695
    %v4661 = vpow.pop %v4660
    %v4662 = vmul.f32 %v3952, 1.442695
    %v4663 = vpow.pop %v4662
    %v4664 = vmul.f32 %v3953, 1.442695
    %v4665 = vpow.pop %v4664
    %v4666 = vmul.f32 %v3954, 1.442695
    %v4667 = vpow.pop %v4666
    %v4668 = vmul.f32 %v3955, 1.442695
    %v4669 = vpow.pop %v4668
    %v4670 = vmul.f32 %v3956, 1.442695
    %v4671 = vpow.pop %v4670
    %v4672 = vmul.f32 %v3957, 1.442695
    %v4673 = vpow.pop %v4672
    %v4674 = vmul.f32 %v3958, 1.442695
    %v4675 = vpow.pop %v4674
    %v4676 = vmul.f32 %v3959, 1.442695
    %v4677 = vpow.pop %v4676
    %v4678 = vmul.f32 %v3960, 1.442695
    %v4679 = vpow.pop %v4678
    %v4680 = vmul.f32 %v3961, 1.442695
    %v4681 = vpow.pop %v4680
    %v4682 = vmul.f32 %v3962, 1.442695
    %v4683 = vpow.pop %v4682
    %v4684 = vmul.f32 %v3963, 1.442695
    %v4685 = vpow.pop %v4684
    %v4686 = vmul.f32 %v3964, 1.442695
    %v4687 = vpow.pop %v4686
    %v4688 = vmul.f32 %v3965, 1.442695
    %v4689 = vpow.pop %v4688
    %v4690 = vmul.f32 %v3966, 1.442695
    %v4691 = vpow.pop %v4690
    %v4692 = vmul.f32 %v3967, 1.442695
    %v4693 = vpow.pop %v4692
    %v4694 = vmul.f32 %v3968, 1.442695
    %v4695 = vpow.pop %v4694
    %v4696 = vmul.f32 %v3969, 1.442695
    %v4697 = vpow.pop %v4696
    %v4698 = vmul.f32 %v3970, 1.442695
    %v4699 = vpow.pop %v4698
    %v4700 = vmul.f32 %v3971, 1.442695
    %v4701 = vpow.pop %v4700
    %v4702 = vmul.f32 %v3972, 1.442695
    %v4703 = vpow.pop %v4702
    %v4704 = vmul.f32 %v3973, 1.442695
    %v4705 = vpow.pop %v4704
    %v4706 = vmul.f32 %v3974, 1.442695
    %v4707 = vpow.pop %v4706
    %v4708 = vmul.f32 %v3975, 1.442695
    %v4709 = vpow.pop %v4708
    %v4710 = vmul.f32 %v3976, 1.442695
    %v4711 = vpow.pop %v4710
    %v4712 = vmul.f32 %v3977, 1.442695
    %v4713 = vpow.pop %v4712
    %v4714 = vmul.f32 %v3978, 1.442695
    %v4715 = vpow.pop %v4714
    %v4716 = vmul.f32 %v3979, 1.442695
    %v4717 = vpow.pop %v4716
    %v4718 = vmul.f32 %v3980, 1.442695
    %v4719 = vpow.pop %v4718
    %v4720 = vmul.f32 %v3981, 1.442695
    %v4721 = vpow.pop %v4720
    %v4722 = vmul.f32 %v3982, 1.442695
    %v4723 = vpow.pop %v4722
    %v4724 = vmul.f32 %v3983, 1.442695
    %v4725 = vpow.pop %v4724
    %v4726 = vmul.f32 %v3984, 1.442695
    %v4727 = vpow.pop %v4726
    %v4728 = vmul.f32 %v3985, 1.442695
    %v4729 = vpow.pop %v4728
    %v4730 = vmul.f32 %v3986, 1.442695
    %v4731 = vpow.pop %v4730
    %v4732 = vmul.f32 %v3987, 1.442695
    %v4733 = vpow.pop %v4732
    %v4734 = vmul.f32 %v3988, 1.442695
    %v4735 = vpow.pop %v4734
    %v4736 = vmul.f32 %v3989, 1.442695
    %v4737 = vpow.pop %v4736
    %v4738 = vmul.f32 %v3990, 1.442695
    %v4739 = vpow.pop %v4738
    %v4740 = vmul.f32 %v3991, 1.442695
    %v4741 = vpow.pop %v4740
    %v4742 = vmul.f32 %v3992, 1.442695
    %v4743 = vpow.pop %v4742
    %v4744 = vmul.f32 %v3993, 1.442695
    %v4745 = vpow.pop %v4744
    %v4746 = vmul.f32 %v3994, 1.442695
    %v4747 = vpow.pop %v4746
    %v4748 = vmul.f32 %v3995, 1.442695
    %v4749 = vpow.pop %v4748
    %v4750 = vmul.f32 %v3996, 1.442695
    %v4751 = vpow.pop %v4750
    %v4752 = vmul.f32 %v3997, 1.442695
    %v4753 = vpow.pop %v4752
    %v4754 = vmul.f32 %v3998, 1.442695
    %v4755 = vpow.pop %v4754
    %v4756 = vmul.f32 %v3999, 1.442695
    %v4757 = vpow.pop %v4756
    %v4758 = vmul.f32 %v4000, 1.442695
    %v4759 = vpow.pop %v4758
    %v4760 = vmul.f32 %v4001, 1.442695
    %v4761 = vpow.pop %v4760
    %v4762 = vmul.f32 %v4002, 1.442695
    %v4763 = vpow.pop %v4762
    %v4764 = vmul.f32 %v4003, 1.442695
    %v4765 = vpow.pop %v4764
    %v4766 = vmul.f32 %v4004, 1.442695
    %v4767 = vpow.pop %v4766
    %v4768 = vmul.f32 %v4005, 1.442695
    %v4769 = vpow.pop %v4768
    %v4770 = vmul.f32 %v4006, 1.442695
    %v4771 = vpow.pop %v4770
    %v4772 = vmul.f32 %v4007, 1.442695
    %v4773 = vpow.pop %v4772
    %v4774 = vmul.f32 %v4008, 1.442695
    %v4775 = vpow.pop %v4774
    %v4776 = vmul.f32 %v4009, 1.442695
    %v4777 = vpow.pop %v4776
    %v4778 = vadd.f32 %v4011, %v4035
    %v4779 = vadd.f32 %v4778, %v4059
    %v4780 = vadd.f32 %v4779, %v4083
    %v4781 = vadd.f32 %v4780, %v4107
    %v4782 = vadd.f32 %v4781, %v4131
    %v4783 = vadd.f32 %v4782, %v4155
    %v4784 = vadd.f32 %v4783, %v4179
    %v4785 = vadd.f32 %v4784, %v4203
    %v4786 = vadd.f32 %v4785, %v4227
    %v4787 = vadd.f32 %v4786, %v4251
    %v4788 = vadd.f32 %v4787, %v4275
    %v4789 = vadd.f32 %v4788, %v4299
    %v4790 = vadd.f32 %v4789, %v4323
    %v4791 = vadd.f32 %v4790, %v4347
    %v4792 = vadd.f32 %v4791, %v4371
    %v4793 = vadd.f32 %v4792, %v4395
    %v4794 = vadd.f32 %v4793, %v4419
    %v4795 = vadd.f32 %v4794, %v4443
    %v4796 = vadd.f32 %v4795, %v4467
    %v4797 = vadd.f32 %v4796, %v4491
    %v4798 = vadd.f32 %v4797, %v4515
    %v4799 = vadd.f32 %v4798, %v4539
    %v4800 = vadd.f32 %v4799, %v4563
    %v4801 = vadd.f32 %v4800, %v4587
    %v4802 = vadd.f32 %v4801, %v4611
    %v4803 = vadd.f32 %v4802, %v4635
    %v4804 = vadd.f32 %v4803, %v4659
    %v4805 = vadd.f32 %v4804, %v4683
    %v4806 = vadd.f32 %v4805, %v4707
    %v4807 = vadd.f32 %v4806, %v4731
    %v4808 = vadd.f32 %v4807, %v4755
    %v4809 = vrot.slane %v4808, 4
    %v4810 = vadd.f32 %v4808, %v4809
    %v4811 = vrot.slane %v4810, 2
    %v4812 = vadd.f32 %v4810, %v4811
    %v4813 = vrot.slane %v4812, 1
    %v4814 = vadd.f32 %v4812, %v4813
    %v4815 = vadd.f32 %v4013, %v4037
    %v4816 = vadd.f32 %v4815, %v4061
    %v4817 = vadd.f32 %v4816, %v4085
    %v4818 = vadd.f32 %v4817, %v4109
    %v4819 = vadd.f32 %v4818, %v4133
    %v4820 = vadd.f32 %v4819, %v4157
    %v4821 = vadd.f32 %v4820, %v4181
    %v4822 = vadd.f32 %v4821, %v4205
    %v4823 = vadd.f32 %v4822, %v4229
    %v4824 = vadd.f32 %v4823, %v4253
    %v4825 = vadd.f32 %v4824, %v4277
    %v4826 = vadd.f32 %v4825, %v4301
    %v4827 = vadd.f32 %v4826, %v4325
    %v4828 = vadd.f32 %v4827, %v4349
    %v4829 = vadd.f32 %v4828, %v4373
    %v4830 = vadd.f32 %v4829, %v4397
    %v4831 = vadd.f32 %v4830, %v4421
    %v4832 = vadd.f32 %v4831, %v4445
    %v4833 = vadd.f32 %v4832, %v4469
    %v4834 = vadd.f32 %v4833, %v4493
    %v4835 = vadd.f32 %v4834, %v4517
    %v4836 = vadd.f32 %v4835, %v4541
    %v4837 = vadd.f32 %v4836, %v4565
    %v4838 = vadd.f32 %v4837, %v4589
    %v4839 = vadd.f32 %v4838, %v4613
    %v4840 = vadd.f32 %v4839, %v4637
    %v4841 = vadd.f32 %v4840, %v4661
    %v4842 = vadd.f32 %v4841, %v4685
    %v4843 = vadd.f32 %v4842, %v4709
    %v4844 = vadd.f32 %v4843, %v4733
    %v4845 = vadd.f32 %v4844, %v4757
    %v4846 = vrot.slane %v4845, 4
    %v4847 = vadd.f32 %v4845, %v4846
    %v4848 = vrot.slane %v4847, 2
    %v4849 = vadd.f32 %v4847, %v4848
    %v4850 = vrot.slane %v4849, 1
    %v4851 = vadd.f32 %v4849, %v4850
    %v4852 = vadd.f32 %v4015, %v4039
    %v4853 = vadd.f32 %v4852, %v4063
    %v4854 = vadd.f32 %v4853, %v4087
    %v4855 = vadd.f32 %v4854, %v4111
    %v4856 = vadd.f32 %v4855, %v4135
    %v4857 = vadd.f32 %v4856, %v4159
    %v4858 = vadd.f32 %v4857, %v4183
    %v4859 = vadd.f32 %v4858, %v4207
    %v4860 = vadd.f32 %v4859, %v4231
    %v4861 = vadd.f32 %v4860, %v4255
    %v4862 = vadd.f32 %v4861, %v4279
    %v4863 = vadd.f32 %v4862, %v4303
    %v4864 = vadd.f32 %v4863, %v4327
    %v4865 = vadd.f32 %v4864, %v4351
    %v4866 = vadd.f32 %v4865, %v4375
    %v4867 = vadd.f32 %v4866, %v4399
    %v4868 = vadd.f32 %v4867, %v4423
    %v4869 = vadd.f32 %v4868, %v4447
    %v4870 = vadd.f32 %v4869, %v4471
    %v4871 = vadd.f32 %v4870, %v4495
    %v4872 = vadd.f32 %v4871, %v4519
    %v4873 = vadd.f32 %v4872, %v4543
    %v4874 = vadd.f32 %v4873, %v4567
    %v4875 = vadd.f32 %v4874, %v4591
    %v4876 = vadd.f32 %v4875, %v4615
    %v4877 = vadd.f32 %v4876, %v4639
    %v4878 = vadd.f32 %v4877, %v4663
    %v4879 = vadd.f32 %v4878, %v4687
    %v4880 = vadd.f32 %v4879, %v4711
    %v4881 = vadd.f32 %v4880, %v4735
    %v4882 = vadd.f32 %v4881, %v4759
    %v4883 = vrot.slane %v4882, 4
    %v4884 = vadd.f32 %v4882, %v4883
    %v4885 = vrot.slane %v4884, 2
    %v4886 = vadd.f32 %v4884, %v4885
    %v4887 = vrot.slane %v4886, 1
    %v4888 = vadd.f32 %v4886, %v4887
    %v4889 = vadd.f32 %v4017, %v4041
    %v4890 = vadd.f32 %v4889, %v4065
    %v4891 = vadd.f32 %v4890, %v4089
    %v4892 = vadd.f32 %v4891, %v4113
    %v4893 = vadd.f32 %v4892, %v4137
    %v4894 = vadd.f32 %v4893, %v4161
    %v4895 = vadd.f32 %v4894, %v4185
    %v4896 = vadd.f32 %v4895, %v4209
    %v4897 = vadd.f32 %v4896, %v4233
    %v4898 = vadd.f32 %v4897, %v4257
    %v4899 = vadd.f32 %v4898, %v4281
    %v4900 = vadd.f32 %v4899, %v4305
    %v4901 = vadd.f32 %v4900, %v4329
    %v4902 = vadd.f32 %v4901, %v4353
    %v4903 = vadd.f32 %v4902, %v4377
    %v4904 = vadd.f32 %v4903, %v4401
    %v4905 = vadd.f32 %v4904, %v4425
    %v4906 = vadd.f32 %v4905, %v4449
    %v4907 = vadd.f32 %v4906, %v4473
    %v4908 = vadd.f32 %v4907, %v4497
    %v4909 = vadd.f32 %v4908, %v4521
    %v4910 = vadd.f32 %v4909, %v4545
    %v4911 = vadd.f32 %v4910, %v4569
    %v4912 = vadd.f32 %v4911, %v4593
    %v4913 = vadd.f32 %v4912, %v4617
    %v4914 = vadd.f32 %v4913, %v4641
    %v4915 = vadd.f32 %v4914, %v4665
    %v4916 = vadd.f32 %v4915, %v4689
    %v4917 = vadd.f32 %v4916, %v4713
    %v4918 = vadd.f32 %v4917, %v4737
    %v4919 = vadd.f32 %v4918, %v4761
    %v4920 = vrot.slane %v4919, 4
    %v4921 = vadd.f32 %v4919, %v4920
    %v4922 = vrot.slane %v4921, 2
    %v4923 = vadd.f32 %v4921, %v4922
    %v4924 = vrot.slane %v4923, 1
    %v4925 = vadd.f32 %v4923, %v4924
    %v4926 = vadd.f32 %v4019, %v4043
    %v4927 = vadd.f32 %v4926, %v4067
    %v4928 = vadd.f32 %v4927, %v4091
    %v4929 = vadd.f32 %v4928, %v4115
    %v4930 = vadd.f32 %v4929, %v4139
    %v4931 = vadd.f32 %v4930, %v4163
    %v4932 = vadd.f32 %v4931, %v4187
    %v4933 = vadd.f32 %v4932, %v4211
    %v4934 = vadd.f32 %v4933, %v4235
    %v4935 = vadd.f32 %v4934, %v4259
    %v4936 = vadd.f32 %v4935, %v4283
    %v4937 = vadd.f32 %v4936, %v4307
    %v4938 = vadd.f32 %v4937, %v4331
    %v4939 = vadd.f32 %v4938, %v4355
    %v4940 = vadd.f32 %v4939, %v4379
    %v4941 = vadd.f32 %v4940, %v4403
    %v4942 = vadd.f32 %v4941, %v4427
    %v4943 = vadd.f32 %v4942, %v4451
    %v4944 = vadd.f32 %v4943, %v4475
    %v4945 = vadd.f32 %v4944, %v4499
    %v4946 = vadd.f32 %v4945, %v4523
    %v4947 = vadd.f32 %v4946, %v4547
    %v4948 = vadd.f32 %v4947, %v4571
    %v4949 = vadd.f32 %v4948, %v4595
    %v4950 = vadd.f32 %v4949, %v4619
    %v4951 = vadd.f32 %v4950, %v4643
    %v4952 = vadd.f32 %v4951, %v4667
    %v4953 = vadd.f32 %v4952, %v4691
    %v4954 = vadd.f32 %v4953, %v4715
    %v4955 = vadd.f32 %v4954, %v4739
    %v4956 = vadd.f32 %v4955, %v4763
    %v4957 = vrot.slane %v4956, 4
    %v4958 = vadd.f32 %v4956, %v4957
    %v4959 = vrot.slane %v4958, 2
    %v4960 = vadd.f32 %v4958, %v4959
    %v4961 = vrot.slane %v4960, 1
    %v4962 = vadd.f32 %v4960, %v4961
    %v4963 = vadd.f32 %v4021, %v4045
    %v4964 = vadd.f32 %v4963, %v4069
    %v4965 = vadd.f32 %v4964, %v4093
    %v4966 = vadd.f32 %v4965, %v4117
    %v4967 = vadd.f32 %v4966, %v4141
    %v4968 = vadd.f32 %v4967, %v4165
    %v4969 = vadd.f32 %v4968, %v4189
    %v4970 = vadd.f32 %v4969, %v4213
    %v4971 = vadd.f32 %v4970, %v4237
    %v4972 = vadd.f32 %v4971, %v4261
    %v4973 = vadd.f32 %v4972, %v4285
    %v4974 = vadd.f32 %v4973, %v4309
    %v4975 = vadd.f32 %v4974, %v4333
    %v4976 = vadd.f32 %v4975, %v4357
    %v4977 = vadd.f32 %v4976, %v4381
    %v4978 = vadd.f32 %v4977, %v4405
    %v4979 = vadd.f32 %v4978, %v4429
    %v4980 = vadd.f32 %v4979, %v4453
    %v4981 = vadd.f32 %v4980, %v4477
    %v4982 = vadd.f32 %v4981, %v4501
    %v4983 = vadd.f32 %v4982, %v4525
    %v4984 = vadd.f32 %v4983, %v4549
    %v4985 = vadd.f32 %v4984, %v4573
    %v4986 = vadd.f32 %v4985, %v4597
    %v4987 = vadd.f32 %v4986, %v4621
    %v4988 = vadd.f32 %v4987, %v4645
    %v4989 = vadd.f32 %v4988, %v4669
    %v4990 = vadd.f32 %v4989, %v4693
    %v4991 = vadd.f32 %v4990, %v4717
    %v4992 = vadd.f32 %v4991, %v4741
    %v4993 = vadd.f32 %v4992, %v4765
    %v4994 = vrot.slane %v4993, 4
    %v4995 = vadd.f32 %v4993, %v4994
    %v4996 = vrot.slane %v4995, 2
    %v4997 = vadd.f32 %v4995, %v4996
    %v4998 = vrot.slane %v4997, 1
    %v4999 = vadd.f32 %v4997, %v4998
    %v5000 = vadd.f32 %v4023, %v4047
    %v5001 = vadd.f32 %v5000, %v4071
    %v5002 = vadd.f32 %v5001, %v4095
    %v5003 = vadd.f32 %v5002, %v4119
    %v5004 = vadd.f32 %v5003, %v4143
    %v5005 = vadd.f32 %v5004, %v4167
    %v5006 = vadd.f32 %v5005, %v4191
    %v5007 = vadd.f32 %v5006, %v4215
    %v5008 = vadd.f32 %v5007, %v4239
    %v5009 = vadd.f32 %v5008, %v4263
    %v5010 = vadd.f32 %v5009, %v4287
    %v5011 = vadd.f32 %v5010, %v4311
    %v5012 = vadd.f32 %v5011, %v4335
    %v5013 = vadd.f32 %v5012, %v4359
    %v5014 = vadd.f32 %v5013, %v4383
    %v5015 = vadd.f32 %v5014, %v4407
    %v5016 = vadd.f32 %v5015, %v4431
    %v5017 = vadd.f32 %v5016, %v4455
    %v5018 = vadd.f32 %v5017, %v4479
    %v5019 = vadd.f32 %v5018, %v4503
    %v5020 = vadd.f32 %v5019, %v4527
    %v5021 = vadd.f32 %v5020, %v4551
    %v5022 = vadd.f32 %v5021, %v4575
    %v5023 = vadd.f32 %v5022, %v4599
    %v5024 = vadd.f32 %v5023, %v4623
    %v5025 = vadd.f32 %v5024, %v4647
    %v5026 = vadd.f32 %v5025, %v4671
    %v5027 = vadd.f32 %v5026, %v4695
    %v5028 = vadd.f32 %v5027, %v4719
    %v5029 = vadd.f32 %v5028, %v4743
    %v5030 = vadd.f32 %v5029, %v4767
    %v5031 = vrot.slane %v5030, 4
    %v5032 = vadd.f32 %v5030, %v5031
    %v5033 = vrot.slane %v5032, 2
    %v5034 = vadd.f32 %v5032, %v5033
    %v5035 = vrot.slane %v5034, 1
    %v5036 = vadd.f32 %v5034, %v5035
    %v5037 = vadd.f32 %v4025, %v4049
    %v5038 = vadd.f32 %v5037, %v4073
    %v5039 = vadd.f32 %v5038, %v4097
    %v5040 = vadd.f32 %v5039, %v4121
    %v5041 = vadd.f32 %v5040, %v4145
    %v5042 = vadd.f32 %v5041, %v4169
    %v5043 = vadd.f32 %v5042, %v4193
    %v5044 = vadd.f32 %v5043, %v4217
    %v5045 = vadd.f32 %v5044, %v4241
    %v5046 = vadd.f32 %v5045, %v4265
    %v5047 = vadd.f32 %v5046, %v4289
    %v5048 = vadd.f32 %v5047, %v4313
    %v5049 = vadd.f32 %v5048, %v4337
    %v5050 = vadd.f32 %v5049, %v4361
    %v5051 = vadd.f32 %v5050, %v4385
    %v5052 = vadd.f32 %v5051, %v4409
    %v5053 = vadd.f32 %v5052, %v4433
    %v5054 = vadd.f32 %v5053, %v4457
    %v5055 = vadd.f32 %v5054, %v4481
    %v5056 = vadd.f32 %v5055, %v4505
    %v5057 = vadd.f32 %v5056, %v4529
    %v5058 = vadd.f32 %v5057, %v4553
    %v5059 = vadd.f32 %v5058, %v4577
    %v5060 = vadd.f32 %v5059, %v4601
    %v5061 = vadd.f32 %v5060, %v4625
    %v5062 = vadd.f32 %v5061, %v4649
    %v5063 = vadd.f32 %v5062, %v4673
    %v5064 = vadd.f32 %v5063, %v4697
    %v5065 = vadd.f32 %v5064, %v4721
    %v5066 = vadd.f32 %v5065, %v4745
    %v5067 = vadd.f32 %v5066, %v4769
    %v5068 = vrot.slane %v5067, 4
    %v5069 = vadd.f32 %v5067, %v5068
    %v5070 = vrot.slane %v5069, 2
    %v5071 = vadd.f32 %v5069, %v5070
    %v5072 = vrot.slane %v5071, 1
    %v5073 = vadd.f32 %v5071, %v5072
    %v5074 = vadd.f32 %v4027, %v4051
    %v5075 = vadd.f32 %v5074, %v4075
    %v5076 = vadd.f32 %v5075, %v4099
    %v5077 = vadd.f32 %v5076, %v4123
    %v5078 = vadd.f32 %v5077, %v4147
    %v5079 = vadd.f32 %v5078, %v4171
    %v5080 = vadd.f32 %v5079, %v4195
    %v5081 = vadd.f32 %v5080, %v4219
    %v5082 = vadd.f32 %v5081, %v4243
    %v5083 = vadd.f32 %v5082, %v4267
    %v5084 = vadd.f32 %v5083, %v4291
    %v5085 = vadd.f32 %v5084, %v4315
    %v5086 = vadd.f32 %v5085, %v4339
    %v5087 = vadd.f32 %v5086, %v4363
    %v5088 = vadd.f32 %v5087, %v4387
    %v5089 = vadd.f32 %v5088, %v4411
    %v5090 = vadd.f32 %v5089, %v4435
    %v5091 = vadd.f32 %v5090, %v4459
    %v5092 = vadd.f32 %v5091, %v4483
    %v5093 = vadd.f32 %v5092, %v4507
    %v5094 = vadd.f32 %v5093, %v4531
    %v5095 = vadd.f32 %v5094, %v4555
    %v5096 = vadd.f32 %v5095, %v4579
    %v5097 = vadd.f32 %v5096, %v4603
    %v5098 = vadd.f32 %v5097, %v4627
    %v5099 = vadd.f32 %v5098, %v4651
    %v5100 = vadd.f32 %v5099, %v4675
    %v5101 = vadd.f32 %v5100, %v4699
    %v5102 = vadd.f32 %v5101, %v4723
    %v5103 = vadd.f32 %v5102, %v4747
    %v5104 = vadd.f32 %v5103, %v4771
    %v5105 = vrot.slane %v5104, 4
    %v5106 = vadd.f32 %v5104, %v5105
    %v5107 = vrot.slane %v5106, 2
    %v5108 = vadd.f32 %v5106, %v5107
    %v5109 = vrot.slane %v5108, 1
    %v5110 = vadd.f32 %v5108, %v5109
    %v5111 = vadd.f32 %v4029, %v4053
    %v5112 = vadd.f32 %v5111, %v4077
    %v5113 = vadd.f32 %v5112, %v4101
    %v5114 = vadd.f32 %v5113, %v4125
    %v5115 = vadd.f32 %v5114, %v4149
    %v5116 = vadd.f32 %v5115, %v4173
    %v5117 = vadd.f32 %v5116, %v4197
    %v5118 = vadd.f32 %v5117, %v4221
    %v5119 = vadd.f32 %v5118, %v4245
    %v5120 = vadd.f32 %v5119, %v4269
    %v5121 = vadd.f32 %v5120, %v4293
    %v5122 = vadd.f32 %v5121, %v4317
    %v5123 = vadd.f32 %v5122, %v4341
    %v5124 = vadd.f32 %v5123, %v4365
    %v5125 = vadd.f32 %v5124, %v4389
    %v5126 = vadd.f32 %v5125, %v4413
    %v5127 = vadd.f32 %v5126, %v4437
    %v5128 = vadd.f32 %v5127, %v4461
    %v5129 = vadd.f32 %v5128, %v4485
    %v5130 = vadd.f32 %v5129, %v4509
    %v5131 = vadd.f32 %v5130, %v4533
    %v5132 = vadd.f32 %v5131, %v4557
    %v5133 = vadd.f32 %v5132, %v4581
    %v5134 = vadd.f32 %v5133, %v4605
    %v5135 = vadd.f32 %v5134, %v4629
    %v5136 = vadd.f32 %v5135, %v4653
    %v5137 = vadd.f32 %v5136, %v4677
    %v5138 = vadd.f32 %v5137, %v4701
    %v5139 = vadd.f32 %v5138, %v4725
    %v5140 = vadd.f32 %v5139, %v4749
    %v5141 = vadd.f32 %v5140, %v4773
    %v5142 = vrot.slane %v5141, 4
    %v5143 = vadd.f32 %v5141, %v5142
    %v5144 = vrot.slane %v5143, 2
    %v5145 = vadd.f32 %v5143, %v5144
    %v5146 = vrot.slane %v5145, 1
    %v5147 = vadd.f32 %v5145, %v5146
    %v5148 = vadd.f32 %v4031, %v4055
    %v5149 = vadd.f32 %v5148, %v4079
    %v5150 = vadd.f32 %v5149, %v4103
    %v5151 = vadd.f32 %v5150, %v4127
    %v5152 = vadd.f32 %v5151, %v4151
    %v5153 = vadd.f32 %v5152, %v4175
    %v5154 = vadd.f32 %v5153, %v4199
    %v5155 = vadd.f32 %v5154, %v4223
    %v5156 = vadd.f32 %v5155, %v4247
    %v5157 = vadd.f32 %v5156, %v4271
    %v5158 = vadd.f32 %v5157, %v4295
    %v5159 = vadd.f32 %v5158, %v4319
    %v5160 = vadd.f32 %v5159, %v4343
    %v5161 = vadd.f32 %v5160, %v4367
    %v5162 = vadd.f32 %v5161, %v4391
    %v5163 = vadd.f32 %v5162, %v4415
    %v5164 = vadd.f32 %v5163, %v4439
    %v5165 = vadd.f32 %v5164, %v4463
    %v5166 = vadd.f32 %v5165, %v4487
    %v5167 = vadd.f32 %v5166, %v4511
    %v5168 = vadd.f32 %v5167, %v4535
    %v5169 = vadd.f32 %v5168, %v4559
    %v5170 = vadd.f32 %v5169, %v4583
    %v5171 = vadd.f32 %v5170, %v4607
    %v5172 = vadd.f32 %v5171, %v4631
    %v5173 = vadd.f32 %v5172, %v4655
    %v5174 = vadd.f32 %v5173, %v4679
    %v5175 = vadd.f32 %v5174, %v4703
    %v5176 = vadd.f32 %v5175, %v4727
    %v5177 = vadd.f32 %v5176, %v4751
    %v5178 = vadd.f32 %v5177, %v4775
    %v5179 = vrot.slane %v5178, 4
    %v5180 = vadd.f32 %v5178, %v5179
    %v5181 = vrot.slane %v5180, 2
    %v5182 = vadd.f32 %v5180, %v5181
    %v5183 = vrot.slane %v5182, 1
    %v5184 = vadd.f32 %v5182, %v5183
    %v5185 = vadd.f32 %v4033, %v4057
    %v5186 = vadd.f32 %v5185, %v4081
    %v5187 = vadd.f32 %v5186, %v4105
    %v5188 = vadd.f32 %v5187, %v4129
    %v5189 = vadd.f32 %v5188, %v4153
    %v5190 = vadd.f32 %v5189, %v4177
    %v5191 = vadd.f32 %v5190, %v4201
    %v5192 = vadd.f32 %v5191, %v4225
    %v5193 = vadd.f32 %v5192, %v4249
    %v5194 = vadd.f32 %v5193, %v4273
    %v5195 = vadd.f32 %v5194, %v4297
    %v5196 = vadd.f32 %v5195, %v4321
    %v5197 = vadd.f32 %v5196, %v4345
    %v5198 = vadd.f32 %v5197, %v4369
    %v5199 = vadd.f32 %v5198, %v4393
    %v5200 = vadd.f32 %v5199, %v4417
    %v5201 = vadd.f32 %v5200, %v4441
    %v5202 = vadd.f32 %v5201, %v4465
    %v5203 = vadd.f32 %v5202, %v4489
    %v5204 = vadd.f32 %v5203, %v4513
    %v5205 = vadd.f32 %v5204, %v4537
    %v5206 = vadd.f32 %v5205, %v4561
    %v5207 = vadd.f32 %v5206, %v4585
    %v5208 = vadd.f32 %v5207, %v4609
    %v5209 = vadd.f32 %v5208, %v4633
    %v5210 = vadd.f32 %v5209, %v4657
    %v5211 = vadd.f32 %v5210, %v4681
    %v5212 = vadd.f32 %v5211, %v4705
    %v5213 = vadd.f32 %v5212, %v4729
    %v5214 = vadd.f32 %v5213, %v4753
    %v5215 = vadd.f32 %v5214, %v4777
    %v5216 = vrot.slane %v5215, 4
    %v5217 = vadd.f32 %v5215, %v5216
    %v5218 = vrot.slane %v5217, 2
    %v5219 = vadd.f32 %v5217, %v5218
    %v5220 = vrot.slane %v5219, 1
    %v5221 = vadd.f32 %v5219, %v5220
    %v5222 = vcvt.f32.s32.to.zero.pseudo %v18
    %v5223 = vcvt.f32.s32.to.zero.pseudo %v19
    %v5224 = vcvt.f32.s32.to.zero.pseudo %v20
    %v5225 = vcvt.f32.s32.to.zero.pseudo %v21
    %v5226 = vcvt.f32.s32.to.zero.pseudo %v22
    %v5227 = vcvt.f32.s32.to.zero.pseudo %v23
    %v5228 = vcvt.f32.s32.to.zero.pseudo %v24
    %v5229 = vcvt.f32.s32.to.zero.pseudo %v25
    %v5230 = vcvt.f32.s32.to.zero.pseudo %v26
    %v5231 = vcvt.f32.s32.to.zero.pseudo %v27
    %v5232 = vcvt.f32.s32.to.zero.pseudo %v28
    %v5233 = vcvt.f32.s32.to.zero.pseudo %v29
    %v5234 = vlaneseq
    %v5235 = vshrl.u32 %v5234, 7
    %v5236 = vadd.s32 %v5235, 8
    %v5237 = vadd.s32 %v5235, 16
    %v5238 = vadd.s32 %v5235, 24
    %v5239 = vadd.s32 %v5235, 32
    %v5240 = vadd.s32 %v5235, 40
    %v5241 = vadd.s32 %v5235, 48
    %v5242 = vadd.s32 %v5235, 56
    %v5243 = vadd.s32 %v5235, 64
    %v5244 = vadd.s32 %v5235, 72
    %v5245 = vadd.s32 %v5235, 80
    %v5246 = vadd.s32 %v5235, 88
    %v5247 = vadd.s32 %v5235, 96
    %v5248 = vadd.s32 %v5235, 104
    %v5249 = vadd.s32 %v5235, 112
    %v5250 = vadd.s32 %v5235, 120
    %v5251 = vadd.s32 %v5235, 128
    %v5252 = vadd.s32 %v5235, 136
    %v5253 = vadd.s32 %v5235, 144
    %v5254 = vadd.s32 %v5235, 152
    %v5255 = vadd.s32 %v5235, 160
    %v5256 = vadd.s32 %v5235, 168
    %v5257 = vadd.s32 %v5235, 176
    %v5258 = vadd.s32 %v5235, 184
    %v5259 = vadd.s32 %v5235, 192
    %v5260 = vadd.s32 %v5235, 200
    %v5261 = vadd.s32 %v5235, 208
    %v5262 = vadd.s32 %v5235, 216
    %v5263 = vadd.s32 %v5235, 224
    %v5264 = vadd.s32 %v5235, 232
    %v5265 = vadd.s32 %v5235, 240
    %v5266 = vadd.s32 %v5235, 248
    %v5267 = vperm.slane %v5222, 4
    %v5268 = vperm.slane %v5223, 4
    %v5269 = vperm.slane %v5224, 4
    %v5270 = vperm.slane %v5225, 4
    %v5271 = vperm.slane %v5226, 4
    %v5272 = vperm.slane %v5227, 4
    %v5273 = vperm.slane %v5228, 4
    %v5274 = vperm.slane %v5229, 4
    %v5275 = vperm.slane %v5230, 4
    %v5276 = vperm.slane %v5231, 4
    %v5277 = vperm.slane %v5232, 4
    %v5278 = vperm.slane %v5233, 4
    %vm5279 = vcmp.eq.s32.totalorder %v5235, %v5267
    %vm5280 = vcmp.eq.s32.totalorder %v5235, %v5268
    %vm5281 = vcmp.eq.s32.totalorder %v5235, %v5269
    %vm5282 = vcmp.eq.s32.totalorder %v5235, %v5270
    %vm5283 = vcmp.eq.s32.totalorder %v5235, %v5271
    %vm5284 = vcmp.eq.s32.totalorder %v5235, %v5272
    %vm5285 = vcmp.eq.s32.totalorder %v5235, %v5273
    %vm5286 = vcmp.eq.s32.totalorder %v5235, %v5274
    %vm5287 = vcmp.eq.s32.totalorder %v5235, %v5275
    %vm5288 = vcmp.eq.s32.totalorder %v5235, %v5276
    %vm5289 = vcmp.eq.s32.totalorder %v5235, %v5277
    %vm5290 = vcmp.eq.s32.totalorder %v5235, %v5278
    %vm5291 = vcmp.eq.s32.totalorder %v5236, %v5267
    %vm5292 = vcmp.eq.s32.totalorder %v5236, %v5268
    %vm5293 = vcmp.eq.s32.totalorder %v5236, %v5269
    %vm5294 = vcmp.eq.s32.totalorder %v5236, %v5270
    %vm5295 = vcmp.eq.s32.totalorder %v5236, %v5271
    %vm5296 = vcmp.eq.s32.totalorder %v5236, %v5272
    %vm5297 = vcmp.eq.s32.totalorder %v5236, %v5273
    %vm5298 = vcmp.eq.s32.totalorder %v5236, %v5274
    %vm5299 = vcmp.eq.s32.totalorder %v5236, %v5275
    %vm5300 = vcmp.eq.s32.totalorder %v5236, %v5276
    %vm5301 = vcmp.eq.s32.totalorder %v5236, %v5277
    %vm5302 = vcmp.eq.s32.totalorder %v5236, %v5278
    %vm5303 = vcmp.eq.s32.totalorder %v5237, %v5267
    %vm5304 = vcmp.eq.s32.totalorder %v5237, %v5268
    %vm5305 = vcmp.eq.s32.totalorder %v5237, %v5269
    %vm5306 = vcmp.eq.s32.totalorder %v5237, %v5270
    %vm5307 = vcmp.eq.s32.totalorder %v5237, %v5271
    %vm5308 = vcmp.eq.s32.totalorder %v5237, %v5272
    %vm5309 = vcmp.eq.s32.totalorder %v5237, %v5273
    %vm5310 = vcmp.eq.s32.totalorder %v5237, %v5274
    %vm5311 = vcmp.eq.s32.totalorder %v5237, %v5275
    %vm5312 = vcmp.eq.s32.totalorder %v5237, %v5276
    %vm5313 = vcmp.eq.s32.totalorder %v5237, %v5277
    %vm5314 = vcmp.eq.s32.totalorder %v5237, %v5278
    %vm5315 = vcmp.eq.s32.totalorder %v5238, %v5267
    %vm5316 = vcmp.eq.s32.totalorder %v5238, %v5268
    %vm5317 = vcmp.eq.s32.totalorder %v5238, %v5269
    %vm5318 = vcmp.eq.s32.totalorder %v5238, %v5270
    %vm5319 = vcmp.eq.s32.totalorder %v5238, %v5271
    %vm5320 = vcmp.eq.s32.totalorder %v5238, %v5272
    %vm5321 = vcmp.eq.s32.totalorder %v5238, %v5273
    %vm5322 = vcmp.eq.s32.totalorder %v5238, %v5274
    %vm5323 = vcmp.eq.s32.totalorder %v5238, %v5275
    %vm5324 = vcmp.eq.s32.totalorder %v5238, %v5276
    %vm5325 = vcmp.eq.s32.totalorder %v5238, %v5277
    %vm5326 = vcmp.eq.s32.totalorder %v5238, %v5278
    %vm5327 = vcmp.eq.s32.totalorder %v5239, %v5267
    %vm5328 = vcmp.eq.s32.totalorder %v5239, %v5268
    %vm5329 = vcmp.eq.s32.totalorder %v5239, %v5269
    %vm5330 = vcmp.eq.s32.totalorder %v5239, %v5270
    %vm5331 = vcmp.eq.s32.totalorder %v5239, %v5271
    %vm5332 = vcmp.eq.s32.totalorder %v5239, %v5272
    %vm5333 = vcmp.eq.s32.totalorder %v5239, %v5273
    %vm5334 = vcmp.eq.s32.totalorder %v5239, %v5274
    %vm5335 = vcmp.eq.s32.totalorder %v5239, %v5275
    %vm5336 = vcmp.eq.s32.totalorder %v5239, %v5276
    %vm5337 = vcmp.eq.s32.totalorder %v5239, %v5277
    %vm5338 = vcmp.eq.s32.totalorder %v5239, %v5278
    %vm5339 = vcmp.eq.s32.totalorder %v5240, %v5267
    %vm5340 = vcmp.eq.s32.totalorder %v5240, %v5268
    %vm5341 = vcmp.eq.s32.totalorder %v5240, %v5269
    %vm5342 = vcmp.eq.s32.totalorder %v5240, %v5270
    %vm5343 = vcmp.eq.s32.totalorder %v5240, %v5271
    %vm5344 = vcmp.eq.s32.totalorder %v5240, %v5272
    %vm5345 = vcmp.eq.s32.totalorder %v5240, %v5273
    %vm5346 = vcmp.eq.s32.totalorder %v5240, %v5274
    %vm5347 = vcmp.eq.s32.totalorder %v5240, %v5275
    %vm5348 = vcmp.eq.s32.totalorder %v5240, %v5276
    %vm5349 = vcmp.eq.s32.totalorder %v5240, %v5277
    %vm5350 = vcmp.eq.s32.totalorder %v5240, %v5278
    %vm5351 = vcmp.eq.s32.totalorder %v5241, %v5267
    %vm5352 = vcmp.eq.s32.totalorder %v5241, %v5268
    %vm5353 = vcmp.eq.s32.totalorder %v5241, %v5269
    %vm5354 = vcmp.eq.s32.totalorder %v5241, %v5270
    %vm5355 = vcmp.eq.s32.totalorder %v5241, %v5271
    %vm5356 = vcmp.eq.s32.totalorder %v5241, %v5272
    %vm5357 = vcmp.eq.s32.totalorder %v5241, %v5273
    %vm5358 = vcmp.eq.s32.totalorder %v5241, %v5274
    %vm5359 = vcmp.eq.s32.totalorder %v5241, %v5275
    %vm5360 = vcmp.eq.s32.totalorder %v5241, %v5276
    %vm5361 = vcmp.eq.s32.totalorder %v5241, %v5277
    %vm5362 = vcmp.eq.s32.totalorder %v5241, %v5278
    %vm5363 = vcmp.eq.s32.totalorder %v5242, %v5267
    %vm5364 = vcmp.eq.s32.totalorder %v5242, %v5268
    %vm5365 = vcmp.eq.s32.totalorder %v5242, %v5269
    %vm5366 = vcmp.eq.s32.totalorder %v5242, %v5270
    %vm5367 = vcmp.eq.s32.totalorder %v5242, %v5271
    %vm5368 = vcmp.eq.s32.totalorder %v5242, %v5272
    %vm5369 = vcmp.eq.s32.totalorder %v5242, %v5273
    %vm5370 = vcmp.eq.s32.totalorder %v5242, %v5274
    %vm5371 = vcmp.eq.s32.totalorder %v5242, %v5275
    %vm5372 = vcmp.eq.s32.totalorder %v5242, %v5276
    %vm5373 = vcmp.eq.s32.totalorder %v5242, %v5277
    %vm5374 = vcmp.eq.s32.totalorder %v5242, %v5278
    %vm5375 = vcmp.eq.s32.totalorder %v5243, %v5267
    %vm5376 = vcmp.eq.s32.totalorder %v5243, %v5268
    %vm5377 = vcmp.eq.s32.totalorder %v5243, %v5269
    %vm5378 = vcmp.eq.s32.totalorder %v5243, %v5270
    %vm5379 = vcmp.eq.s32.totalorder %v5243, %v5271
    %vm5380 = vcmp.eq.s32.totalorder %v5243, %v5272
    %vm5381 = vcmp.eq.s32.totalorder %v5243, %v5273
    %vm5382 = vcmp.eq.s32.totalorder %v5243, %v5274
    %vm5383 = vcmp.eq.s32.totalorder %v5243, %v5275
    %vm5384 = vcmp.eq.s32.totalorder %v5243, %v5276
    %vm5385 = vcmp.eq.s32.totalorder %v5243, %v5277
    %vm5386 = vcmp.eq.s32.totalorder %v5243, %v5278
    %vm5387 = vcmp.eq.s32.totalorder %v5244, %v5267
    %vm5388 = vcmp.eq.s32.totalorder %v5244, %v5268
    %vm5389 = vcmp.eq.s32.totalorder %v5244, %v5269
    %vm5390 = vcmp.eq.s32.totalorder %v5244, %v5270
    %vm5391 = vcmp.eq.s32.totalorder %v5244, %v5271
    %vm5392 = vcmp.eq.s32.totalorder %v5244, %v5272
    %vm5393 = vcmp.eq.s32.totalorder %v5244, %v5273
    %vm5394 = vcmp.eq.s32.totalorder %v5244, %v5274
    %vm5395 = vcmp.eq.s32.totalorder %v5244, %v5275
    %vm5396 = vcmp.eq.s32.totalorder %v5244, %v5276
    %vm5397 = vcmp.eq.s32.totalorder %v5244, %v5277
    %vm5398 = vcmp.eq.s32.totalorder %v5244, %v5278
    %vm5399 = vcmp.eq.s32.totalorder %v5245, %v5267
    %vm5400 = vcmp.eq.s32.totalorder %v5245, %v5268
    %vm5401 = vcmp.eq.s32.totalorder %v5245, %v5269
    %vm5402 = vcmp.eq.s32.totalorder %v5245, %v5270
    %vm5403 = vcmp.eq.s32.totalorder %v5245, %v5271
    %vm5404 = vcmp.eq.s32.totalorder %v5245, %v5272
    %vm5405 = vcmp.eq.s32.totalorder %v5245, %v5273
    %vm5406 = vcmp.eq.s32.totalorder %v5245, %v5274
    %vm5407 = vcmp.eq.s32.totalorder %v5245, %v5275
    %vm5408 = vcmp.eq.s32.totalorder %v5245, %v5276
    %vm5409 = vcmp.eq.s32.totalorder %v5245, %v5277
    %vm5410 = vcmp.eq.s32.totalorder %v5245, %v5278
    %vm5411 = vcmp.eq.s32.totalorder %v5246, %v5267
    %vm5412 = vcmp.eq.s32.totalorder %v5246, %v5268
    %vm5413 = vcmp.eq.s32.totalorder %v5246, %v5269
    %vm5414 = vcmp.eq.s32.totalorder %v5246, %v5270
    %vm5415 = vcmp.eq.s32.totalorder %v5246, %v5271
    %vm5416 = vcmp.eq.s32.totalorder %v5246, %v5272
    %vm5417 = vcmp.eq.s32.totalorder %v5246, %v5273
    %vm5418 = vcmp.eq.s32.totalorder %v5246, %v5274
    %vm5419 = vcmp.eq.s32.totalorder %v5246, %v5275
    %vm5420 = vcmp.eq.s32.totalorder %v5246, %v5276
    %vm5421 = vcmp.eq.s32.totalorder %v5246, %v5277
    %vm5422 = vcmp.eq.s32.totalorder %v5246, %v5278
    %vm5423 = vcmp.eq.s32.totalorder %v5247, %v5267
    %vm5424 = vcmp.eq.s32.totalorder %v5247, %v5268
    %vm5425 = vcmp.eq.s32.totalorder %v5247, %v5269
    %vm5426 = vcmp.eq.s32.totalorder %v5247, %v5270
    %vm5427 = vcmp.eq.s32.totalorder %v5247, %v5271
    %vm5428 = vcmp.eq.s32.totalorder %v5247, %v5272
    %vm5429 = vcmp.eq.s32.totalorder %v5247, %v5273
    %vm5430 = vcmp.eq.s32.totalorder %v5247, %v5274
    %vm5431 = vcmp.eq.s32.totalorder %v5247, %v5275
    %vm5432 = vcmp.eq.s32.totalorder %v5247, %v5276
    %vm5433 = vcmp.eq.s32.totalorder %v5247, %v5277
    %vm5434 = vcmp.eq.s32.totalorder %v5247, %v5278
    %vm5435 = vcmp.eq.s32.totalorder %v5248, %v5267
    %vm5436 = vcmp.eq.s32.totalorder %v5248, %v5268
    %vm5437 = vcmp.eq.s32.totalorder %v5248, %v5269
    %vm5438 = vcmp.eq.s32.totalorder %v5248, %v5270
    %vm5439 = vcmp.eq.s32.totalorder %v5248, %v5271
    %vm5440 = vcmp.eq.s32.totalorder %v5248, %v5272
    %vm5441 = vcmp.eq.s32.totalorder %v5248, %v5273
    %vm5442 = vcmp.eq.s32.totalorder %v5248, %v5274
    %vm5443 = vcmp.eq.s32.totalorder %v5248, %v5275
    %vm5444 = vcmp.eq.s32.totalorder %v5248, %v5276
    %vm5445 = vcmp.eq.s32.totalorder %v5248, %v5277
    %vm5446 = vcmp.eq.s32.totalorder %v5248, %v5278
    %vm5447 = vcmp.eq.s32.totalorder %v5249, %v5267
    %vm5448 = vcmp.eq.s32.totalorder %v5249, %v5268
    %vm5449 = vcmp.eq.s32.totalorder %v5249, %v5269
    %vm5450 = vcmp.eq.s32.totalorder %v5249, %v5270
    %vm5451 = vcmp.eq.s32.totalorder %v5249, %v5271
    %vm5452 = vcmp.eq.s32.totalorder %v5249, %v5272
    %vm5453 = vcmp.eq.s32.totalorder %v5249, %v5273
    %vm5454 = vcmp.eq.s32.totalorder %v5249, %v5274
    %vm5455 = vcmp.eq.s32.totalorder %v5249, %v5275
    %vm5456 = vcmp.eq.s32.totalorder %v5249, %v5276
    %vm5457 = vcmp.eq.s32.totalorder %v5249, %v5277
    %vm5458 = vcmp.eq.s32.totalorder %v5249, %v5278
    %vm5459 = vcmp.eq.s32.totalorder %v5250, %v5267
    %vm5460 = vcmp.eq.s32.totalorder %v5250, %v5268
    %vm5461 = vcmp.eq.s32.totalorder %v5250, %v5269
    %vm5462 = vcmp.eq.s32.totalorder %v5250, %v5270
    %vm5463 = vcmp.eq.s32.totalorder %v5250, %v5271
    %vm5464 = vcmp.eq.s32.totalorder %v5250, %v5272
    %vm5465 = vcmp.eq.s32.totalorder %v5250, %v5273
    %vm5466 = vcmp.eq.s32.totalorder %v5250, %v5274
    %vm5467 = vcmp.eq.s32.totalorder %v5250, %v5275
    %vm5468 = vcmp.eq.s32.totalorder %v5250, %v5276
    %vm5469 = vcmp.eq.s32.totalorder %v5250, %v5277
    %vm5470 = vcmp.eq.s32.totalorder %v5250, %v5278
    %vm5471 = vcmp.eq.s32.totalorder %v5251, %v5267
    %vm5472 = vcmp.eq.s32.totalorder %v5251, %v5268
    %vm5473 = vcmp.eq.s32.totalorder %v5251, %v5269
    %vm5474 = vcmp.eq.s32.totalorder %v5251, %v5270
    %vm5475 = vcmp.eq.s32.totalorder %v5251, %v5271
    %vm5476 = vcmp.eq.s32.totalorder %v5251, %v5272
    %vm5477 = vcmp.eq.s32.totalorder %v5251, %v5273
    %vm5478 = vcmp.eq.s32.totalorder %v5251, %v5274
    %vm5479 = vcmp.eq.s32.totalorder %v5251, %v5275
    %vm5480 = vcmp.eq.s32.totalorder %v5251, %v5276
    %vm5481 = vcmp.eq.s32.totalorder %v5251, %v5277
    %vm5482 = vcmp.eq.s32.totalorder %v5251, %v5278
    %vm5483 = vcmp.eq.s32.totalorder %v5252, %v5267
    %vm5484 = vcmp.eq.s32.totalorder %v5252, %v5268
    %vm5485 = vcmp.eq.s32.totalorder %v5252, %v5269
    %vm5486 = vcmp.eq.s32.totalorder %v5252, %v5270
    %vm5487 = vcmp.eq.s32.totalorder %v5252, %v5271
    %vm5488 = vcmp.eq.s32.totalorder %v5252, %v5272
    %vm5489 = vcmp.eq.s32.totalorder %v5252, %v5273
    %vm5490 = vcmp.eq.s32.totalorder %v5252, %v5274
    %vm5491 = vcmp.eq.s32.totalorder %v5252, %v5275
    %vm5492 = vcmp.eq.s32.totalorder %v5252, %v5276
    %vm5493 = vcmp.eq.s32.totalorder %v5252, %v5277
    %vm5494 = vcmp.eq.s32.totalorder %v5252, %v5278
    %vm5495 = vcmp.eq.s32.totalorder %v5253, %v5267
    %vm5496 = vcmp.eq.s32.totalorder %v5253, %v5268
    %vm5497 = vcmp.eq.s32.totalorder %v5253, %v5269
    %vm5498 = vcmp.eq.s32.totalorder %v5253, %v5270
    %vm5499 = vcmp.eq.s32.totalorder %v5253, %v5271
    %vm5500 = vcmp.eq.s32.totalorder %v5253, %v5272
    %vm5501 = vcmp.eq.s32.totalorder %v5253, %v5273
    %vm5502 = vcmp.eq.s32.totalorder %v5253, %v5274
    %vm5503 = vcmp.eq.s32.totalorder %v5253, %v5275
    %vm5504 = vcmp.eq.s32.totalorder %v5253, %v5276
    %vm5505 = vcmp.eq.s32.totalorder %v5253, %v5277
    %vm5506 = vcmp.eq.s32.totalorder %v5253, %v5278
    %vm5507 = vcmp.eq.s32.totalorder %v5254, %v5267
    %vm5508 = vcmp.eq.s32.totalorder %v5254, %v5268
    %vm5509 = vcmp.eq.s32.totalorder %v5254, %v5269
    %vm5510 = vcmp.eq.s32.totalorder %v5254, %v5270
    %vm5511 = vcmp.eq.s32.totalorder %v5254, %v5271
    %vm5512 = vcmp.eq.s32.totalorder %v5254, %v5272
    %vm5513 = vcmp.eq.s32.totalorder %v5254, %v5273
    %vm5514 = vcmp.eq.s32.totalorder %v5254, %v5274
    %vm5515 = vcmp.eq.s32.totalorder %v5254, %v5275
    %vm5516 = vcmp.eq.s32.totalorder %v5254, %v5276
    %vm5517 = vcmp.eq.s32.totalorder %v5254, %v5277
    %vm5518 = vcmp.eq.s32.totalorder %v5254, %v5278
    %vm5519 = vcmp.eq.s32.totalorder %v5255, %v5267
    %vm5520 = vcmp.eq.s32.totalorder %v5255, %v5268
    %vm5521 = vcmp.eq.s32.totalorder %v5255, %v5269
    %vm5522 = vcmp.eq.s32.totalorder %v5255, %v5270
    %vm5523 = vcmp.eq.s32.totalorder %v5255, %v5271
    %vm5524 = vcmp.eq.s32.totalorder %v5255, %v5272
    %vm5525 = vcmp.eq.s32.totalorder %v5255, %v5273
    %vm5526 = vcmp.eq.s32.totalorder %v5255, %v5274
    %vm5527 = vcmp.eq.s32.totalorder %v5255, %v5275
    %vm5528 = vcmp.eq.s32.totalorder %v5255, %v5276
    %vm5529 = vcmp.eq.s32.totalorder %v5255, %v5277
    %vm5530 = vcmp.eq.s32.totalorder %v5255, %v5278
    %vm5531 = vcmp.eq.s32.totalorder %v5256, %v5267
    %vm5532 = vcmp.eq.s32.totalorder %v5256, %v5268
    %vm5533 = vcmp.eq.s32.totalorder %v5256, %v5269
    %vm5534 = vcmp.eq.s32.totalorder %v5256, %v5270
    %vm5535 = vcmp.eq.s32.totalorder %v5256, %v5271
    %vm5536 = vcmp.eq.s32.totalorder %v5256, %v5272
    %vm5537 = vcmp.eq.s32.totalorder %v5256, %v5273
    %vm5538 = vcmp.eq.s32.totalorder %v5256, %v5274
    %vm5539 = vcmp.eq.s32.totalorder %v5256, %v5275
    %vm5540 = vcmp.eq.s32.totalorder %v5256, %v5276
    %vm5541 = vcmp.eq.s32.totalorder %v5256, %v5277
    %vm5542 = vcmp.eq.s32.totalorder %v5256, %v5278
    %vm5543 = vcmp.eq.s32.totalorder %v5257, %v5267
    %vm5544 = vcmp.eq.s32.totalorder %v5257, %v5268
    %vm5545 = vcmp.eq.s32.totalorder %v5257, %v5269
    %vm5546 = vcmp.eq.s32.totalorder %v5257, %v5270
    %vm5547 = vcmp.eq.s32.totalorder %v5257, %v5271
    %vm5548 = vcmp.eq.s32.totalorder %v5257, %v5272
    %vm5549 = vcmp.eq.s32.totalorder %v5257, %v5273
    %vm5550 = vcmp.eq.s32.totalorder %v5257, %v5274
    %vm5551 = vcmp.eq.s32.totalorder %v5257, %v5275
    %vm5552 = vcmp.eq.s32.totalorder %v5257, %v5276
    %vm5553 = vcmp.eq.s32.totalorder %v5257, %v5277
    %vm5554 = vcmp.eq.s32.totalorder %v5257, %v5278
    %vm5555 = vcmp.eq.s32.totalorder %v5258, %v5267
    %vm5556 = vcmp.eq.s32.totalorder %v5258, %v5268
    %vm5557 = vcmp.eq.s32.totalorder %v5258, %v5269
    %vm5558 = vcmp.eq.s32.totalorder %v5258, %v5270
    %vm5559 = vcmp.eq.s32.totalorder %v5258, %v5271
    %vm5560 = vcmp.eq.s32.totalorder %v5258, %v5272
    %vm5561 = vcmp.eq.s32.totalorder %v5258, %v5273
    %vm5562 = vcmp.eq.s32.totalorder %v5258, %v5274
    %vm5563 = vcmp.eq.s32.totalorder %v5258, %v5275
    %vm5564 = vcmp.eq.s32.totalorder %v5258, %v5276
    %vm5565 = vcmp.eq.s32.totalorder %v5258, %v5277
    %vm5566 = vcmp.eq.s32.totalorder %v5258, %v5278
    %vm5567 = vcmp.eq.s32.totalorder %v5259, %v5267
    %vm5568 = vcmp.eq.s32.totalorder %v5259, %v5268
    %vm5569 = vcmp.eq.s32.totalorder %v5259, %v5269
    %vm5570 = vcmp.eq.s32.totalorder %v5259, %v5270
    %vm5571 = vcmp.eq.s32.totalorder %v5259, %v5271
    %vm5572 = vcmp.eq.s32.totalorder %v5259, %v5272
    %vm5573 = vcmp.eq.s32.totalorder %v5259, %v5273
    %vm5574 = vcmp.eq.s32.totalorder %v5259, %v5274
    %vm5575 = vcmp.eq.s32.totalorder %v5259, %v5275
    %vm5576 = vcmp.eq.s32.totalorder %v5259, %v5276
    %vm5577 = vcmp.eq.s32.totalorder %v5259, %v5277
    %vm5578 = vcmp.eq.s32.totalorder %v5259, %v5278
    %vm5579 = vcmp.eq.s32.totalorder %v5260, %v5267
    %vm5580 = vcmp.eq.s32.totalorder %v5260, %v5268
    %vm5581 = vcmp.eq.s32.totalorder %v5260, %v5269
    %vm5582 = vcmp.eq.s32.totalorder %v5260, %v5270
    %vm5583 = vcmp.eq.s32.totalorder %v5260, %v5271
    %vm5584 = vcmp.eq.s32.totalorder %v5260, %v5272
    %vm5585 = vcmp.eq.s32.totalorder %v5260, %v5273
    %vm5586 = vcmp.eq.s32.totalorder %v5260, %v5274
    %vm5587 = vcmp.eq.s32.totalorder %v5260, %v5275
    %vm5588 = vcmp.eq.s32.totalorder %v5260, %v5276
    %vm5589 = vcmp.eq.s32.totalorder %v5260, %v5277
    %vm5590 = vcmp.eq.s32.totalorder %v5260, %v5278
    %vm5591 = vcmp.eq.s32.totalorder %v5261, %v5267
    %vm5592 = vcmp.eq.s32.totalorder %v5261, %v5268
    %vm5593 = vcmp.eq.s32.totalorder %v5261, %v5269
    %vm5594 = vcmp.eq.s32.totalorder %v5261, %v5270
    %vm5595 = vcmp.eq.s32.totalorder %v5261, %v5271
    %vm5596 = vcmp.eq.s32.totalorder %v5261, %v5272
    %vm5597 = vcmp.eq.s32.totalorder %v5261, %v5273
    %vm5598 = vcmp.eq.s32.totalorder %v5261, %v5274
    %vm5599 = vcmp.eq.s32.totalorder %v5261, %v5275
    %vm5600 = vcmp.eq.s32.totalorder %v5261, %v5276
    %vm5601 = vcmp.eq.s32.totalorder %v5261, %v5277
    %vm5602 = vcmp.eq.s32.totalorder %v5261, %v5278
    %vm5603 = vcmp.eq.s32.totalorder %v5262, %v5267
    %vm5604 = vcmp.eq.s32.totalorder %v5262, %v5268
    %vm5605 = vcmp.eq.s32.totalorder %v5262, %v5269
    %vm5606 = vcmp.eq.s32.totalorder %v5262, %v5270
    %vm5607 = vcmp.eq.s32.totalorder %v5262, %v5271
    %vm5608 = vcmp.eq.s32.totalorder %v5262, %v5272
    %vm5609 = vcmp.eq.s32.totalorder %v5262, %v5273
    %vm5610 = vcmp.eq.s32.totalorder %v5262, %v5274
    %vm5611 = vcmp.eq.s32.totalorder %v5262, %v5275
    %vm5612 = vcmp.eq.s32.totalorder %v5262, %v5276
    %vm5613 = vcmp.eq.s32.totalorder %v5262, %v5277
    %vm5614 = vcmp.eq.s32.totalorder %v5262, %v5278
    %vm5615 = vcmp.eq.s32.totalorder %v5263, %v5267
    %vm5616 = vcmp.eq.s32.totalorder %v5263, %v5268
    %vm5617 = vcmp.eq.s32.totalorder %v5263, %v5269
    %vm5618 = vcmp.eq.s32.totalorder %v5263, %v5270
    %vm5619 = vcmp.eq.s32.totalorder %v5263, %v5271
    %vm5620 = vcmp.eq.s32.totalorder %v5263, %v5272
    %vm5621 = vcmp.eq.s32.totalorder %v5263, %v5273
    %vm5622 = vcmp.eq.s32.totalorder %v5263, %v5274
    %vm5623 = vcmp.eq.s32.totalorder %v5263, %v5275
    %vm5624 = vcmp.eq.s32.totalorder %v5263, %v5276
    %vm5625 = vcmp.eq.s32.totalorder %v5263, %v5277
    %vm5626 = vcmp.eq.s32.totalorder %v5263, %v5278
    %vm5627 = vcmp.eq.s32.totalorder %v5264, %v5267
    %vm5628 = vcmp.eq.s32.totalorder %v5264, %v5268
    %vm5629 = vcmp.eq.s32.totalorder %v5264, %v5269
    %vm5630 = vcmp.eq.s32.totalorder %v5264, %v5270
    %vm5631 = vcmp.eq.s32.totalorder %v5264, %v5271
    %vm5632 = vcmp.eq.s32.totalorder %v5264, %v5272
    %vm5633 = vcmp.eq.s32.totalorder %v5264, %v5273
    %vm5634 = vcmp.eq.s32.totalorder %v5264, %v5274
    %vm5635 = vcmp.eq.s32.totalorder %v5264, %v5275
    %vm5636 = vcmp.eq.s32.totalorder %v5264, %v5276
    %vm5637 = vcmp.eq.s32.totalorder %v5264, %v5277
    %vm5638 = vcmp.eq.s32.totalorder %v5264, %v5278
    %vm5639 = vcmp.eq.s32.totalorder %v5265, %v5267
    %vm5640 = vcmp.eq.s32.totalorder %v5265, %v5268
    %vm5641 = vcmp.eq.s32.totalorder %v5265, %v5269
    %vm5642 = vcmp.eq.s32.totalorder %v5265, %v5270
    %vm5643 = vcmp.eq.s32.totalorder %v5265, %v5271
    %vm5644 = vcmp.eq.s32.totalorder %v5265, %v5272
    %vm5645 = vcmp.eq.s32.totalorder %v5265, %v5273
    %vm5646 = vcmp.eq.s32.totalorder %v5265, %v5274
    %vm5647 = vcmp.eq.s32.totalorder %v5265, %v5275
    %vm5648 = vcmp.eq.s32.totalorder %v5265, %v5276
    %vm5649 = vcmp.eq.s32.totalorder %v5265, %v5277
    %vm5650 = vcmp.eq.s32.totalorder %v5265, %v5278
    %vm5651 = vcmp.eq.s32.totalorder %v5266, %v5267
    %vm5652 = vcmp.eq.s32.totalorder %v5266, %v5268
    %vm5653 = vcmp.eq.s32.totalorder %v5266, %v5269
    %vm5654 = vcmp.eq.s32.totalorder %v5266, %v5270
    %vm5655 = vcmp.eq.s32.totalorder %v5266, %v5271
    %vm5656 = vcmp.eq.s32.totalorder %v5266, %v5272
    %vm5657 = vcmp.eq.s32.totalorder %v5266, %v5273
    %vm5658 = vcmp.eq.s32.totalorder %v5266, %v5274
    %vm5659 = vcmp.eq.s32.totalorder %v5266, %v5275
    %vm5660 = vcmp.eq.s32.totalorder %v5266, %v5276
    %vm5661 = vcmp.eq.s32.totalorder %v5266, %v5277
    %vm5662 = vcmp.eq.s32.totalorder %v5266, %v5278
    %v5663 = vsel %vm5279, %v3626, 0.0
    %v5664 = vsel %vm5280, %v3627, 0.0
    %v5665 = vsel %vm5281, %v3628, 0.0
    %v5666 = vsel %vm5282, %v3629, 0.0
    %v5667 = vsel %vm5283, %v3630, 0.0
    %v5668 = vsel %vm5284, %v3631, 0.0
    %v5669 = vsel %vm5285, %v3632, 0.0
    %v5670 = vsel %vm5286, %v3633, 0.0
    %v5671 = vsel %vm5287, %v3634, 0.0
    %v5672 = vsel %vm5288, %v3635, 0.0
    %v5673 = vsel %vm5289, %v3636, 0.0
    %v5674 = vsel %vm5290, %v3637, 0.0
    %v5675 = vsel %vm5291, %v3638, 0.0
    %v5676 = vsel %vm5292, %v3639, 0.0
    %v5677 = vsel %vm5293, %v3640, 0.0
    %v5678 = vsel %vm5294, %v3641, 0.0
    %v5679 = vsel %vm5295, %v3642, 0.0
    %v5680 = vsel %vm5296, %v3643, 0.0
    %v5681 = vsel %vm5297, %v3644, 0.0
    %v5682 = vsel %vm5298, %v3645, 0.0
    %v5683 = vsel %vm5299, %v3646, 0.0
    %v5684 = vsel %vm5300, %v3647, 0.0
    %v5685 = vsel %vm5301, %v3648, 0.0
    %v5686 = vsel %vm5302, %v3649, 0.0
    %v5687 = vsel %vm5303, %v3650, 0.0
    %v5688 = vsel %vm5304, %v3651, 0.0
    %v5689 = vsel %vm5305, %v3652, 0.0
    %v5690 = vsel %vm5306, %v3653, 0.0
    %v5691 = vsel %vm5307, %v3654, 0.0
    %v5692 = vsel %vm5308, %v3655, 0.0
    %v5693 = vsel %vm5309, %v3656, 0.0
    %v5694 = vsel %vm5310, %v3657, 0.0
    %v5695 = vsel %vm5311, %v3658, 0.0
    %v5696 = vsel %vm5312, %v3659, 0.0
    %v5697 = vsel %vm5313, %v3660, 0.0
    %v5698 = vsel %vm5314, %v3661, 0.0
    %v5699 = vsel %vm5315, %v3662, 0.0
    %v5700 = vsel %vm5316, %v3663, 0.0
    %v5701 = vsel %vm5317, %v3664, 0.0
    %v5702 = vsel %vm5318, %v3665, 0.0
    %v5703 = vsel %vm5319, %v3666, 0.0
    %v5704 = vsel %vm5320, %v3667, 0.0
    %v5705 = vsel %vm5321, %v3668, 0.0
    %v5706 = vsel %vm5322, %v3669, 0.0
    %v5707 = vsel %vm5323, %v3670, 0.0
    %v5708 = vsel %vm5324, %v3671, 0.0
    %v5709 = vsel %vm5325, %v3672, 0.0
    %v5710 = vsel %vm5326, %v3673, 0.0
    %v5711 = vsel %vm5327, %v3674, 0.0
    %v5712 = vsel %vm5328, %v3675, 0.0
    %v5713 = vsel %vm5329, %v3676, 0.0
    %v5714 = vsel %vm5330, %v3677, 0.0
    %v5715 = vsel %vm5331, %v3678, 0.0
    %v5716 = vsel %vm5332, %v3679, 0.0
    %v5717 = vsel %vm5333, %v3680, 0.0
    %v5718 = vsel %vm5334, %v3681, 0.0
    %v5719 = vsel %vm5335, %v3682, 0.0
    %v5720 = vsel %vm5336, %v3683, 0.0
    %v5721 = vsel %vm5337, %v3684, 0.0
    %v5722 = vsel %vm5338, %v3685, 0.0
    %v5723 = vsel %vm5339, %v3686, 0.0
    %v5724 = vsel %vm5340, %v3687, 0.0
    %v5725 = vsel %vm5341, %v3688, 0.0
    %v5726 = vsel %vm5342, %v3689, 0.0
    %v5727 = vsel %vm5343, %v3690, 0.0
    %v5728 = vsel %vm5344, %v3691, 0.0
    %v5729 = vsel %vm5345, %v3692, 0.0
    %v5730 = vsel %vm5346, %v3693, 0.0
    %v5731 = vsel %vm5347, %v3694, 0.0
    %v5732 = vsel %vm5348, %v3695, 0.0
    %v5733 = vsel %vm5349, %v3696, 0.0
    %v5734 = vsel %vm5350, %v3697, 0.0
    %v5735 = vsel %vm5351, %v3698, 0.0
    %v5736 = vsel %vm5352, %v3699, 0.0
    %v5737 = vsel %vm5353, %v3700, 0.0
    %v5738 = vsel %vm5354, %v3701, 0.0
    %v5739 = vsel %vm5355, %v3702, 0.0
    %v5740 = vsel %vm5356, %v3703, 0.0
    %v5741 = vsel %vm5357, %v3704, 0.0
    %v5742 = vsel %vm5358, %v3705, 0.0
    %v5743 = vsel %vm5359, %v3706, 0.0
    %v5744 = vsel %vm5360, %v3707, 0.0
    %v5745 = vsel %vm5361, %v3708, 0.0
    %v5746 = vsel %vm5362, %v3709, 0.0
    %v5747 = vsel %vm5363, %v3710, 0.0
    %v5748 = vsel %vm5364, %v3711, 0.0
    %v5749 = vsel %vm5365, %v3712, 0.0
    %v5750 = vsel %vm5366, %v3713, 0.0
    %v5751 = vsel %vm5367, %v3714, 0.0
    %v5752 = vsel %vm5368, %v3715, 0.0
    %v5753 = vsel %vm5369, %v3716, 0.0
    %v5754 = vsel %vm5370, %v3717, 0.0
    %v5755 = vsel %vm5371, %v3718, 0.0
    %v5756 = vsel %vm5372, %v3719, 0.0
    %v5757 = vsel %vm5373, %v3720, 0.0
    %v5758 = vsel %vm5374, %v3721, 0.0
    %v5759 = vsel %vm5375, %v3722, 0.0
    %v5760 = vsel %vm5376, %v3723, 0.0
    %v5761 = vsel %vm5377, %v3724, 0.0
    %v5762 = vsel %vm5378, %v3725, 0.0
    %v5763 = vsel %vm5379, %v3726, 0.0
    %v5764 = vsel %vm5380, %v3727, 0.0
    %v5765 = vsel %vm5381, %v3728, 0.0
    %v5766 = vsel %vm5382, %v3729, 0.0
    %v5767 = vsel %vm5383, %v3730, 0.0
    %v5768 = vsel %vm5384, %v3731, 0.0
    %v5769 = vsel %vm5385, %v3732, 0.0
    %v5770 = vsel %vm5386, %v3733, 0.0
    %v5771 = vsel %vm5387, %v3734, 0.0
    %v5772 = vsel %vm5388, %v3735, 0.0
    %v5773 = vsel %vm5389, %v3736, 0.0
    %v5774 = vsel %vm5390, %v3737, 0.0
    %v5775 = vsel %vm5391, %v3738, 0.0
    %v5776 = vsel %vm5392, %v3739, 0.0
    %v5777 = vsel %vm5393, %v3740, 0.0
    %v5778 = vsel %vm5394, %v3741, 0.0
    %v5779 = vsel %vm5395, %v3742, 0.0
    %v5780 = vsel %vm5396, %v3743, 0.0
    %v5781 = vsel %vm5397, %v3744, 0.0
    %v5782 = vsel %vm5398, %v3745, 0.0
    %v5783 = vsel %vm5399, %v3746, 0.0
    %v5784 = vsel %vm5400, %v3747, 0.0
    %v5785 = vsel %vm5401, %v3748, 0.0
    %v5786 = vsel %vm5402, %v3749, 0.0
    %v5787 = vsel %vm5403, %v3750, 0.0
    %v5788 = vsel %vm5404, %v3751, 0.0
    %v5789 = vsel %vm5405, %v3752, 0.0
    %v5790 = vsel %vm5406, %v3753, 0.0
    %v5791 = vsel %vm5407, %v3754, 0.0
    %v5792 = vsel %vm5408, %v3755, 0.0
    %v5793 = vsel %vm5409, %v3756, 0.0
    %v5794 = vsel %vm5410, %v3757, 0.0
    %v5795 = vsel %vm5411, %v3758, 0.0
    %v5796 = vsel %vm5412, %v3759, 0.0
    %v5797 = vsel %vm5413, %v3760, 0.0
    %v5798 = vsel %vm5414, %v3761, 0.0
    %v5799 = vsel %vm5415, %v3762, 0.0
    %v5800 = vsel %vm5416, %v3763, 0.0
    %v5801 = vsel %vm5417, %v3764, 0.0
    %v5802 = vsel %vm5418, %v3765, 0.0
    %v5803 = vsel %vm5419, %v3766, 0.0
    %v5804 = vsel %vm5420, %v3767, 0.0
    %v5805 = vsel %vm5421, %v3768, 0.0
    %v5806 = vsel %vm5422, %v3769, 0.0
    %v5807 = vsel %vm5423, %v3770, 0.0
    %v5808 = vsel %vm5424, %v3771, 0.0
    %v5809 = vsel %vm5425, %v3772, 0.0
    %v5810 = vsel %vm5426, %v3773, 0.0
    %v5811 = vsel %vm5427, %v3774, 0.0
    %v5812 = vsel %vm5428, %v3775, 0.0
    %v5813 = vsel %vm5429, %v3776, 0.0
    %v5814 = vsel %vm5430, %v3777, 0.0
    %v5815 = vsel %vm5431, %v3778, 0.0
    %v5816 = vsel %vm5432, %v3779, 0.0
    %v5817 = vsel %vm5433, %v3780, 0.0
    %v5818 = vsel %vm5434, %v3781, 0.0
    %v5819 = vsel %vm5435, %v3782, 0.0
    %v5820 = vsel %vm5436, %v3783, 0.0
    %v5821 = vsel %vm5437, %v3784, 0.0
    %v5822 = vsel %vm5438, %v3785, 0.0
    %v5823 = vsel %vm5439, %v3786, 0.0
    %v5824 = vsel %vm5440, %v3787, 0.0
    %v5825 = vsel %vm5441, %v3788, 0.0
    %v5826 = vsel %vm5442, %v3789, 0.0
    %v5827 = vsel %vm5443, %v3790, 0.0
    %v5828 = vsel %vm5444, %v3791, 0.0
    %v5829 = vsel %vm5445, %v3792, 0.0
    %v5830 = vsel %vm5446, %v3793, 0.0
    %v5831 = vsel %vm5447, %v3794, 0.0
    %v5832 = vsel %vm5448, %v3795, 0.0
    %v5833 = vsel %vm5449, %v3796, 0.0
    %v5834 = vsel %vm5450, %v3797, 0.0
    %v5835 = vsel %vm5451, %v3798, 0.0
    %v5836 = vsel %vm5452, %v3799, 0.0
    %v5837 = vsel %vm5453, %v3800, 0.0
    %v5838 = vsel %vm5454, %v3801, 0.0
    %v5839 = vsel %vm5455, %v3802, 0.0
    %v5840 = vsel %vm5456, %v3803, 0.0
    %v5841 = vsel %vm5457, %v3804, 0.0
    %v5842 = vsel %vm5458, %v3805, 0.0
    %v5843 = vsel %vm5459, %v3806, 0.0
    %v5844 = vsel %vm5460, %v3807, 0.0
    %v5845 = vsel %vm5461, %v3808, 0.0
    %v5846 = vsel %vm5462, %v3809, 0.0
    %v5847 = vsel %vm5463, %v3810, 0.0
    %v5848 = vsel %vm5464, %v3811, 0.0
    %v5849 = vsel %vm5465, %v3812, 0.0
    %v5850 = vsel %vm5466, %v3813, 0.0
    %v5851 = vsel %vm5467, %v3814, 0.0
    %v5852 = vsel %vm5468, %v3815, 0.0
    %v5853 = vsel %vm5469, %v3816, 0.0
    %v5854 = vsel %vm5470, %v3817, 0.0
    %v5855 = vsel %vm5471, %v3818, 0.0
    %v5856 = vsel %vm5472, %v3819, 0.0
    %v5857 = vsel %vm5473, %v3820, 0.0
    %v5858 = vsel %vm5474, %v3821, 0.0
    %v5859 = vsel %vm5475, %v3822, 0.0
    %v5860 = vsel %vm5476, %v3823, 0.0
    %v5861 = vsel %vm5477, %v3824, 0.0
    %v5862 = vsel %vm5478, %v3825, 0.0
    %v5863 = vsel %vm5479, %v3826, 0.0
    %v5864 = vsel %vm5480, %v3827, 0.0
    %v5865 = vsel %vm5481, %v3828, 0.0
    %v5866 = vsel %vm5482, %v3829, 0.0
    %v5867 = vsel %vm5483, %v3830, 0.0
    %v5868 = vsel %vm5484, %v3831, 0.0
    %v5869 = vsel %vm5485, %v3832, 0.0
    %v5870 = vsel %vm5486, %v3833, 0.0
    %v5871 = vsel %vm5487, %v3834, 0.0
    %v5872 = vsel %vm5488, %v3835, 0.0
    %v5873 = vsel %vm5489, %v3836, 0.0
    %v5874 = vsel %vm5490, %v3837, 0.0
    %v5875 = vsel %vm5491, %v3838, 0.0
    %v5876 = vsel %vm5492, %v3839, 0.0
    %v5877 = vsel %vm5493, %v3840, 0.0
    %v5878 = vsel %vm5494, %v3841, 0.0
    %v5879 = vsel %vm5495, %v3842, 0.0
    %v5880 = vsel %vm5496, %v3843, 0.0
    %v5881 = vsel %vm5497, %v3844, 0.0
    %v5882 = vsel %vm5498, %v3845, 0.0
    %v5883 = vsel %vm5499, %v3846, 0.0
    %v5884 = vsel %vm5500, %v3847, 0.0
    %v5885 = vsel %vm5501, %v3848, 0.0
    %v5886 = vsel %vm5502, %v3849, 0.0
    %v5887 = vsel %vm5503, %v3850, 0.0
    %v5888 = vsel %vm5504, %v3851, 0.0
    %v5889 = vsel %vm5505, %v3852, 0.0
    %v5890 = vsel %vm5506, %v3853, 0.0
    %v5891 = vsel %vm5507, %v3854, 0.0
    %v5892 = vsel %vm5508, %v3855, 0.0
    %v5893 = vsel %vm5509, %v3856, 0.0
    %v5894 = vsel %vm5510, %v3857, 0.0
    %v5895 = vsel %vm5511, %v3858, 0.0
    %v5896 = vsel %vm5512, %v3859, 0.0
    %v5897 = vsel %vm5513, %v3860, 0.0
    %v5898 = vsel %vm5514, %v3861, 0.0
    %v5899 = vsel %vm5515, %v3862, 0.0
    %v5900 = vsel %vm5516, %v3863, 0.0
    %v5901 = vsel %vm5517, %v3864, 0.0
    %v5902 = vsel %vm5518, %v3865, 0.0
    %v5903 = vsel %vm5519, %v3866, 0.0
    %v5904 = vsel %vm5520, %v3867, 0.0
    %v5905 = vsel %vm5521, %v3868, 0.0
    %v5906 = vsel %vm5522, %v3869, 0.0
    %v5907 = vsel %vm5523, %v3870, 0.0
    %v5908 = vsel %vm5524, %v3871, 0.0
    %v5909 = vsel %vm5525, %v3872, 0.0
    %v5910 = vsel %vm5526, %v3873, 0.0
    %v5911 = vsel %vm5527, %v3874, 0.0
    %v5912 = vsel %vm5528, %v3875, 0.0
    %v5913 = vsel %vm5529, %v3876, 0.0
    %v5914 = vsel %vm5530, %v3877, 0.0
    %v5915 = vsel %vm5531, %v3878, 0.0
    %v5916 = vsel %vm5532, %v3879, 0.0
    %v5917 = vsel %vm5533, %v3880, 0.0
    %v5918 = vsel %vm5534, %v3881, 0.0
    %v5919 = vsel %vm5535, %v3882, 0.0
    %v5920 = vsel %vm5536, %v3883, 0.0
    %v5921 = vsel %vm5537, %v3884, 0.0
    %v5922 = vsel %vm5538, %v3885, 0.0
    %v5923 = vsel %vm5539, %v3886, 0.0
    %v5924 = vsel %vm5540, %v3887, 0.0
    %v5925 = vsel %vm5541, %v3888, 0.0
    %v5926 = vsel %vm5542, %v3889, 0.0
    %v5927 = vsel %vm5543, %v3890, 0.0
    %v5928 = vsel %vm5544, %v3891, 0.0
    %v5929 = vsel %vm5545, %v3892, 0.0
    %v5930 = vsel %vm5546, %v3893, 0.0
    %v5931 = vsel %vm5547, %v3894, 0.0
    %v5932 = vsel %vm5548, %v3895, 0.0
    %v5933 = vsel %vm5549, %v3896, 0.0
    %v5934 = vsel %vm5550, %v3897, 0.0
    %v5935 = vsel %vm5551, %v3898, 0.0
    %v5936 = vsel %vm5552, %v3899, 0.0
    %v5937 = vsel %vm5553, %v3900, 0.0
    %v5938 = vsel %vm5554, %v3901, 0.0
    %v5939 = vsel %vm5555, %v3902, 0.0
    %v5940 = vsel %vm5556, %v3903, 0.0
    %v5941 = vsel %vm5557, %v3904, 0.0
    %v5942 = vsel %vm5558, %v3905, 0.0
    %v5943 = vsel %vm5559, %v3906, 0.0
    %v5944 = vsel %vm5560, %v3907, 0.0
    %v5945 = vsel %vm5561, %v3908, 0.0
    %v5946 = vsel %vm5562, %v3909, 0.0
    %v5947 = vsel %vm5563, %v3910, 0.0
    %v5948 = vsel %vm5564, %v3911, 0.0
    %v5949 = vsel %vm5565, %v3912, 0.0
    %v5950 = vsel %vm5566, %v3913, 0.0
    %v5951 = vsel %vm5567, %v3914, 0.0
    %v5952 = vsel %vm5568, %v3915, 0.0
    %v5953 = vsel %vm5569, %v3916, 0.0
    %v5954 = vsel %vm5570, %v3917, 0.0
    %v5955 = vsel %vm5571, %v3918, 0.0
    %v5956 = vsel %vm5572, %v3919, 0.0
    %v5957 = vsel %vm5573, %v3920, 0.0
    %v5958 = vsel %vm5574, %v3921, 0.0
    %v5959 = vsel %vm5575, %v3922, 0.0
    %v5960 = vsel %vm5576, %v3923, 0.0
    %v5961 = vsel %vm5577, %v3924, 0.0
    %v5962 = vsel %vm5578, %v3925, 0.0
    %v5963 = vsel %vm5579, %v3926, 0.0
    %v5964 = vsel %vm5580, %v3927, 0.0
    %v5965 = vsel %vm5581, %v3928, 0.0
    %v5966 = vsel %vm5582, %v3929, 0.0
    %v5967 = vsel %vm5583, %v3930, 0.0
    %v5968 = vsel %vm5584, %v3931, 0.0
    %v5969 = vsel %vm5585, %v3932, 0.0
    %v5970 = vsel %vm5586, %v3933, 0.0
    %v5971 = vsel %vm5587, %v3934, 0.0
    %v5972 = vsel %vm5588, %v3935, 0.0
    %v5973 = vsel %vm5589, %v3936, 0.0
    %v5974 = vsel %vm5590, %v3937, 0.0
    %v5975 = vsel %vm5591, %v3938, 0.0
    %v5976 = vsel %vm5592, %v3939, 0.0
    %v5977 = vsel %vm5593, %v3940, 0.0
    %v5978 = vsel %vm5594, %v3941, 0.0
    %v5979 = vsel %vm5595, %v3942, 0.0
    %v5980 = vsel %vm5596, %v3943, 0.0
    %v5981 = vsel %vm5597, %v3944, 0.0
    %v5982 = vsel %vm5598, %v3945, 0.0
    %v5983 = vsel %vm5599, %v3946, 0.0
    %v5984 = vsel %vm5600, %v3947, 0.0
    %v5985 = vsel %vm5601, %v3948, 0.0
    %v5986 = vsel %vm5602, %v3949, 0.0
    %v5987 = vsel %vm5603, %v3950, 0.0
    %v5988 = vsel %vm5604, %v3951, 0.0
    %v5989 = vsel %vm5605, %v3952, 0.0
    %v5990 = vsel %vm5606, %v3953, 0.0
    %v5991 = vsel %vm5607, %v3954, 0.0
    %v5992 = vsel %vm5608, %v3955, 0.0
    %v5993 = vsel %vm5609, %v3956, 0.0
    %v5994 = vsel %vm5610, %v3957, 0.0
    %v5995 = vsel %vm5611, %v3958, 0.0
    %v5996 = vsel %vm5612, %v3959, 0.0
    %v5997 = vsel %vm5613, %v3960, 0.0
    %v5998 = vsel %vm5614, %v3961, 0.0
    %v5999 = vsel %vm5615, %v3962, 0.0
    %v6000 = vsel %vm5616, %v3963, 0.0
    %v6001 = vsel %vm5617, %v3964, 0.0
    %v6002 = vsel %vm5618, %v3965, 0.0
    %v6003 = vsel %vm5619, %v3966, 0.0
    %v6004 = vsel %vm5620, %v3967, 0.0
    %v6005 = vsel %vm5621, %v3968, 0.0
    %v6006 = vsel %vm5622, %v3969, 0.0
    %v6007 = vsel %vm5623, %v3970, 0.0
    %v6008 = vsel %vm5624, %v3971, 0.0
    %v6009 = vsel %vm5625, %v3972, 0.0
    %v6010 = vsel %vm5626, %v3973, 0.0
    %v6011 = vsel %vm5627, %v3974, 0.0
    %v6012 = vsel %vm5628, %v3975, 0.0
    %v6013 = vsel %vm5629, %v3976, 0.0
    %v6014 = vsel %vm5630, %v3977, 0.0
    %v6015 = vsel %vm5631, %v3978, 0.0
    %v6016 = vsel %vm5632, %v3979, 0.0
    %v6017 = vsel %vm5633, %v3980, 0.0
    %v6018 = vsel %vm5634, %v3981, 0.0
    %v6019 = vsel %vm5635, %v3982, 0.0
    %v6020 = vsel %vm5636, %v3983, 0.0
    %v6021 = vsel %vm5637, %v3984, 0.0
    %v6022 = vsel %vm5638, %v3985, 0.0
    %v6023 = vsel %vm5639, %v3986, 0.0
    %v6024 = vsel %vm5640, %v3987, 0.0
    %v6025 = vsel %vm5641, %v3988, 0.0
    %v6026 = vsel %vm5642, %v3989, 0.0
    %v6027 = vsel %vm5643, %v3990, 0.0
    %v6028 = vsel %vm5644, %v3991, 0.0
    %v6029 = vsel %vm5645, %v3992, 0.0
    %v6030 = vsel %vm5646, %v3993, 0.0
    %v6031 = vsel %vm5647, %v3994, 0.0
    %v6032 = vsel %vm5648, %v3995, 0.0
    %v6033 = vsel %vm5649, %v3996, 0.0
    %v6034 = vsel %vm5650, %v3997, 0.0
    %v6035 = vsel %vm5651, %v3998, 0.0
    %v6036 = vsel %vm5652, %v3999, 0.0
    %v6037 = vsel %vm5653, %v4000, 0.0
    %v6038 = vsel %vm5654, %v4001, 0.0
    %v6039 = vsel %vm5655, %v4002, 0.0
    %v6040 = vsel %vm5656, %v4003, 0.0
    %v6041 = vsel %vm5657, %v4004, 0.0
    %v6042 = vsel %vm5658, %v4005, 0.0
    %v6043 = vsel %vm5659, %v4006, 0.0
    %v6044 = vsel %vm5660, %v4007, 0.0
    %v6045 = vsel %vm5661, %v4008, 0.0
    %v6046 = vsel %vm5662, %v4009, 0.0
    %v6047 = vadd.f32 %v5663, %v5675
    %v6048 = vadd.f32 %v6047, %v5687
    %v6049 = vadd.f32 %v6048, %v5699
    %v6050 = vadd.f32 %v6049, %v5711
    %v6051 = vadd.f32 %v6050, %v5723
    %v6052 = vadd.f32 %v6051, %v5735
    %v6053 = vadd.f32 %v6052, %v5747
    %v6054 = vadd.f32 %v6053, %v5759
    %v6055 = vadd.f32 %v6054, %v5771
    %v6056 = vadd.f32 %v6055, %v5783
    %v6057 = vadd.f32 %v6056, %v5795
    %v6058 = vadd.f32 %v6057, %v5807
    %v6059 = vadd.f32 %v6058, %v5819
    %v6060 = vadd.f32 %v6059, %v5831
    %v6061 = vadd.f32 %v6060, %v5843
    %v6062 = vadd.f32 %v6061, %v5855
    %v6063 = vadd.f32 %v6062, %v5867
    %v6064 = vadd.f32 %v6063, %v5879
    %v6065 = vadd.f32 %v6064, %v5891
    %v6066 = vadd.f32 %v6065, %v5903
    %v6067 = vadd.f32 %v6066, %v5915
    %v6068 = vadd.f32 %v6067, %v5927
    %v6069 = vadd.f32 %v6068, %v5939
    %v6070 = vadd.f32 %v6069, %v5951
    %v6071 = vadd.f32 %v6070, %v5963
    %v6072 = vadd.f32 %v6071, %v5975
    %v6073 = vadd.f32 %v6072, %v5987
    %v6074 = vadd.f32 %v6073, %v5999
    %v6075 = vadd.f32 %v6074, %v6011
    %v6076 = vadd.f32 %v6075, %v6023
    %v6077 = vadd.f32 %v6076, %v6035
    %v6078 = vrot.slane %v6077, 4
    %v6079 = vadd.f32 %v6077, %v6078
    %v6080 = vrot.slane %v6079, 2
    %v6081 = vadd.f32 %v6079, %v6080
    %v6082 = vrot.slane %v6081, 1
    %v6083 = vadd.f32 %v6081, %v6082
    %v6084 = vadd.f32 %v5664, %v5676
    %v6085 = vadd.f32 %v6084, %v5688
    %v6086 = vadd.f32 %v6085, %v5700
    %v6087 = vadd.f32 %v6086, %v5712
    %v6088 = vadd.f32 %v6087, %v5724
    %v6089 = vadd.f32 %v6088, %v5736
    %v6090 = vadd.f32 %v6089, %v5748
    %v6091 = vadd.f32 %v6090, %v5760
    %v6092 = vadd.f32 %v6091, %v5772
    %v6093 = vadd.f32 %v6092, %v5784
    %v6094 = vadd.f32 %v6093, %v5796
    %v6095 = vadd.f32 %v6094, %v5808
    %v6096 = vadd.f32 %v6095, %v5820
    %v6097 = vadd.f32 %v6096, %v5832
    %v6098 = vadd.f32 %v6097, %v5844
    %v6099 = vadd.f32 %v6098, %v5856
    %v6100 = vadd.f32 %v6099, %v5868
    %v6101 = vadd.f32 %v6100, %v5880
    %v6102 = vadd.f32 %v6101, %v5892
    %v6103 = vadd.f32 %v6102, %v5904
    %v6104 = vadd.f32 %v6103, %v5916
    %v6105 = vadd.f32 %v6104, %v5928
    %v6106 = vadd.f32 %v6105, %v5940
    %v6107 = vadd.f32 %v6106, %v5952
    %v6108 = vadd.f32 %v6107, %v5964
    %v6109 = vadd.f32 %v6108, %v5976
    %v6110 = vadd.f32 %v6109, %v5988
    %v6111 = vadd.f32 %v6110, %v6000
    %v6112 = vadd.f32 %v6111, %v6012
    %v6113 = vadd.f32 %v6112, %v6024
    %v6114 = vadd.f32 %v6113, %v6036
    %v6115 = vrot.slane %v6114, 4
    %v6116 = vadd.f32 %v6114, %v6115
    %v6117 = vrot.slane %v6116, 2
    %v6118 = vadd.f32 %v6116, %v6117
    %v6119 = vrot.slane %v6118, 1
    %v6120 = vadd.f32 %v6118, %v6119
    %v6121 = vadd.f32 %v5665, %v5677
    %v6122 = vadd.f32 %v6121, %v5689
    %v6123 = vadd.f32 %v6122, %v5701
    %v6124 = vadd.f32 %v6123, %v5713
    %v6125 = vadd.f32 %v6124, %v5725
    %v6126 = vadd.f32 %v6125, %v5737
    %v6127 = vadd.f32 %v6126, %v5749
    %v6128 = vadd.f32 %v6127, %v5761
    %v6129 = vadd.f32 %v6128, %v5773
    %v6130 = vadd.f32 %v6129, %v5785
    %v6131 = vadd.f32 %v6130, %v5797
    %v6132 = vadd.f32 %v6131, %v5809
    %v6133 = vadd.f32 %v6132, %v5821
    %v6134 = vadd.f32 %v6133, %v5833
    %v6135 = vadd.f32 %v6134, %v5845
    %v6136 = vadd.f32 %v6135, %v5857
    %v6137 = vadd.f32 %v6136, %v5869
    %v6138 = vadd.f32 %v6137, %v5881
    %v6139 = vadd.f32 %v6138, %v5893
    %v6140 = vadd.f32 %v6139, %v5905
    %v6141 = vadd.f32 %v6140, %v5917
    %v6142 = vadd.f32 %v6141, %v5929
    %v6143 = vadd.f32 %v6142, %v5941
    %v6144 = vadd.f32 %v6143, %v5953
    %v6145 = vadd.f32 %v6144, %v5965
    %v6146 = vadd.f32 %v6145, %v5977
    %v6147 = vadd.f32 %v6146, %v5989
    %v6148 = vadd.f32 %v6147, %v6001
    %v6149 = vadd.f32 %v6148, %v6013
    %v6150 = vadd.f32 %v6149, %v6025
    %v6151 = vadd.f32 %v6150, %v6037
    %v6152 = vrot.slane %v6151, 4
    %v6153 = vadd.f32 %v6151, %v6152
    %v6154 = vrot.slane %v6153, 2
    %v6155 = vadd.f32 %v6153, %v6154
    %v6156 = vrot.slane %v6155, 1
    %v6157 = vadd.f32 %v6155, %v6156
    %v6158 = vadd.f32 %v5666, %v5678
    %v6159 = vadd.f32 %v6158, %v5690
    %v6160 = vadd.f32 %v6159, %v5702
    %v6161 = vadd.f32 %v6160, %v5714
    %v6162 = vadd.f32 %v6161, %v5726
    %v6163 = vadd.f32 %v6162, %v5738
    %v6164 = vadd.f32 %v6163, %v5750
    %v6165 = vadd.f32 %v6164, %v5762
    %v6166 = vadd.f32 %v6165, %v5774
    %v6167 = vadd.f32 %v6166, %v5786
    %v6168 = vadd.f32 %v6167, %v5798
    %v6169 = vadd.f32 %v6168, %v5810
    %v6170 = vadd.f32 %v6169, %v5822
    %v6171 = vadd.f32 %v6170, %v5834
    %v6172 = vadd.f32 %v6171, %v5846
    %v6173 = vadd.f32 %v6172, %v5858
    %v6174 = vadd.f32 %v6173, %v5870
    %v6175 = vadd.f32 %v6174, %v5882
    %v6176 = vadd.f32 %v6175, %v5894
    %v6177 = vadd.f32 %v6176, %v5906
    %v6178 = vadd.f32 %v6177, %v5918
    %v6179 = vadd.f32 %v6178, %v5930
    %v6180 = vadd.f32 %v6179, %v5942
    %v6181 = vadd.f32 %v6180, %v5954
    %v6182 = vadd.f32 %v6181, %v5966
    %v6183 = vadd.f32 %v6182, %v5978
    %v6184 = vadd.f32 %v6183, %v5990
    %v6185 = vadd.f32 %v6184, %v6002
    %v6186 = vadd.f32 %v6185, %v6014
    %v6187 = vadd.f32 %v6186, %v6026
    %v6188 = vadd.f32 %v6187, %v6038
    %v6189 = vrot.slane %v6188, 4
    %v6190 = vadd.f32 %v6188, %v6189
    %v6191 = vrot.slane %v6190, 2
    %v6192 = vadd.f32 %v6190, %v6191
    %v6193 = vrot.slane %v6192, 1
    %v6194 = vadd.f32 %v6192, %v6193
    %v6195 = vadd.f32 %v5667, %v5679
    %v6196 = vadd.f32 %v6195, %v5691
    %v6197 = vadd.f32 %v6196, %v5703
    %v6198 = vadd.f32 %v6197, %v5715
    %v6199 = vadd.f32 %v6198, %v5727
    %v6200 = vadd.f32 %v6199, %v5739
    %v6201 = vadd.f32 %v6200, %v5751
    %v6202 = vadd.f32 %v6201, %v5763
    %v6203 = vadd.f32 %v6202, %v5775
    %v6204 = vadd.f32 %v6203, %v5787
    %v6205 = vadd.f32 %v6204, %v5799
    %v6206 = vadd.f32 %v6205, %v5811
    %v6207 = vadd.f32 %v6206, %v5823
    %v6208 = vadd.f32 %v6207, %v5835
    %v6209 = vadd.f32 %v6208, %v5847
    %v6210 = vadd.f32 %v6209, %v5859
    %v6211 = vadd.f32 %v6210, %v5871
    %v6212 = vadd.f32 %v6211, %v5883
    %v6213 = vadd.f32 %v6212, %v5895
    %v6214 = vadd.f32 %v6213, %v5907
    %v6215 = vadd.f32 %v6214, %v5919
    %v6216 = vadd.f32 %v6215, %v5931
    %v6217 = vadd.f32 %v6216, %v5943
    %v6218 = vadd.f32 %v6217, %v5955
    %v6219 = vadd.f32 %v6218, %v5967
    %v6220 = vadd.f32 %v6219, %v5979
    %v6221 = vadd.f32 %v6220, %v5991
    %v6222 = vadd.f32 %v6221, %v6003
    %v6223 = vadd.f32 %v6222, %v6015
    %v6224 = vadd.f32 %v6223, %v6027
    %v6225 = vadd.f32 %v6224, %v6039
    %v6226 = vrot.slane %v6225, 4
    %v6227 = vadd.f32 %v6225, %v6226
    %v6228 = vrot.slane %v6227, 2
    %v6229 = vadd.f32 %v6227, %v6228
    %v6230 = vrot.slane %v6229, 1
    %v6231 = vadd.f32 %v6229, %v6230
    %v6232 = vadd.f32 %v5668, %v5680
    %v6233 = vadd.f32 %v6232, %v5692
    %v6234 = vadd.f32 %v6233, %v5704
    %v6235 = vadd.f32 %v6234, %v5716
    %v6236 = vadd.f32 %v6235, %v5728
    %v6237 = vadd.f32 %v6236, %v5740
    %v6238 = vadd.f32 %v6237, %v5752
    %v6239 = vadd.f32 %v6238, %v5764
    %v6240 = vadd.f32 %v6239, %v5776
    %v6241 = vadd.f32 %v6240, %v5788
    %v6242 = vadd.f32 %v6241, %v5800
    %v6243 = vadd.f32 %v6242, %v5812
    %v6244 = vadd.f32 %v6243, %v5824
    %v6245 = vadd.f32 %v6244, %v5836
    %v6246 = vadd.f32 %v6245, %v5848
    %v6247 = vadd.f32 %v6246, %v5860
    %v6248 = vadd.f32 %v6247, %v5872
    %v6249 = vadd.f32 %v6248, %v5884
    %v6250 = vadd.f32 %v6249, %v5896
    %v6251 = vadd.f32 %v6250, %v5908
    %v6252 = vadd.f32 %v6251, %v5920
    %v6253 = vadd.f32 %v6252, %v5932
    %v6254 = vadd.f32 %v6253, %v5944
    %v6255 = vadd.f32 %v6254, %v5956
    %v6256 = vadd.f32 %v6255, %v5968
    %v6257 = vadd.f32 %v6256, %v5980
    %v6258 = vadd.f32 %v6257, %v5992
    %v6259 = vadd.f32 %v6258, %v6004
    %v6260 = vadd.f32 %v6259, %v6016
    %v6261 = vadd.f32 %v6260, %v6028
    %v6262 = vadd.f32 %v6261, %v6040
    %v6263 = vrot.slane %v6262, 4
    %v6264 = vadd.f32 %v6262, %v6263
    %v6265 = vrot.slane %v6264, 2
    %v6266 = vadd.f32 %v6264, %v6265
    %v6267 = vrot.slane %v6266, 1
    %v6268 = vadd.f32 %v6266, %v6267
    %v6269 = vadd.f32 %v5669, %v5681
    %v6270 = vadd.f32 %v6269, %v5693
    %v6271 = vadd.f32 %v6270, %v5705
    %v6272 = vadd.f32 %v6271, %v5717
    %v6273 = vadd.f32 %v6272, %v5729
    %v6274 = vadd.f32 %v6273, %v5741
    %v6275 = vadd.f32 %v6274, %v5753
    %v6276 = vadd.f32 %v6275, %v5765
    %v6277 = vadd.f32 %v6276, %v5777
    %v6278 = vadd.f32 %v6277, %v5789
    %v6279 = vadd.f32 %v6278, %v5801
    %v6280 = vadd.f32 %v6279, %v5813
    %v6281 = vadd.f32 %v6280, %v5825
    %v6282 = vadd.f32 %v6281, %v5837
    %v6283 = vadd.f32 %v6282, %v5849
    %v6284 = vadd.f32 %v6283, %v5861
    %v6285 = vadd.f32 %v6284, %v5873
    %v6286 = vadd.f32 %v6285, %v5885
    %v6287 = vadd.f32 %v6286, %v5897
    %v6288 = vadd.f32 %v6287, %v5909
    %v6289 = vadd.f32 %v6288, %v5921
    %v6290 = vadd.f32 %v6289, %v5933
    %v6291 = vadd.f32 %v6290, %v5945
    %v6292 = vadd.f32 %v6291, %v5957
    %v6293 = vadd.f32 %v6292, %v5969
    %v6294 = vadd.f32 %v6293, %v5981
    %v6295 = vadd.f32 %v6294, %v5993
    %v6296 = vadd.f32 %v6295, %v6005
    %v6297 = vadd.f32 %v6296, %v6017
    %v6298 = vadd.f32 %v6297, %v6029
    %v6299 = vadd.f32 %v6298, %v6041
    %v6300 = vrot.slane %v6299, 4
    %v6301 = vadd.f32 %v6299, %v6300
    %v6302 = vrot.slane %v6301, 2
    %v6303 = vadd.f32 %v6301, %v6302
    %v6304 = vrot.slane %v6303, 1
    %v6305 = vadd.f32 %v6303, %v6304
    %v6306 = vadd.f32 %v5670, %v5682
    %v6307 = vadd.f32 %v6306, %v5694
    %v6308 = vadd.f32 %v6307, %v5706
    %v6309 = vadd.f32 %v6308, %v5718
    %v6310 = vadd.f32 %v6309, %v5730
    %v6311 = vadd.f32 %v6310, %v5742
    %v6312 = vadd.f32 %v6311, %v5754
    %v6313 = vadd.f32 %v6312, %v5766
    %v6314 = vadd.f32 %v6313, %v5778
    %v6315 = vadd.f32 %v6314, %v5790
    %v6316 = vadd.f32 %v6315, %v5802
    %v6317 = vadd.f32 %v6316, %v5814
    %v6318 = vadd.f32 %v6317, %v5826
    %v6319 = vadd.f32 %v6318, %v5838
    %v6320 = vadd.f32 %v6319, %v5850
    %v6321 = vadd.f32 %v6320, %v5862
    %v6322 = vadd.f32 %v6321, %v5874
    %v6323 = vadd.f32 %v6322, %v5886
    %v6324 = vadd.f32 %v6323, %v5898
    %v6325 = vadd.f32 %v6324, %v5910
    %v6326 = vadd.f32 %v6325, %v5922
    %v6327 = vadd.f32 %v6326, %v5934
    %v6328 = vadd.f32 %v6327, %v5946
    %v6329 = vadd.f32 %v6328, %v5958
    %v6330 = vadd.f32 %v6329, %v5970
    %v6331 = vadd.f32 %v6330, %v5982
    %v6332 = vadd.f32 %v6331, %v5994
    %v6333 = vadd.f32 %v6332, %v6006
    %v6334 = vadd.f32 %v6333, %v6018
    %v6335 = vadd.f32 %v6334, %v6030
    %v6336 = vadd.f32 %v6335, %v6042
    %v6337 = vrot.slane %v6336, 4
    %v6338 = vadd.f32 %v6336, %v6337
    %v6339 = vrot.slane %v6338, 2
    %v6340 = vadd.f32 %v6338, %v6339
    %v6341 = vrot.slane %v6340, 1
    %v6342 = vadd.f32 %v6340, %v6341
    %v6343 = vadd.f32 %v5671, %v5683
    %v6344 = vadd.f32 %v6343, %v5695
    %v6345 = vadd.f32 %v6344, %v5707
    %v6346 = vadd.f32 %v6345, %v5719
    %v6347 = vadd.f32 %v6346, %v5731
    %v6348 = vadd.f32 %v6347, %v5743
    %v6349 = vadd.f32 %v6348, %v5755
    %v6350 = vadd.f32 %v6349, %v5767
    %v6351 = vadd.f32 %v6350, %v5779
    %v6352 = vadd.f32 %v6351, %v5791
    %v6353 = vadd.f32 %v6352, %v5803
    %v6354 = vadd.f32 %v6353, %v5815
    %v6355 = vadd.f32 %v6354, %v5827
    %v6356 = vadd.f32 %v6355, %v5839
    %v6357 = vadd.f32 %v6356, %v5851
    %v6358 = vadd.f32 %v6357, %v5863
    %v6359 = vadd.f32 %v6358, %v5875
    %v6360 = vadd.f32 %v6359, %v5887
    %v6361 = vadd.f32 %v6360, %v5899
    %v6362 = vadd.f32 %v6361, %v5911
    %v6363 = vadd.f32 %v6362, %v5923
    %v6364 = vadd.f32 %v6363, %v5935
    %v6365 = vadd.f32 %v6364, %v5947
    %v6366 = vadd.f32 %v6365, %v5959
    %v6367 = vadd.f32 %v6366, %v5971
    %v6368 = vadd.f32 %v6367, %v5983
    %v6369 = vadd.f32 %v6368, %v5995
    %v6370 = vadd.f32 %v6369, %v6007
    %v6371 = vadd.f32 %v6370, %v6019
    %v6372 = vadd.f32 %v6371, %v6031
    %v6373 = vadd.f32 %v6372, %v6043
    %v6374 = vrot.slane %v6373, 4
    %v6375 = vadd.f32 %v6373, %v6374
    %v6376 = vrot.slane %v6375, 2
    %v6377 = vadd.f32 %v6375, %v6376
    %v6378 = vrot.slane %v6377, 1
    %v6379 = vadd.f32 %v6377, %v6378
    %v6380 = vadd.f32 %v5672, %v5684
    %v6381 = vadd.f32 %v6380, %v5696
    %v6382 = vadd.f32 %v6381, %v5708
    %v6383 = vadd.f32 %v6382, %v5720
    %v6384 = vadd.f32 %v6383, %v5732
    %v6385 = vadd.f32 %v6384, %v5744
    %v6386 = vadd.f32 %v6385, %v5756
    %v6387 = vadd.f32 %v6386, %v5768
    %v6388 = vadd.f32 %v6387, %v5780
    %v6389 = vadd.f32 %v6388, %v5792
    %v6390 = vadd.f32 %v6389, %v5804
    %v6391 = vadd.f32 %v6390, %v5816
    %v6392 = vadd.f32 %v6391, %v5828
    %v6393 = vadd.f32 %v6392, %v5840
    %v6394 = vadd.f32 %v6393, %v5852
    %v6395 = vadd.f32 %v6394, %v5864
    %v6396 = vadd.f32 %v6395, %v5876
    %v6397 = vadd.f32 %v6396, %v5888
    %v6398 = vadd.f32 %v6397, %v5900
    %v6399 = vadd.f32 %v6398, %v5912
    %v6400 = vadd.f32 %v6399, %v5924
    %v6401 = vadd.f32 %v6400, %v5936
    %v6402 = vadd.f32 %v6401, %v5948
    %v6403 = vadd.f32 %v6402, %v5960
    %v6404 = vadd.f32 %v6403, %v5972
    %v6405 = vadd.f32 %v6404, %v5984
    %v6406 = vadd.f32 %v6405, %v5996
    %v6407 = vadd.f32 %v6406, %v6008
    %v6408 = vadd.f32 %v6407, %v6020
    %v6409 = vadd.f32 %v6408, %v6032
    %v6410 = vadd.f32 %v6409, %v6044
    %v6411 = vrot.slane %v6410, 4
    %v6412 = vadd.f32 %v6410, %v6411
    %v6413 = vrot.slane %v6412, 2
    %v6414 = vadd.f32 %v6412, %v6413
    %v6415 = vrot.slane %v6414, 1
    %v6416 = vadd.f32 %v6414, %v6415
    %v6417 = vadd.f32 %v5673, %v5685
    %v6418 = vadd.f32 %v6417, %v5697
    %v6419 = vadd.f32 %v6418, %v5709
    %v6420 = vadd.f32 %v6419, %v5721
    %v6421 = vadd.f32 %v6420, %v5733
    %v6422 = vadd.f32 %v6421, %v5745
    %v6423 = vadd.f32 %v6422, %v5757
    %v6424 = vadd.f32 %v6423, %v5769
    %v6425 = vadd.f32 %v6424, %v5781
    %v6426 = vadd.f32 %v6425, %v5793
    %v6427 = vadd.f32 %v6426, %v5805
    %v6428 = vadd.f32 %v6427, %v5817
    %v6429 = vadd.f32 %v6428, %v5829
    %v6430 = vadd.f32 %v6429, %v5841
    %v6431 = vadd.f32 %v6430, %v5853
    %v6432 = vadd.f32 %v6431, %v5865
    %v6433 = vadd.f32 %v6432, %v5877
    %v6434 = vadd.f32 %v6433, %v5889
    %v6435 = vadd.f32 %v6434, %v5901
    %v6436 = vadd.f32 %v6435, %v5913
    %v6437 = vadd.f32 %v6436, %v5925
    %v6438 = vadd.f32 %v6437, %v5937
    %v6439 = vadd.f32 %v6438, %v5949
    %v6440 = vadd.f32 %v6439, %v5961
    %v6441 = vadd.f32 %v6440, %v5973
    %v6442 = vadd.f32 %v6441, %v5985
    %v6443 = vadd.f32 %v6442, %v5997
    %v6444 = vadd.f32 %v6443, %v6009
    %v6445 = vadd.f32 %v6444, %v6021
    %v6446 = vadd.f32 %v6445, %v6033
    %v6447 = vadd.f32 %v6446, %v6045
    %v6448 = vrot.slane %v6447, 4
    %v6449 = vadd.f32 %v6447, %v6448
    %v6450 = vrot.slane %v6449, 2
    %v6451 = vadd.f32 %v6449, %v6450
    %v6452 = vrot.slane %v6451, 1
    %v6453 = vadd.f32 %v6451, %v6452
    %v6454 = vadd.f32 %v5674, %v5686
    %v6455 = vadd.f32 %v6454, %v5698
    %v6456 = vadd.f32 %v6455, %v5710
    %v6457 = vadd.f32 %v6456, %v5722
    %v6458 = vadd.f32 %v6457, %v5734
    %v6459 = vadd.f32 %v6458, %v5746
    %v6460 = vadd.f32 %v6459, %v5758
    %v6461 = vadd.f32 %v6460, %v5770
    %v6462 = vadd.f32 %v6461, %v5782
    %v6463 = vadd.f32 %v6462, %v5794
    %v6464 = vadd.f32 %v6463, %v5806
    %v6465 = vadd.f32 %v6464, %v5818
    %v6466 = vadd.f32 %v6465, %v5830
    %v6467 = vadd.f32 %v6466, %v5842
    %v6468 = vadd.f32 %v6467, %v5854
    %v6469 = vadd.f32 %v6468, %v5866
    %v6470 = vadd.f32 %v6469, %v5878
    %v6471 = vadd.f32 %v6470, %v5890
    %v6472 = vadd.f32 %v6471, %v5902
    %v6473 = vadd.f32 %v6472, %v5914
    %v6474 = vadd.f32 %v6473, %v5926
    %v6475 = vadd.f32 %v6474, %v5938
    %v6476 = vadd.f32 %v6475, %v5950
    %v6477 = vadd.f32 %v6476, %v5962
    %v6478 = vadd.f32 %v6477, %v5974
    %v6479 = vadd.f32 %v6478, %v5986
    %v6480 = vadd.f32 %v6479, %v5998
    %v6481 = vadd.f32 %v6480, %v6010
    %v6482 = vadd.f32 %v6481, %v6022
    %v6483 = vadd.f32 %v6482, %v6034
    %v6484 = vadd.f32 %v6483, %v6046
    %v6485 = vrot.slane %v6484, 4
    %v6486 = vadd.f32 %v6484, %v6485
    %v6487 = vrot.slane %v6486, 2
    %v6488 = vadd.f32 %v6486, %v6487
    %v6489 = vrot.slane %v6488, 1
    %v6490 = vadd.f32 %v6488, %v6489
    %v6491 = vlog2.pop %v4814
    %v6492 = vmul.f32 %v6491, 0.6931472
    %v6493 = vlog2.pop %v4851
    %v6494 = vmul.f32 %v6493, 0.6931472
    %v6495 = vlog2.pop %v4888
    %v6496 = vmul.f32 %v6495, 0.6931472
    %v6497 = vlog2.pop %v4925
    %v6498 = vmul.f32 %v6497, 0.6931472
    %v6499 = vlog2.pop %v4962
    %v6500 = vmul.f32 %v6499, 0.6931472
    %v6501 = vlog2.pop %v4999
    %v6502 = vmul.f32 %v6501, 0.6931472
    %v6503 = vlog2.pop %v5036
    %v6504 = vmul.f32 %v6503, 0.6931472
    %v6505 = vlog2.pop %v5073
    %v6506 = vmul.f32 %v6505, 0.6931472
    %v6507 = vlog2.pop %v5110
    %v6508 = vmul.f32 %v6507, 0.6931472
    %v6509 = vlog2.pop %v5147
    %v6510 = vmul.f32 %v6509, 0.6931472
    %v6511 = vlog2.pop %v5184
    %v6512 = vmul.f32 %v6511, 0.6931472
    %v6513 = vlog2.pop %v5221
    %v6514 = vmul.f32 %v6513, 0.6931472
    %v6515 = vsub.f32 %v6083, %v6492
    %v6516 = vsub.f32 %v6120, %v6494
    %v6517 = vsub.f32 %v6157, %v6496
    %v6518 = vsub.f32 %v6194, %v6498
    %v6519 = vsub.f32 %v6231, %v6500
    %v6520 = vsub.f32 %v6268, %v6502
    %v6521 = vsub.f32 %v6305, %v6504
    %v6522 = vsub.f32 %v6342, %v6506
    %v6523 = vsub.f32 %v6379, %v6508
    %v6524 = vsub.f32 %v6416, %v6510
    %v6525 = vsub.f32 %v6453, %v6512
    %v6526 = vsub.f32 %v6490, %v6514
    %v6527 = vsub.f32 1.0, %v18
    %v6528 = vsub.f32 1.0, %v19
    %v6529 = vsub.f32 1.0, %v20
    %v6530 = vsub.f32 1.0, %v21
    %v6531 = vsub.f32 1.0, %v22
    %v6532 = vsub.f32 1.0, %v23
    %v6533 = vsub.f32 1.0, %v24
    %v6534 = vsub.f32 1.0, %v25
    %v6535 = vsub.f32 1.0, %v26
    %v6536 = vsub.f32 1.0, %v27
    %v6537 = vsub.f32 1.0, %v28
    %v6538 = vsub.f32 1.0, %v29
    %v6539 = vmul.f32 %v6515, %v6527
    %v6540 = vmul.f32 %v6516, %v6528
    %v6541 = vmul.f32 %v6517, %v6529
    %v6542 = vmul.f32 %v6518, %v6530
    %v6543 = vmul.f32 %v6519, %v6531
    %v6544 = vmul.f32 %v6520, %v6532
    %v6545 = vmul.f32 %v6521, %v6533
    %v6546 = vmul.f32 %v6522, %v6534
    %v6547 = vmul.f32 %v6523, %v6535
    %v6548 = vmul.f32 %v6524, %v6536
    %v6549 = vmul.f32 %v6525, %v6537
    %v6550 = vmul.f32 %v6526, %v6538
    %6563 = vst [vmem:[#allocation1] sm:$0xff] %v6539
    %6564 = vst [vmem:[#allocation1 + $0x9] sm:$0xff] %v6540
    %6565 = vst [vmem:[#allocation1 + $0x12] sm:$0xff] %v6541
    %6566 = vst [vmem:[#allocation1 + $0x1b] sm:$0xff] %v6542
    %6567 = vst [vmem:[#allocation1 + $0x24] sm:$0xff] %v6543
    %6568 = vst [vmem:[#allocation1 + $0x2d] sm:$0xff] %v6544
    %6569 = vst [vmem:[#allocation1 + $0x36] sm:$0xff] %v6545
    %6570 = vst [vmem:[#allocation1 + $0x3f] sm:$0xff] %v6546
    %s6571 = scalar_lea.vmem [#allocation1], 1
    %v6572 = vld [vmem:[%s6571] ss:$9 sm:$0xff]
    %6573 = vst [vmem:[#allocation1] sm:$0xff] %v6547
    %6574 = vst [vmem:[#allocation1 + $0x9] sm:$0xff] %v6548
    %6575 = vst [vmem:[#allocation1 + $0x12] sm:$0xff] %v6549
    %6576 = vst [vmem:[#allocation1 + $0x1b] sm:$0xff] %v6550
    %v6577 = vld [vmem:[%s6571] ss:$9 sm:$0xff]
    %6580 = vst [vmem:[#allocation2] sm:$0xff] %v6572
    %v6581 = vlaneseq
    %vm6582 = vcmp.ge.s32.totalorder %v6581, 0
    %vm6583 = vcmp.lt.s32.totalorder %v6581, 512
    %vm6584 = vmand %vm6582, %vm6583
    %6585 = vst.msk [vmem:[#allocation2 + $0x8] sm:$0xf] %vm6584, %v6577
    // Predicated region
    $region18: #{tpu_custom_call.1} parent=1 // pred_check
      _
    $region19: #{tpu_custom_call.1} parent=1 // pred_check_branch
      %6587 = sbr.rel (0) target = $region21
    $region20: #{tpu_custom_call.1} parent=1 // pred_region
      %6589 = vsyncadd [#allocation3], 0
      %s6591 = sshll.u32 [#allocation2], 4
      %s6592 = int_to_ptr.vmem [resolvable:$true] %s6591
      %s6593 = sshll.u32 %s4, 4
      %s6594 = int_to_ptr.hbm [resolvable:$true] %s6593
      %6596 = dma.vmem_to_hbm [thread:$0]  %s6592, 192, %s6594, [#allocation3]
    $region21: #{tpu_custom_call.1} parent=1 // pred_fallthru
      _
    // Predicated region
    $region22: #{tpu_custom_call.1} parent=1 // pred_check
      _
    $region23: #{tpu_custom_call.1} parent=1 // pred_check_branch
      %6598 = sbr.rel (0) target = $region25
    $region24: #{tpu_custom_call.1} parent=1 // pred_region
      %6600 = dma.done [#allocation3], 192
    $region25: #{tpu_custom_call.1} parent=1 // pred_fallthru
      _
    %6601 = vsyncpa [#allocation3], 1

</llo_original>
